<compile_context>
chip_gen: v6e
topology: v6e:2x2x1
jax: 0.10.0
libtpu: 0.0.40
codegen_flags: <defaults>
</compile_context>

<pallas_src>
import functools

import jax
import jax.numpy as jnp
from jax.experimental import pallas as pl
from jax.experimental.pallas import tpu as pltpu


# ----------------------------------------------------------------------------
# Pallas kernels
# ----------------------------------------------------------------------------
def _matmul_bias_kernel(x_ref, w_ref, b_ref, o_ref, *, relu, dot_dtype):
    x = x_ref[...]
    w = w_ref[...]
    if dot_dtype is not None:                     # bf16 MXU operands, f32 accum
        x = x.astype(dot_dtype)
        w = w.astype(dot_dtype)
    acc = jnp.dot(x, w, preferred_element_type=jnp.float32)
    acc = acc + b_ref[...]                        # bias + ReLU stay in f32
    if relu:
        acc = jnp.maximum(acc, 0.0)
    o_ref[...] = acc


def _mlp_head_kernel(img_ref, v_ref,
                     wimg_ref, bimg_ref,
                     wv1_ref, bv1_ref,
                     wv2_ref, bv2_ref,
                     wout_ref, bout_ref,
                     o_ref, *, dot_dtype):
    def dot(a, b):
        if dot_dtype is not None:
            a = a.astype(dot_dtype)
            b = b.astype(dot_dtype)
        return jnp.dot(a, b, preferred_element_type=jnp.float32)

    img = jnp.maximum(dot(img_ref[...], wimg_ref[...]) + bimg_ref[...], 0.0)
    v = jnp.maximum(dot(v_ref[...], wv1_ref[...]) + bv1_ref[...], 0.0)
    v = jnp.maximum(dot(v, wv2_ref[...]) + bv2_ref[...], 0.0)
    o_ref[...] = dot(img + v, wout_ref[...]) + bout_ref[...]


# ----------------------------------------------------------------------------
# Pallas wrappers
# ----------------------------------------------------------------------------
def _pick_row_tile(m, target=512):
    """Row-tile size: full array if small, else balanced tiles rounded to 8."""
    if m <= target:
        return m
    n_tiles = pl.cdiv(m, target)
    tm = -(-m // n_tiles)          # ceil(m / n_tiles)
    return -(-tm // 8) * 8         # round up to sublane multiple


def pallas_linear(x, w, b, *, relu=False, dot_dtype=None, row_tile=512):
    """y = relu?(x @ w + b).  x:(M,K) f32, w:(K,N) f32, b:(1,N) f32 -> (M,N)."""
    M, K = x.shape
    K2, N = w.shape
    assert K == K2 and b.shape == (1, N)
    tm = _pick_row_tile(M, row_tile)
    grid = (pl.cdiv(M, tm),)
    cost = pl.CostEstimate(
        flops=2 * M * K * N, transcendentals=0,
        bytes_accessed=4 * (M * K + K * N + M * N + N))
    return pl.pallas_call(
        functools.partial(_matmul_bias_kernel, relu=relu, dot_dtype=dot_dtype),
        out_shape=jax.ShapeDtypeStruct((M, N), jnp.float32),
        grid=grid,
        in_specs=[
            pl.BlockSpec((tm, K), lambda i: (i, 0)),
            pl.BlockSpec((K, N), lambda i: (0, 0)),
            pl.BlockSpec((1, N), lambda i: (0, 0)),
        ],
        out_specs=pl.BlockSpec((tm, N), lambda i: (i, 0)),
        compiler_params=pltpu.CompilerParams(
            dimension_semantics=("parallel",)),
        cost_estimate=cost,
    )(x, w, b)


def pallas_mlp_head(img, v, p, *, dot_dtype=None):
    """Fused fc_img/fc_v1/fc_v2/(img+v)/fc_out in a single pallas_call."""
    B, Kimg = img.shape
    _, Kv = v.shape
    H1 = p["fcv1_w"].shape[1]
    H2 = p["fcv2_w"].shape[1]
    N = p["fcout_w"].shape[1]

    def full(shape):
        return pl.BlockSpec(shape, lambda i: (0, 0))

    flops = 2 * B * (Kimg * H2 + Kv * H1 + H1 * H2 + H2 * N)
    bytes_accessed = 4 * (B * (Kimg + Kv + N)
                          + Kimg * H2 + Kv * H1 + H1 * H2 + H2 * N
                          + 2 * H2 + H1 + N)
    cost = pl.CostEstimate(flops=flops, transcendentals=0,
                           bytes_accessed=bytes_accessed)
    return pl.pallas_call(
        functools.partial(_mlp_head_kernel, dot_dtype=dot_dtype),
        out_shape=jax.ShapeDtypeStruct((B, N), jnp.float32),
        grid=(1,),
        in_specs=[
            full(img.shape), full(v.shape),
            full(p["fcimg_w"].shape), full(p["fcimg_b"].shape),
            full(p["fcv1_w"].shape), full(p["fcv1_b"].shape),
            full(p["fcv2_w"].shape), full(p["fcv2_b"].shape),
            full(p["fcout_w"].shape), full(p["fcout_b"].shape),
        ],
        out_specs=full((B, N)),
        compiler_params=pltpu.CompilerParams(
            dimension_semantics=("arbitrary",)),
        cost_estimate=cost,
    )(img, v,
      p["fcimg_w"], p["fcimg_b"],
      p["fcv1_w"], p["fcv1_b"],
      p["fcv2_w"], p["fcv2_b"],
      p["fcout_w"], p["fcout_b"])


# ----------------------------------------------------------------------------
# JAX glue: NHWC im2col feeding the Pallas GEMM (no layout transposes)
# ----------------------------------------------------------------------------
def im2col_nhwc(x, kh, kw, stride, pad):
    """x: (N, H, W, C) -> patches (N*Ho*Wo, KH*KW*C); feature order (i, j, c)."""
    N, H, W, C = x.shape
    xp = jnp.pad(x, ((0, 0), (pad, pad), (pad, pad), (0, 0)))
    Ho = (H + 2 * pad - kh) // stride + 1
    Wo = (W + 2 * pad - kw) // stride + 1
    cols = []
    for i in range(kh):
        for j in range(kw):
            cols.append(xp[:, i:i + stride * Ho:stride,
                           j:j + stride * Wo:stride, :])
    col = jnp.stack(cols, axis=3)                     # (N, Ho, Wo, KH*KW, C)
    col = col.reshape(N * Ho * Wo, kh * kw * C)
    return col, Ho, Wo


def conv2d_relu_nhwc(x, wm, b2d, kh, kw, stride, pad, *, dot_dtype=None):
    """x: (N,H,W,C) NHWC, wm: (KH*KW*Cin, Cout), b2d: (1, Cout). Returns NHWC."""
    N = x.shape[0]
    cout = wm.shape[1]
    col, Ho, Wo = im2col_nhwc(x, kh, kw, stride, pad)
    out = pallas_linear(col, wm, b2d, relu=True, dot_dtype=dot_dtype)
    return out.reshape(N, Ho, Wo, cout)               # already NHWC; no transpose


# ----------------------------------------------------------------------------
# Parameters (torch layout) + one-time layout prep
# ----------------------------------------------------------------------------
def init_params(key, vec_size, n_actions):
    ks = jax.random.split(key, 16)

    def u(k, shape, fan_in):
        bound = 1.0 / float(fan_in) ** 0.5
        return jax.random.uniform(k, shape, jnp.float32, -bound, bound)

    p = {}
    p["c1_w"] = u(ks[0], (32, 1, 8, 8), 1 * 8 * 8)
    p["c1_b"] = u(ks[1], (32,), 1 * 8 * 8)
    p["c2_w"] = u(ks[2], (64, 32, 3, 3), 32 * 3 * 3)
    p["c2_b"] = u(ks[3], (64,), 32 * 3 * 3)
    p["c3_w"] = u(ks[4], (64, 64, 5, 5), 64 * 5 * 5)
    p["c3_b"] = u(ks[5], (64,), 64 * 5 * 5)
    p["fcimg_w"] = u(ks[6], (512, 64 * 4 * 3), 64 * 4 * 3)
    p["fcimg_b"] = u(ks[7], (512,), 64 * 4 * 3)
    p["fcv1_w"] = u(ks[8], (256, vec_size), vec_size)
    p["fcv1_b"] = u(ks[9], (256,), vec_size)
    p["fcv2_w"] = u(ks[10], (512, 256), 256)
    p["fcv2_b"] = u(ks[11], (512,), 256)
    p["fcout_w"] = u(ks[12], (n_actions, 512), 512)
    p["fcout_b"] = u(ks[13], (n_actions,), 512)
    return p


def prep_params(p):
    """One-time layout transforms (done outside the per-step forward):
    conv filters -> (KH*KW*Cin, Cout) matching the NHWC im2col feature order,
    fc weights -> (K, N), biases -> (1, N).  fc_img's input rows are permuted
    from torch's NCHW flatten (c,h,w) to the NHWC flatten (h,w,c) of the conv
    tower output (C,H,W) = (64, 3, 4)."""
    def conv_mat(w):
        cout, cin, kh, kw = w.shape
        return jnp.transpose(w, (2, 3, 1, 0)).reshape(kh * kw * cin, cout)

    q = {}
    q["c1_w"] = conv_mat(p["c1_w"]); q["c1_b"] = p["c1_b"].reshape(1, -1)
    q["c2_w"] = conv_mat(p["c2_w"]); q["c2_b"] = p["c2_b"].reshape(1, -1)
    q["c3_w"] = conv_mat(p["c3_w"]); q["c3_b"] = p["c3_b"].reshape(1, -1)

    wi = p["fcimg_w"].reshape(512, 64, 3, 4)          # (out, c, h, w)
    q["fcimg_w"] = jnp.transpose(wi, (2, 3, 1, 0)).reshape(3 * 4 * 64, 512)
    q["fcimg_b"] = p["fcimg_b"].reshape(1, -1)
    q["fcv1_w"] = p["fcv1_w"].T; q["fcv1_b"] = p["fcv1_b"].reshape(1, -1)
    q["fcv2_w"] = p["fcv2_w"].T; q["fcv2_b"] = p["fcv2_b"].reshape(1, -1)
    q["fcout_w"] = p["fcout_w"].T; q["fcout_b"] = p["fcout_b"].reshape(1, -1)
    return q


# ----------------------------------------------------------------------------
# Forward (4 pallas_calls total: 3 conv GEMMs + 1 fused MLP head)
# ----------------------------------------------------------------------------
@functools.partial(jax.jit, static_argnames=("dot_dtype",))
def dqn_forward(params, x_img, x_v, dot_dtype=None):
    x = x_img.reshape(-1, 60, 80, 1)                                  # NHWC
    h = conv2d_relu_nhwc(x, params["c1_w"], params["c1_b"], 8, 8, 4, 2,
                         dot_dtype=dot_dtype)                         # (N,15,20,32)
    h = conv2d_relu_nhwc(h, params["c2_w"], params["c2_b"], 3, 3, 1, 1,
                         dot_dtype=dot_dtype)                         # (N,15,20,64)
    h = conv2d_relu_nhwc(h, params["c3_w"], params["c3_b"], 5, 5, 5, 0,
                         dot_dtype=dot_dtype)                         # (N,3,4,64)
    img = h.reshape(h.shape[0], -1)      # NHWC flatten; fcimg_w rows match this
    return pallas_mlp_head(img, x_v, params, dot_dtype=dot_dtype)


# Pure-JAX reference (mirrors the PyTorch forward, torch-layout params).
def ref_forward(params, x_img, x_v):
    x = x_img.reshape(-1, 1, 60, 80)

    def conv(x, w, b, stride, pad):
        y = jax.lax.conv_general_dilated(
            x, w, (stride, stride), [(pad, pad), (pad, pad)],
            dimension_numbers=("NCHW", "OIHW", "NCHW"))
        return jax.nn.relu(y + b[None, :, None, None])

    h = conv(x, params["c1_w"], params["c1_b"], 4, 2)
    h = conv(h, params["c2_w"], params["c2_b"], 1, 1)
    h = conv(h, params["c3_w"], params["c3_b"], 5, 0)
    img = h.reshape(h.shape[0], -1)
    img = jax.nn.relu(img @ params["fcimg_w"].T + params["fcimg_b"])
    v = jax.nn.relu(x_v @ params["fcv1_w"].T + params["fcv1_b"])
    v = jax.nn.relu(v @ params["fcv2_w"].T + params["fcv2_b"])
    return (img + v) @ params["fcout_w"].T + params["fcout_b"]


if __name__ == "__main__":
    batch, vec_size, n_actions = 2, 32, 6
    key = jax.random.PRNGKey(0)
    k_p, k_img, k_v = jax.random.split(key, 3)

    torch_params = init_params(k_p, vec_size, n_actions)
    params = prep_params(torch_params)        # one-time weight layout transforms
    x_img = jax.random.uniform(k_img, (batch, 60 * 80), jnp.float32)
    x_v = jax.random.normal(k_v, (batch, vec_size), jnp.float32)

    # f32 path: exact match to the PyTorch-semantics reference.
    out = jax.block_until_ready(dqn_forward(params, x_img, x_v))
    assert out.shape == (batch, n_actions), out.shape
    ref = jax.block_until_ready(ref_forward(torch_params, x_img, x_v))
    assert jnp.allclose(out, ref, rtol=1e-4, atol=1e-4), \
        float(jnp.abs(out - ref).max())

    # bf16 MXU-operand path (v5e/v6e/v7x low-precision lever), f32 accumulation.
    out_bf16 = jax.block_until_ready(
        dqn_forward(params, x_img, x_v, dot_dtype=jnp.bfloat16))
    assert jnp.allclose(out_bf16, ref, rtol=5e-2, atol=5e-2), \
        float(jnp.abs(out_bf16 - ref).max())

    print("KERNEL_OK")
</pallas_src>

<mosaic_0001>
module attributes {stable_mosaic.version = 11 : i64} {
  func.func @_matmul_bias_kernel(%arg0: i32, %arg1: memref<304x64xf32, #tpu.memory_space<vmem>>, %arg2: memref<64x32xf32, #tpu.memory_space<vmem>>, %arg3: memref<1x32xf32, #tpu.memory_space<vmem>>, %arg4: memref<304x32xf32, #tpu.memory_space<vmem>>) attributes {dimension_semantics = [#tpu.dimension_semantics<parallel>], iteration_bounds = array<i64: 2>, scalar_prefetch = 0 : i64, scratch_operands = 0 : i64, tpu.core_type = #tpu.core_type<tc>, window_params = [{transform_indices = @transform_0, window_bounds = array<i64: 304, 64>}, {pipeline_mode = #tpu.pipeline_mode<synchronous>, transform_indices = @transform_1, window_bounds = array<i64: 64, 32>}, {pipeline_mode = #tpu.pipeline_mode<synchronous>, transform_indices = @transform_2, window_bounds = array<i64: 1, 32>}, {transform_indices = @transform_3, window_bounds = array<i64: 304, 32>}]} {
    %c0 = arith.constant 0 : index
    %c0_0 = arith.constant 0 : index
    %0 = vector.load %arg1[%c0, %c0_0] : memref<304x64xf32, #tpu.memory_space<vmem>>, vector<304x64xf32>
    %c0_1 = arith.constant 0 : index
    %c0_2 = arith.constant 0 : index
    %1 = vector.load %arg2[%c0_1, %c0_2] : memref<64x32xf32, #tpu.memory_space<vmem>>, vector<64x32xf32>
    %cst = arith.constant dense<0.000000e+00> : vector<304x32xf32>
    %2 = tpu.matmul %0, %1, %cst {dimension_numbers = #tpu.dot_dimension_numbers<[1], [0], [0], [1], [0, 0, 1, 1], [], []>} : vector<304x64xf32>, vector<64x32xf32>, vector<304x32xf32> -> vector<304x32xf32>
    %c0_3 = arith.constant 0 : index
    %c0_4 = arith.constant 0 : index
    %3 = vector.load %arg3[%c0_3, %c0_4] : memref<1x32xf32, #tpu.memory_space<vmem>>, vector<1x32xf32>
    %4 = vector.broadcast %3 : vector<1x32xf32> to vector<304x32xf32>
    %5 = arith.addf %2, %4 : vector<304x32xf32>
    %cst_5 = arith.constant 0.000000e+00 : f32
    %6 = vector.broadcast %cst_5 : f32 to vector<304x32xf32>
    %7 = arith.maximumf %5, %6 : vector<304x32xf32>
    %c0_6 = arith.constant 0 : index
    %c0_7 = arith.constant 0 : index
    %8 = vector.load %arg4[%c0_6, %c0_7] : memref<304x32xf32, #tpu.memory_space<vmem>>, vector<304x32xf32>
    tpu.vector_store %arg4[%c0_6, %c0_7], %7 {strides = array<i32>} : memref<304x32xf32, #tpu.memory_space<vmem>>, vector<304x32xf32>,
    return
  }
  func.func @transform_0(%arg0: i32) -> (i32, i32) {
    %c0_i32 = arith.constant 0 : i32
    %c0_i32_0 = arith.constant 0 : i32
    return %arg0, %c0_i32 : i32, i32
  }
  func.func @transform_1(%arg0: i32) -> (i32, i32) {
    %c0_i32 = arith.constant 0 : i32
    %c0_i32_0 = arith.constant 0 : i32
    %c0_i32_1 = arith.constant 0 : i32
    return %c0_i32, %c0_i32_0 : i32, i32
  }
  func.func @transform_2(%arg0: i32) -> (i32, i32) {
    %c0_i32 = arith.constant 0 : i32
    %c0_i32_0 = arith.constant 0 : i32
    %c0_i32_1 = arith.constant 0 : i32
    return %c0_i32, %c0_i32_0 : i32, i32
  }
  func.func @transform_3(%arg0: i32) -> (i32, i32) {
    %c0_i32 = arith.constant 0 : i32
    %c0_i32_0 = arith.constant 0 : i32
    return %arg0, %c0_i32 : i32, i32
  }
}

module attributes {stable_mosaic.version = 11 : i64} {
  func.func @_matmul_bias_kernel(%arg0: i32, %arg1: memref<304x288xf32, #tpu.memory_space<vmem>>, %arg2: memref<288x64xf32, #tpu.memory_space<vmem>>, %arg3: memref<1x64xf32, #tpu.memory_space<vmem>>, %arg4: memref<304x64xf32, #tpu.memory_space<vmem>>) attributes {dimension_semantics = [#tpu.dimension_semantics<parallel>], iteration_bounds = array<i64: 2>, scalar_prefetch = 0 : i64, scratch_operands = 0 : i64, tpu.core_type = #tpu.core_type<tc>, window_params = [{transform_indices = @transform_0, window_bounds = array<i64: 304, 288>}, {pipeline_mode = #tpu.pipeline_mode<synchronous>, transform_indices = @transform_1, window_bounds = array<i64: 288, 64>}, {pipeline_mode = #tpu.pipeline_mode<synchronous>, transform_indices = @transform_2, window_bounds = array<i64: 1, 64>}, {transform_indices = @transform_3, window_bounds = array<i64: 304, 64>}]} {
    %c0 = arith.constant 0 : index
    %c0_0 = arith.constant 0 : index
    %0 = vector.load %arg1[%c0, %c0_0] : memref<304x288xf32, #tpu.memory_space<vmem>>, vector<304x288xf32>
    %c0_1 = arith.constant 0 : index
    %c0_2 = arith.constant 0 : index
    %1 = vector.load %arg2[%c0_1, %c0_2] : memref<288x64xf32, #tpu.memory_space<vmem>>, vector<288x64xf32>
    %cst = arith.constant dense<0.000000e+00> : vector<304x64xf32>
    %2 = tpu.matmul %0, %1, %cst {dimension_numbers = #tpu.dot_dimension_numbers<[1], [0], [0], [1], [0, 0, 1, 1], [], []>} : vector<304x288xf32>, vector<288x64xf32>, vector<304x64xf32> -> vector<304x64xf32>
    %c0_3 = arith.constant 0 : index
    %c0_4 = arith.constant 0 : index
    %3 = vector.load %arg3[%c0_3, %c0_4] : memref<1x64xf32, #tpu.memory_space<vmem>>, vector<1x64xf32>
    %4 = vector.broadcast %3 : vector<1x64xf32> to vector<304x64xf32>
    %5 = arith.addf %2, %4 : vector<304x64xf32>
    %cst_5 = arith.constant 0.000000e+00 : f32
    %6 = vector.broadcast %cst_5 : f32 to vector<304x64xf32>
    %7 = arith.maximumf %5, %6 : vector<304x64xf32>
    %c0_6 = arith.constant 0 : index
    %c0_7 = arith.constant 0 : index
    %8 = vector.load %arg4[%c0_6, %c0_7] : memref<304x64xf32, #tpu.memory_space<vmem>>, vector<304x64xf32>
    tpu.vector_store %arg4[%c0_6, %c0_7], %7 {strides = array<i32>} : memref<304x64xf32, #tpu.memory_space<vmem>>, vector<304x64xf32>,
    return
  }
  func.func @transform_0(%arg0: i32) -> (i32, i32) {
    %c0_i32 = arith.constant 0 : i32
    %c0_i32_0 = arith.constant 0 : i32
    return %arg0, %c0_i32 : i32, i32
  }
  func.func @transform_1(%arg0: i32) -> (i32, i32) {
    %c0_i32 = arith.constant 0 : i32
    %c0_i32_0 = arith.constant 0 : i32
    %c0_i32_1 = arith.constant 0 : i32
    return %c0_i32, %c0_i32_0 : i32, i32
  }
  func.func @transform_2(%arg0: i32) -> (i32, i32) {
    %c0_i32 = arith.constant 0 : i32
    %c0_i32_0 = arith.constant 0 : i32
    %c0_i32_1 = arith.constant 0 : i32
    return %c0_i32, %c0_i32_0 : i32, i32
  }
  func.func @transform_3(%arg0: i32) -> (i32, i32) {
    %c0_i32 = arith.constant 0 : i32
    %c0_i32_0 = arith.constant 0 : i32
    return %arg0, %c0_i32 : i32, i32
  }
}

module attributes {stable_mosaic.version = 11 : i64} {
  func.func @_matmul_bias_kernel(%arg0: i32, %arg1: memref<24x1600xf32, #tpu.memory_space<vmem>>, %arg2: memref<1600x64xf32, #tpu.memory_space<vmem>>, %arg3: memref<1x64xf32, #tpu.memory_space<vmem>>, %arg4: memref<24x64xf32, #tpu.memory_space<vmem>>) attributes {dimension_semantics = [#tpu.dimension_semantics<parallel>], iteration_bounds = array<i64: 1>, scalar_prefetch = 0 : i64, scratch_operands = 0 : i64, tpu.core_type = #tpu.core_type<tc>, window_params = [{transform_indices = @transform_0, window_bounds = array<i64: 24, 1600>}, {pipeline_mode = #tpu.pipeline_mode<synchronous>, transform_indices = @transform_1, window_bounds = array<i64: 1600, 64>}, {pipeline_mode = #tpu.pipeline_mode<synchronous>, transform_indices = @transform_2, window_bounds = array<i64: 1, 64>}, {transform_indices = @transform_3, window_bounds = array<i64: 24, 64>}]} {
    %c0 = arith.constant 0 : index
    %c0_0 = arith.constant 0 : index
    %0 = vector.load %arg1[%c0, %c0_0] : memref<24x1600xf32, #tpu.memory_space<vmem>>, vector<24x1600xf32>
    %c0_1 = arith.constant 0 : index
    %c0_2 = arith.constant 0 : index
    %1 = vector.load %arg2[%c0_1, %c0_2] : memref<1600x64xf32, #tpu.memory_space<vmem>>, vector<1600x64xf32>
    %cst = arith.constant dense<0.000000e+00> : vector<24x64xf32>
    %2 = tpu.matmul %0, %1, %cst {dimension_numbers = #tpu.dot_dimension_numbers<[1], [0], [0], [1], [0, 0, 1, 1], [], []>} : vector<24x1600xf32>, vector<1600x64xf32>, vector<24x64xf32> -> vector<24x64xf32>
    %c0_3 = arith.constant 0 : index
    %c0_4 = arith.constant 0 : index
    %3 = vector.load %arg3[%c0_3, %c0_4] : memref<1x64xf32, #tpu.memory_space<vmem>>, vector<1x64xf32>
    %4 = vector.broadcast %3 : vector<1x64xf32> to vector<24x64xf32>
    %5 = arith.addf %2, %4 : vector<24x64xf32>
    %cst_5 = arith.constant 0.000000e+00 : f32
    %6 = vector.broadcast %cst_5 : f32 to vector<24x64xf32>
    %7 = arith.maximumf %5, %6 : vector<24x64xf32>
    %c0_6 = arith.constant 0 : index
    %c0_7 = arith.constant 0 : index
    %8 = vector.load %arg4[%c0_6, %c0_7] : memref<24x64xf32, #tpu.memory_space<vmem>>, vector<24x64xf32>
    tpu.vector_store %arg4[%c0_6, %c0_7], %7 {strides = array<i32>} : memref<24x64xf32, #tpu.memory_space<vmem>>, vector<24x64xf32>,
    return
  }
  func.func @transform_0(%arg0: i32) -> (i32, i32) {
    %c0_i32 = arith.constant 0 : i32
    %c0_i32_0 = arith.constant 0 : i32
    return %arg0, %c0_i32 : i32, i32
  }
  func.func @transform_1(%arg0: i32) -> (i32, i32) {
    %c0_i32 = arith.constant 0 : i32
    %c0_i32_0 = arith.constant 0 : i32
    %c0_i32_1 = arith.constant 0 : i32
    return %c0_i32, %c0_i32_0 : i32, i32
  }
  func.func @transform_2(%arg0: i32) -> (i32, i32) {
    %c0_i32 = arith.constant 0 : i32
    %c0_i32_0 = arith.constant 0 : i32
    %c0_i32_1 = arith.constant 0 : i32
    return %c0_i32, %c0_i32_0 : i32, i32
  }
  func.func @transform_3(%arg0: i32) -> (i32, i32) {
    %c0_i32 = arith.constant 0 : i32
    %c0_i32_0 = arith.constant 0 : i32
    return %arg0, %c0_i32 : i32, i32
  }
}

module attributes {stable_mosaic.version = 11 : i64} {
  func.func @_mlp_head_kernel(%arg0: i32, %arg1: memref<2x768xf32, #tpu.memory_space<vmem>>, %arg2: memref<2x32xf32, #tpu.memory_space<vmem>>, %arg3: memref<768x512xf32, #tpu.memory_space<vmem>>, %arg4: memref<1x512xf32, #tpu.memory_space<vmem>>, %arg5: memref<32x256xf32, #tpu.memory_space<vmem>>, %arg6: memref<1x256xf32, #tpu.memory_space<vmem>>, %arg7: memref<256x512xf32, #tpu.memory_space<vmem>>, %arg8: memref<1x512xf32, #tpu.memory_space<vmem>>, %arg9: memref<512x6xf32, #tpu.memory_space<vmem>>, %arg10: memref<1x6xf32, #tpu.memory_space<vmem>>, %arg11: memref<2x6xf32, #tpu.memory_space<vmem>>) attributes {dimension_semantics = [#tpu.dimension_semantics<arbitrary>], iteration_bounds = array<i64: 1>, scalar_prefetch = 0 : i64, scratch_operands = 0 : i64, tpu.core_type = #tpu.core_type<tc>, window_params = [{pipeline_mode = #tpu.pipeline_mode<synchronous>, transform_indices = @transform_0, window_bounds = array<i64: 2, 768>}, {pipeline_mode = #tpu.pipeline_mode<synchronous>, transform_indices = @transform_1, window_bounds = array<i64: 2, 32>}, {pipeline_mode = #tpu.pipeline_mode<synchronous>, transform_indices = @transform_2, window_bounds = array<i64: 768, 512>}, {pipeline_mode = #tpu.pipeline_mode<synchronous>, transform_indices = @transform_3, window_bounds = array<i64: 1, 512>}, {pipeline_mode = #tpu.pipeline_mode<synchronous>, transform_indices = @transform_4, window_bounds = array<i64: 32, 256>}, {pipeline_mode = #tpu.pipeline_mode<synchronous>, transform_indices = @transform_5, window_bounds = array<i64: 1, 256>}, {pipeline_mode = #tpu.pipeline_mode<synchronous>, transform_indices = @transform_6, window_bounds = array<i64: 256, 512>}, {pipeline_mode = #tpu.pipeline_mode<synchronous>, transform_indices = @transform_7, window_bounds = array<i64: 1, 512>}, {pipeline_mode = #tpu.pipeline_mode<synchronous>, transform_indices = @transform_8, window_bounds = array<i64: 512, 6>}, {pipeline_mode = #tpu.pipeline_mode<synchronous>, transform_indices = @transform_9, window_bounds = array<i64: 1, 6>}, {pipeline_mode = #tpu.pipeline_mode<synchronous>, transform_indices = @transform_10, window_bounds = array<i64: 2, 6>}]} {
    %c0 = arith.constant 0 : index
    %c0_0 = arith.constant 0 : index
    %0 = vector.load %arg1[%c0, %c0_0] : memref<2x768xf32, #tpu.memory_space<vmem>>, vector<2x768xf32>
    %c0_1 = arith.constant 0 : index
    %c0_2 = arith.constant 0 : index
    %1 = vector.load %arg3[%c0_1, %c0_2] : memref<768x512xf32, #tpu.memory_space<vmem>>, vector<768x512xf32>
    %cst = arith.constant dense<0.000000e+00> : vector<2x512xf32>
    %2 = tpu.matmul %0, %1, %cst {dimension_numbers = #tpu.dot_dimension_numbers<[1], [0], [0], [1], [0, 0, 1, 1], [], []>} : vector<2x768xf32>, vector<768x512xf32>, vector<2x512xf32> -> vector<2x512xf32>
    %c0_3 = arith.constant 0 : index
    %c0_4 = arith.constant 0 : index
    %3 = vector.load %arg4[%c0_3, %c0_4] : memref<1x512xf32, #tpu.memory_space<vmem>>, vector<1x512xf32>
    %4 = vector.broadcast %3 : vector<1x512xf32> to vector<2x512xf32>
    %5 = arith.addf %2, %4 : vector<2x512xf32>
    %cst_5 = arith.constant 0.000000e+00 : f32
    %6 = vector.broadcast %cst_5 : f32 to vector<2x512xf32>
    %7 = arith.maximumf %5, %6 : vector<2x512xf32>
    %c0_6 = arith.constant 0 : index
    %c0_7 = arith.constant 0 : index
    %8 = vector.load %arg2[%c0_6, %c0_7] : memref<2x32xf32, #tpu.memory_space<vmem>>, vector<2x32xf32>
    %c0_8 = arith.constant 0 : index
    %c0_9 = arith.constant 0 : index
    %9 = vector.load %arg5[%c0_8, %c0_9] : memref<32x256xf32, #tpu.memory_space<vmem>>, vector<32x256xf32>
    %cst_10 = arith.constant dense<0.000000e+00> : vector<2x256xf32>
    %10 = tpu.matmul %8, %9, %cst_10 {dimension_numbers = #tpu.dot_dimension_numbers<[1], [0], [0], [1], [0, 0, 1, 1], [], []>} : vector<2x32xf32>, vector<32x256xf32>, vector<2x256xf32> -> vector<2x256xf32>
    %c0_11 = arith.constant 0 : index
    %c0_12 = arith.constant 0 : index
    %11 = vector.load %arg6[%c0_11, %c0_12] : memref<1x256xf32, #tpu.memory_space<vmem>>, vector<1x256xf32>
    %12 = vector.broadcast %11 : vector<1x256xf32> to vector<2x256xf32>
    %13 = arith.addf %10, %12 : vector<2x256xf32>
    %cst_13 = arith.constant 0.000000e+00 : f32
    %14 = vector.broadcast %cst_13 : f32 to vector<2x256xf32>
    %15 = arith.maximumf %13, %14 : vector<2x256xf32>
    %c0_14 = arith.constant 0 : index
    %c0_15 = arith.constant 0 : index
    %16 = vector.load %arg7[%c0_14, %c0_15] : memref<256x512xf32, #tpu.memory_space<vmem>>, vector<256x512xf32>
    %cst_16 = arith.constant dense<0.000000e+00> : vector<2x512xf32>
    %17 = tpu.matmul %15, %16, %cst_16 {dimension_numbers = #tpu.dot_dimension_numbers<[1], [0], [0], [1], [0, 0, 1, 1], [], []>} : vector<2x256xf32>, vector<256x512xf32>, vector<2x512xf32> -> vector<2x512xf32>
    %c0_17 = arith.constant 0 : index
    %c0_18 = arith.constant 0 : index
    %18 = vector.load %arg8[%c0_17, %c0_18] : memref<1x512xf32, #tpu.memory_space<vmem>>, vector<1x512xf32>
    %19 = vector.broadcast %18 : vector<1x512xf32> to vector<2x512xf32>
    %20 = arith.addf %17, %19 : vector<2x512xf32>
    %cst_19 = arith.constant 0.000000e+00 : f32
    %21 = vector.broadcast %cst_19 : f32 to vector<2x512xf32>
    %22 = arith.maximumf %20, %21 : vector<2x512xf32>
    %23 = arith.addf %7, %22 : vector<2x512xf32>
    %c0_20 = arith.constant 0 : index
    %c0_21 = arith.constant 0 : index
    %24 = vector.load %arg9[%c0_20, %c0_21] : memref<512x6xf32, #tpu.memory_space<vmem>>, vector<512x6xf32>
    %cst_22 = arith.constant dense<0.000000e+00> : vector<2x6xf32>
    %25 = tpu.matmul %23, %24, %cst_22 {dimension_numbers = #tpu.dot_dimension_numbers<[1], [0], [0], [1], [0, 0, 1, 1], [], []>} : vector<2x512xf32>, vector<512x6xf32>, vector<2x6xf32> -> vector<2x6xf32>
    %c0_23 = arith.constant 0 : index
    %c0_24 = arith.constant 0 : index
    %26 = vector.load %arg10[%c0_23, %c0_24] : memref<1x6xf32, #tpu.memory_space<vmem>>, vector<1x6xf32>
    %27 = vector.broadcast %26 : vector<1x6xf32> to vector<2x6xf32>
    %28 = arith.addf %25, %27 : vector<2x6xf32>
    %c0_25 = arith.constant 0 : index
    %c0_26 = arith.constant 0 : index
    %29 = vector.load %arg11[%c0_25, %c0_26] : memref<2x6xf32, #tpu.memory_space<vmem>>, vector<2x6xf32>
    tpu.vector_store %arg11[%c0_25, %c0_26], %28 {strides = array<i32>} : memref<2x6xf32, #tpu.memory_space<vmem>>, vector<2x6xf32>,
    return
  }
  func.func @transform_0(%arg0: i32) -> (i32, i32) {
    %c0_i32 = arith.constant 0 : i32
    %c0_i32_0 = arith.constant 0 : i32
    %c0_i32_1 = arith.constant 0 : i32
    return %c0_i32, %c0_i32_0 : i32, i32
  }
  func.func @transform_1(%arg0: i32) -> (i32, i32) {
    %c0_i32 = arith.constant 0 : i32
    %c0_i32_0 = arith.constant 0 : i32
    %c0_i32_1 = arith.constant 0 : i32
    return %c0_i32, %c0_i32_0 : i32, i32
  }
  func.func @transform_2(%arg0: i32) -> (i32, i32) {
    %c0_i32 = arith.constant 0 : i32
    %c0_i32_0 = arith.constant 0 : i32
    %c0_i32_1 = arith.constant 0 : i32
    return %c0_i32, %c0_i32_0 : i32, i32
  }
  func.func @transform_3(%arg0: i32) -> (i32, i32) {
    %c0_i32 = arith.constant 0 : i32
    %c0_i32_0 = arith.constant 0 : i32
    %c0_i32_1 = arith.constant 0 : i32
    return %c0_i32, %c0_i32_0 : i32, i32
  }
  func.func @transform_4(%arg0: i32) -> (i32, i32) {
    %c0_i32 = arith.constant 0 : i32
    %c0_i32_0 = arith.constant 0 : i32
    %c0_i32_1 = arith.constant 0 : i32
    return %c0_i32, %c0_i32_0 : i32, i32
  }
  func.func @transform_5(%arg0: i32) -> (i32, i32) {
    %c0_i32 = arith.constant 0 : i32
    %c0_i32_0 = arith.constant 0 : i32
    %c0_i32_1 = arith.constant 0 : i32
    return %c0_i32, %c0_i32_0 : i32, i32
  }
  func.func @transform_6(%arg0: i32) -> (i32, i32) {
    %c0_i32 = arith.constant 0 : i32
    %c0_i32_0 = arith.constant 0 : i32
    %c0_i32_1 = arith.constant 0 : i32
    return %c0_i32, %c0_i32_0 : i32, i32
  }
  func.func @transform_7(%arg0: i32) -> (i32, i32) {
    %c0_i32 = arith.constant 0 : i32
    %c0_i32_0 = arith.constant 0 : i32
    %c0_i32_1 = arith.constant 0 : i32
    return %c0_i32, %c0_i32_0 : i32, i32
  }
  func.func @transform_8(%arg0: i32) -> (i32, i32) {
    %c0_i32 = arith.constant 0 : i32
    %c0_i32_0 = arith.constant 0 : i32
    %c0_i32_1 = arith.constant 0 : i32
    return %c0_i32, %c0_i32_0 : i32, i32
  }
  func.func @transform_9(%arg0: i32) -> (i32, i32) {
    %c0_i32 = arith.constant 0 : i32
    %c0_i32_0 = arith.constant 0 : i32
    %c0_i32_1 = arith.constant 0 : i32
    return %c0_i32, %c0_i32_0 : i32, i32
  }
  func.func @transform_10(%arg0: i32) -> (i32, i32) {
    %c0_i32 = arith.constant 0 : i32
    %c0_i32_0 = arith.constant 0 : i32
    %c0_i32_1 = arith.constant 0 : i32
    return %c0_i32, %c0_i32_0 : i32, i32
  }
}

</mosaic_0001>

<llo_original>
// kernel: dqn_forward.4
$region0: #{dqn_forward.4}
  #allocation0 [shape = 'u32[]', space=smem, size = 0x4, offset = 0x4, fixed_abs, tag = 'smem constant byte address 0x4 - core index']
  #allocation1 [shape = 'u32[144,128]{1,0:T(1,128)}', space=vmem, size = 0x12000, scoped, tag = 'internal scratch']
  %s0 = inlined_call_operand.vmem [shape: f32[600,64], index: 0, kind: input, shape index: {}]
  %s1 = inlined_call_operand.vmem [shape: f32[64,32], index: 1, kind: input, shape index: {}]
  %s2 = inlined_call_operand.vmem [shape: f32[1,32], index: 2, kind: input, shape index: {}]
  %s3 = inlined_call_operand.vmem [shape: f32[600,32], index: 3, kind: output, shape index: {}]
  %s4 = sld [smem:[#allocation0]]
  $region93: #{dqn_forward.4} parent=0
    _
  %s6 = ssub.s32 1, %s4
  %s7 = scalar_select 0, %s6, %s4
  $region1: #{dqn_forward.4} parent=0
    #allocation2 [shape = 'u8[311296]{0}', space=vmem, size = 0x4c000, scoped, tag = 'output window, operand 0']
    loop: start=0, step=1, limit=4
    $region2: #{dqn_forward.4} parent=1 // loop_pre_header
      _
    $region3: #{dqn_forward.4} parent=1 // loop_header
      %s9 = sphi 0, %s13
      %p10 = scmp.ge.s32.totalorder %s9, 4
      %s19 = sphi 0, %s21
      %s22 = sphi 0, %s19
      %s23 = sphi 0, %s22
      %s39 = sphi 0, %s23
      %s43 = sphi 0, %s43
      %s45 = sphi 0, %s43
      %s46 = sphi 0, %s45
      %s60 = sphi 0, %s46
      %s64 = sphi 0, %s64
      %s66 = sphi 0, %s64
      %s67 = sphi 0, %s66
      %s81 = sphi 0, %s67
      %s87 = sphi 0, %s89
      %s90 = sphi 0, %s87
      %s91 = sphi 0, %s90
      %s107 = sphi 0, %s91
    $region4: #{dqn_forward.4} parent=1 // loop_header_branch
      %12 = sbr.rel (%p10) target = $region8
    $region5: #{dqn_forward.4} parent=1 // loop_body
      %s14 = ssub.s32 %s9, 1
      %s15 = ssub.s32 %s9, 2
      %s16 = sadd.s32 %s9, 1
      %s17 = ssub.s32 %s9, %s16
      %p18 = scmp.eq.s32.totalorder %s17, 0
      %s20 = sadd.s32 %s19, 1
      %s21 = scalar_select %p18, %s19, %s20
      %p24 = pneg %p18
      %p25 = scmp.eq.s32.totalorder %s9, 1
      %p26 = por %p24, %p25
      %p27 = scmp.ne.s32.totalorder %s19, %s22
      %p28 = scmp.eq.s32.totalorder %s9, 0
      %p29 = por %p27, %p28
      %p30 = scmp.ne.s32.totalorder %s19, %s22
      %p31 = scmp.eq.s32.totalorder %s14, 1
      %p32 = por %p30, %p31
      %p33 = scmp.ne.s32.totalorder %s22, %s23
      %p34 = scmp.eq.s32.totalorder %s14, 0
      %p35 = por %p33, %p34
      %p36 = scmp.ne.s32.totalorder %s22, %s23
      %p37 = scmp.eq.s32.totalorder %s15, 1
      %p38 = por %p36, %p37
      %p40 = scmp.ne.s32.totalorder %s23, %s39
      %p41 = scmp.eq.s32.totalorder %s15, 0
      %p42 = por %p40, %p41
      %s44 = sadd.s32 %s43, 1
      %p47 = scmp.eq.s32.totalorder %s9, 1
      %p48 = scmp.ne.s32.totalorder %s43, %s45
      %p49 = scmp.eq.s32.totalorder %s9, 0
      %p50 = por %p48, %p49
      %p51 = scmp.ne.s32.totalorder %s43, %s45
      %p52 = scmp.eq.s32.totalorder %s14, 1
      %p53 = por %p51, %p52
      %p54 = scmp.ne.s32.totalorder %s45, %s46
      %p55 = scmp.eq.s32.totalorder %s14, 0
      %p56 = por %p54, %p55
      %p57 = scmp.ne.s32.totalorder %s45, %s46
      %p58 = scmp.eq.s32.totalorder %s15, 1
      %p59 = por %p57, %p58
      %p61 = scmp.ne.s32.totalorder %s46, %s60
      %p62 = scmp.eq.s32.totalorder %s15, 0
      %p63 = por %p61, %p62
      %s65 = sadd.s32 %s64, 1
      %p68 = scmp.eq.s32.totalorder %s9, 1
      %p69 = scmp.ne.s32.totalorder %s64, %s66
      %p70 = scmp.eq.s32.totalorder %s9, 0
      %p71 = por %p69, %p70
      %p72 = scmp.ne.s32.totalorder %s64, %s66
      %p73 = scmp.eq.s32.totalorder %s14, 1
      %p74 = por %p72, %p73
      %p75 = scmp.ne.s32.totalorder %s66, %s67
      %p76 = scmp.eq.s32.totalorder %s14, 0
      %p77 = por %p75, %p76
      %p78 = scmp.ne.s32.totalorder %s66, %s67
      %p79 = scmp.eq.s32.totalorder %s15, 1
      %p80 = por %p78, %p79
      %p82 = scmp.ne.s32.totalorder %s67, %s81
      %p83 = scmp.eq.s32.totalorder %s15, 0
      %p84 = por %p82, %p83
      %s85 = ssub.s32 %s9, %s16
      %p86 = scmp.eq.s32.totalorder %s85, 0
      %s88 = sadd.s32 %s87, 1
      %s89 = scalar_select %p86, %s87, %s88
      %p92 = pneg %p86
      %p93 = scmp.eq.s32.totalorder %s9, 1
      %p94 = por %p92, %p93
      %p95 = scmp.ne.s32.totalorder %s87, %s90
      %p96 = scmp.eq.s32.totalorder %s9, 0
      %p97 = por %p95, %p96
      %p98 = scmp.ne.s32.totalorder %s87, %s90
      %p99 = scmp.eq.s32.totalorder %s14, 1
      %p100 = por %p98, %p99
      %p101 = scmp.ne.s32.totalorder %s90, %s91
      %p102 = scmp.eq.s32.totalorder %s14, 0
      %p103 = por %p101, %p102
      %p104 = scmp.ne.s32.totalorder %s90, %s91
      %p105 = scmp.eq.s32.totalorder %s15, 1
      %p106 = por %p104, %p105
      %p108 = scmp.ne.s32.totalorder %s91, %s107
      %p109 = scmp.eq.s32.totalorder %s15, 0
      %p110 = por %p108, %p109
      %p111 = scmp.le.s32.totalorder 1, %s9
      %p112 = scmp.lt.s32.totalorder %s9, 3
      %p113 = pnand %p111, %p112
      %p114 = pneg %p113
      // Predicated region
      $region9: #{dqn_forward.4} parent=5 // pred_check
        _
      $region10: #{dqn_forward.4} parent=5 // pred_check_branch
        %116 = sbr.rel (%p113) target = $region12
      $region11: #{dqn_forward.4} parent=5 // pred_region
        %s117 = ssub.s32 %s9, 1
        // Predicated region
        $region13: #{dqn_forward.4} parent=11 // pred_check
          %p118 = pneg %p56
        $region14: #{dqn_forward.4} parent=11 // pred_check_branch
          %120 = sbr.rel (%p118) target = $region16
        $region15: #{dqn_forward.4} parent=11 // pred_region
          _
        $region16: #{dqn_forward.4} parent=11 // pred_fallthru
          _
        // Predicated region
        $region17: #{dqn_forward.4} parent=11 // pred_check
          %p121 = pneg %p77
        $region18: #{dqn_forward.4} parent=11 // pred_check_branch
          %123 = sbr.rel (%p121) target = $region20
        $region19: #{dqn_forward.4} parent=11 // pred_region
          _
        $region20: #{dqn_forward.4} parent=11 // pred_fallthru
          _
      $region12: #{dqn_forward.4} parent=5 // pred_fallthru
        _
      %p124 = scmp.lt.s32.totalorder %s9, 2
      // Predicated region
      $region21: #{dqn_forward.4} parent=5 // pred_check
        %p125 = pneg %p124
      $region22: #{dqn_forward.4} parent=5 // pred_check_branch
        %127 = sbr.rel (%p125) target = $region24
      $region23: #{dqn_forward.4} parent=5 // pred_region
        // Predicated region
        $region25: #{dqn_forward.4} parent=23 // pred_check
          %p128 = pneg %p29
        $region26: #{dqn_forward.4} parent=23 // pred_check_branch
          %130 = sbr.rel (%p128) target = $region28
        $region27: #{dqn_forward.4} parent=23 // pred_region
          %s131 = smul.u32 38, %s9
          %s132 = ssub.s32 75, %s131
          %p133 = scmp.lt.s32.totalorder %s132, 38
          %s134 = scalar_select %p133, %s132, 38
          %s135 = smul.u32 128, %s134
          %p136 = scmp.lt.s32.totalorder %s131, 74
          %s137 = scalar_select %p136, %s131, 74
          %s138 = smul.addr %s137, 8
          %s139 = scalar_lea.vmem %s0, %s138
          %s140 = smul.u32 38, %s9
          %s141 = ssub.s32 75, %s140
          %p142 = scmp.lt.s32.totalorder %s141, 38
          %s143 = scalar_select %p142, %s141, 38
          %s144 = smul.u32 128, %s143
        $region28: #{dqn_forward.4} parent=23 // pred_fallthru
          _
      $region24: #{dqn_forward.4} parent=5 // pred_fallthru
        _
      %p145 = scmp.le.s32.totalorder 1, %s9
      %p146 = scmp.lt.s32.totalorder %s9, 3
      %p147 = pnand %p145, %p146
      %p148 = pneg %p147
      // Predicated region
      $region29: #{dqn_forward.4} parent=5 // pred_check
        _
      $region30: #{dqn_forward.4} parent=5 // pred_check_branch
        %150 = sbr.rel (%p147) target = $region32
      $region31: #{dqn_forward.4} parent=5 // pred_region
        %s151 = ssub.s32 %s9, 1
        %s152 = smul.u32 38, %s14
        %s153 = ssub.s32 75, %s152
        %p154 = scmp.lt.s32.totalorder %s153, 38
        %s155 = scalar_select %p154, %s153, 38
        %s156 = smul.u32 128, %s155
        %p157 = scmp.lt.s32.totalorder %s152, 74
        %s158 = scalar_select %p157, %s152, 74
        %s159 = smul.addr %s158, 8
        %s160 = scalar_lea.vmem %s0, %s159
        %p161 = pneg %p35
        %p162 = pneg %p32
        %p163 = pneg %p56
        %p164 = pneg %p53
        %p165 = pneg %p77
        %p166 = pneg %p74
        %p167 = pneg %p103
        %p168 = pneg %p100
        %s169 = sand.u32 %s90, 1
        %s170 = sand.u32 %s90, 1
        %s171 = smul.addr %s170, 304
        %s172 = scalar_lea.vmem [#allocation2], %s171
        %s173 = smul.u32 38, %s14
        %s174 = ssub.s32 75, %s173
        %p175 = scmp.lt.s32.totalorder %s174, 38
        %s176 = scalar_select %p175, %s174, 38
        %s177 = smul.u32 128, %s176
        %p178 = scmp.lt.s32.totalorder %s173, 74
        %s179 = scalar_select %p178, %s173, 74
        %s180 = smul.addr %s179, 8
        %s181 = scalar_lea.vmem %s0, %s180
        %s182 = smul.u32 38, %s14
        %s183 = ssub.s32 75, %s182
        %p184 = scmp.lt.s32.totalorder %s183, 38
        %s185 = scalar_select %p184, %s183, 38
        %s186 = smul.u32 128, %s185
        %s187 = smul.u32 38, %s14
        %s188 = ssub.s32 75, %s187
        %p189 = scmp.lt.s32.totalorder %s188, 38
        %s190 = scalar_select %p189, %s188, 38
        %s191 = smul.u32 128, %s190
        %v192 = vld [vmem:[%s181] sm:$0xff]
        %v193 = vld [vmem:[%s181 + $0x8] sm:$0xff]
        %v194 = vld [vmem:[%s181 + $0x10] sm:$0xff]
        %v195 = vld [vmem:[%s181 + $0x18] sm:$0xff]
        %v196 = vld [vmem:[%s181 + $0x20] sm:$0xff]
        %v197 = vld [vmem:[%s181 + $0x28] sm:$0xff]
        %v198 = vld [vmem:[%s181 + $0x30] sm:$0xff]
        %v199 = vld [vmem:[%s181 + $0x38] sm:$0xff]
        %v200 = vld [vmem:[%s181 + $0x40] sm:$0xff]
        %v201 = vld [vmem:[%s181 + $0x48] sm:$0xff]
        %v202 = vld [vmem:[%s181 + $0x50] sm:$0xff]
        %v203 = vld [vmem:[%s181 + $0x58] sm:$0xff]
        %v204 = vld [vmem:[%s181 + $0x60] sm:$0xff]
        %v205 = vld [vmem:[%s181 + $0x68] sm:$0xff]
        %v206 = vld [vmem:[%s181 + $0x70] sm:$0xff]
        %v207 = vld [vmem:[%s181 + $0x78] sm:$0xff]
        %v208 = vld [vmem:[%s181 + $0x80] sm:$0xff]
        %v209 = vld [vmem:[%s181 + $0x88] sm:$0xff]
        %v210 = vld [vmem:[%s181 + $0x90] sm:$0xff]
        %v211 = vld [vmem:[%s181 + $0x98] sm:$0xff]
        %v212 = vld [vmem:[%s181 + $0xa0] sm:$0xff]
        %v213 = vld [vmem:[%s181 + $0xa8] sm:$0xff]
        %v214 = vld [vmem:[%s181 + $0xb0] sm:$0xff]
        %v215 = vld [vmem:[%s181 + $0xb8] sm:$0xff]
        %v216 = vld [vmem:[%s181 + $0xc0] sm:$0xff]
        %v217 = vld [vmem:[%s181 + $0xc8] sm:$0xff]
        %v218 = vld [vmem:[%s181 + $0xd0] sm:$0xff]
        %v219 = vld [vmem:[%s181 + $0xd8] sm:$0xff]
        %v220 = vld [vmem:[%s181 + $0xe0] sm:$0xff]
        %v221 = vld [vmem:[%s181 + $0xe8] sm:$0xff]
        %v222 = vld [vmem:[%s181 + $0xf0] sm:$0xff]
        %v223 = vld [vmem:[%s181 + $0xf8] sm:$0xff]
        %v224 = vld [vmem:[%s181 + $0x100] sm:$0xff]
        %v225 = vld [vmem:[%s181 + $0x108] sm:$0xff]
        %v226 = vld [vmem:[%s181 + $0x110] sm:$0xff]
        %v227 = vld [vmem:[%s181 + $0x118] sm:$0xff]
        %v228 = vld [vmem:[%s181 + $0x120] sm:$0xff]
        %v229 = vld [vmem:[%s181 + $0x128] sm:$0xff]
        %v230 = vld [vmem:[%s1] sm:$0xff]
        %v231 = vld [vmem:[%s1 + $0x8] sm:$0xff]
        %v232 = vld [vmem:[%s1 + $0x10] sm:$0xff]
        %v233 = vld [vmem:[%s1 + $0x18] sm:$0xff]
        %v234 = vld [vmem:[%s1 + $0x20] sm:$0xff]
        %v235 = vld [vmem:[%s1 + $0x28] sm:$0xff]
        %v236 = vld [vmem:[%s1 + $0x30] sm:$0xff]
        %v237 = vld [vmem:[%s1 + $0x38] sm:$0xff]
        %v238 = vld [vmem:[%s2] sm:$0x1]
        %v240 = vlaneseq
        %v241 = vshrl.u32 %v240, 7
        %v242 = vsub.s32 0, %v241
        %v243 = vrot.slane %v238, %v242
        %vm245 = vcmask 523264
        %v247 = vsel %vm245, %v192, 0
        %v250 = vsel %vm245, %v193, 0
        %v253 = vsel %vm245, %v194, 0
        %v256 = vsel %vm245, %v195, 0
        %v259 = vsel %vm245, %v196, 0
        %v262 = vsel %vm245, %v197, 0
        %v265 = vsel %vm245, %v198, 0
        %v268 = vsel %vm245, %v199, 0
        %v271 = vsel %vm245, %v200, 0
        %v274 = vsel %vm245, %v201, 0
        %v277 = vsel %vm245, %v202, 0
        %v280 = vsel %vm245, %v203, 0
        %v283 = vsel %vm245, %v204, 0
        %v286 = vsel %vm245, %v205, 0
        %v289 = vsel %vm245, %v206, 0
        %v292 = vsel %vm245, %v207, 0
        %v295 = vsel %vm245, %v208, 0
        %v298 = vsel %vm245, %v209, 0
        %v301 = vsel %vm245, %v210, 0
        %v304 = vsel %vm245, %v211, 0
        %v307 = vsel %vm245, %v212, 0
        %v310 = vsel %vm245, %v213, 0
        %v313 = vsel %vm245, %v214, 0
        %v316 = vsel %vm245, %v215, 0
        %v319 = vsel %vm245, %v216, 0
        %v322 = vsel %vm245, %v217, 0
        %v325 = vsel %vm245, %v218, 0
        %v328 = vsel %vm245, %v219, 0
        %v331 = vsel %vm245, %v220, 0
        %v334 = vsel %vm245, %v221, 0
        %v337 = vsel %vm245, %v222, 0
        %v340 = vsel %vm245, %v223, 0
        %v343 = vsel %vm245, %v224, 0
        %v346 = vsel %vm245, %v225, 0
        %v349 = vsel %vm245, %v226, 0
        %v352 = vsel %vm245, %v227, 0
        %v355 = vsel %vm245, %v228, 0
        %v358 = vsel %vm245, %v229, 0
        %360 = vmatprep.subr.mxu0 0.0
        %361 = vmatpush1.msra.mxu0 0.0
        %362 = vmatprep.subr.mxu0 0.0
        %363 = vmatpush1.msra.mxu0 0.0
        %364 = vmatprep.subr.mxu0 0.0
        %365 = vmatpush1.msra.mxu0 0.0
        %366 = vmatprep.subr.mxu0 0.0
        %367 = vmatpush1.msra.mxu0 0.0
        %368 = vmatprep.subr.mxu0 0.0
        %369 = vmatpush1.msra.mxu0 0.0
        %370 = vmatprep.subr.mxu0 0.0
        %371 = vmatpush1.msra.mxu0 0.0
        %372 = vmatprep.subr.mxu0 0.0
        %373 = vmatpush1.msra.mxu0 0.0
        %374 = vmatprep.subr.mxu0 0.0
        %375 = vmatpush1.msra.mxu0 0.0
        %376 = vmatprep.subr.mxu0 0.0
        %377 = vmatpush1.msra.mxu0 %v237
        %378 = vmatprep.subr.mxu0 0.0
        %379 = vmatpush1.msra.mxu0 %v236
        %380 = vmatprep.subr.mxu0 0.0
        %381 = vmatpush1.msra.mxu0 %v235
        %382 = vmatprep.subr.mxu0 0.0
        %383 = vmatpush1.msra.mxu0 %v234
        %384 = vmatprep.subr.mxu0 0.0
        %385 = vmatpush1.msra.mxu0 %v233
        %386 = vmatprep.subr.mxu0 0.0
        %387 = vmatpush1.msra.mxu0 %v232
        %388 = vmatprep.subr.mxu0 0.0
        %389 = vmatpush1.msra.mxu0 %v231
        %390 = vmatprep.subr.mxu0 0.0
        %391 = vmatpush1.msra.mxu0 %v230
        %392 = vmatprep.subr.mxu0 0.0
        %393 = vmatpush2.msra.mxu0 0.0
        %394 = vmatprep.subr.mxu0 0.0
        %395 = vmatpush2.msra.mxu0 0.0
        %396 = vmatprep.subr.mxu0 0.0
        %397 = vmatpush2.msra.mxu0 0.0
        %398 = vmatprep.subr.mxu0 0.0
        %399 = vmatpush2.msra.mxu0 0.0
        %400 = vmatprep.subr.mxu0 0.0
        %401 = vmatpush2.msra.mxu0 0.0
        %402 = vmatprep.subr.mxu0 0.0
        %403 = vmatpush2.msra.mxu0 0.0
        %404 = vmatprep.subr.mxu0 0.0
        %405 = vmatpush2.msra.mxu0 0.0
        %406 = vmatprep.subr.mxu0 0.0
        %407 = vmatpush2.msra.mxu0 0.0
        %408 = vmatprep.subr.mxu0 0.0
        %409 = vmatpush2.msra.mxu0 0.0
        %410 = vmatprep.subr.mxu0 0.0
        %411 = vmatpush2.msra.mxu0 0.0
        %412 = vmatprep.subr.mxu0 0.0
        %413 = vmatpush2.msra.mxu0 0.0
        %414 = vmatprep.subr.mxu0 0.0
        %415 = vmatpush2.msra.mxu0 0.0
        %416 = vmatprep.subr.mxu0 0.0
        %417 = vmatpush2.msra.mxu0 0.0
        %418 = vmatprep.subr.mxu0 0.0
        %419 = vmatpush2.msra.mxu0 0.0
        %420 = vmatprep.subr.mxu0 0.0
        %421 = vmatpush2.msra.mxu0 0.0
        %422 = vmatprep.subr.mxu0 0.0
        %423 = vmatpush2.msra.mxu0 0.0
        %424 = vmatprep.mubr.f32.mxu0 0.0
        %425 = vmatmul.mubr.f32.gmra.mxu0 %v247
        %v426 = vpop.f32.mrf.mxu0
        %v427 = vadd.f32 %v243, %v426
        %v428 = vpop.f32.mrf.mxu0
        %429 = vmatprep.mubr.f32.mxu0 0.0
        %430 = vmatmul.mubr.f32.gmra.mxu0 %v250
        %v431 = vpop.f32.mrf.mxu0
        %v432 = vadd.f32 %v243, %v431
        %v433 = vpop.f32.mrf.mxu0
        %434 = vmatprep.mubr.f32.mxu0 0.0
        %435 = vmatmul.mubr.f32.gmra.mxu0 %v253
        %v436 = vpop.f32.mrf.mxu0
        %v437 = vadd.f32 %v243, %v436
        %v438 = vpop.f32.mrf.mxu0
        %439 = vmatprep.mubr.f32.mxu0 0.0
        %440 = vmatmul.mubr.f32.gmra.mxu0 %v256
        %v441 = vpop.f32.mrf.mxu0
        %v442 = vadd.f32 %v243, %v441
        %v443 = vpop.f32.mrf.mxu0
        %444 = vmatprep.mubr.f32.mxu0 0.0
        %445 = vmatmul.mubr.f32.gmra.mxu0 %v259
        %v446 = vpop.f32.mrf.mxu0
        %v447 = vadd.f32 %v243, %v446
        %v448 = vpop.f32.mrf.mxu0
        %449 = vmatprep.mubr.f32.mxu0 0.0
        %450 = vmatmul.mubr.f32.gmra.mxu0 %v262
        %v451 = vpop.f32.mrf.mxu0
        %v452 = vadd.f32 %v243, %v451
        %v453 = vpop.f32.mrf.mxu0
        %454 = vmatprep.mubr.f32.mxu0 0.0
        %455 = vmatmul.mubr.f32.gmra.mxu0 %v265
        %v456 = vpop.f32.mrf.mxu0
        %v457 = vadd.f32 %v243, %v456
        %v458 = vpop.f32.mrf.mxu0
        %459 = vmatprep.mubr.f32.mxu0 0.0
        %460 = vmatmul.mubr.f32.gmra.mxu0 %v268
        %v461 = vpop.f32.mrf.mxu0
        %v462 = vadd.f32 %v243, %v461
        %v463 = vpop.f32.mrf.mxu0
        %464 = vmatprep.mubr.f32.mxu0 0.0
        %465 = vmatmul.mubr.f32.gmra.mxu0 %v271
        %v466 = vpop.f32.mrf.mxu0
        %v467 = vadd.f32 %v243, %v466
        %v468 = vpop.f32.mrf.mxu0
        %469 = vmatprep.mubr.f32.mxu0 0.0
        %470 = vmatmul.mubr.f32.gmra.mxu0 %v274
        %v471 = vpop.f32.mrf.mxu0
        %v472 = vadd.f32 %v243, %v471
        %v473 = vpop.f32.mrf.mxu0
        %474 = vmatprep.mubr.f32.mxu0 0.0
        %475 = vmatmul.mubr.f32.gmra.mxu0 %v277
        %v476 = vpop.f32.mrf.mxu0
        %v477 = vadd.f32 %v243, %v476
        %v478 = vpop.f32.mrf.mxu0
        %479 = vmatprep.mubr.f32.mxu0 0.0
        %480 = vmatmul.mubr.f32.gmra.mxu0 %v280
        %v481 = vpop.f32.mrf.mxu0
        %v482 = vadd.f32 %v243, %v481
        %v483 = vpop.f32.mrf.mxu0
        %484 = vmatprep.mubr.f32.mxu0 0.0
        %485 = vmatmul.mubr.f32.gmra.mxu0 %v283
        %v486 = vpop.f32.mrf.mxu0
        %v487 = vadd.f32 %v243, %v486
        %v488 = vpop.f32.mrf.mxu0
        %489 = vmatprep.mubr.f32.mxu0 0.0
        %490 = vmatmul.mubr.f32.gmra.mxu0 %v286
        %v491 = vpop.f32.mrf.mxu0
        %v492 = vadd.f32 %v243, %v491
        %v493 = vpop.f32.mrf.mxu0
        %494 = vmatprep.mubr.f32.mxu0 0.0
        %495 = vmatmul.mubr.f32.gmra.mxu0 %v289
        %v496 = vpop.f32.mrf.mxu0
        %v497 = vadd.f32 %v243, %v496
        %v498 = vpop.f32.mrf.mxu0
        %499 = vmatprep.mubr.f32.mxu0 0.0
        %500 = vmatmul.mubr.f32.gmra.mxu0 %v292
        %v501 = vpop.f32.mrf.mxu0
        %v502 = vadd.f32 %v243, %v501
        %v503 = vpop.f32.mrf.mxu0
        %504 = vmatprep.mubr.f32.mxu0 0.0
        %505 = vmatmul.mubr.f32.gmra.mxu0 %v295
        %v506 = vpop.f32.mrf.mxu0
        %v507 = vadd.f32 %v243, %v506
        %v508 = vpop.f32.mrf.mxu0
        %509 = vmatprep.mubr.f32.mxu0 0.0
        %510 = vmatmul.mubr.f32.gmra.mxu0 %v298
        %v511 = vpop.f32.mrf.mxu0
        %v512 = vadd.f32 %v243, %v511
        %v513 = vpop.f32.mrf.mxu0
        %514 = vmatprep.mubr.f32.mxu0 0.0
        %515 = vmatmul.mubr.f32.gmra.mxu0 %v301
        %v516 = vpop.f32.mrf.mxu0
        %v517 = vadd.f32 %v243, %v516
        %v518 = vpop.f32.mrf.mxu0
        %519 = vmatprep.mubr.f32.mxu0 0.0
        %520 = vmatmul.mubr.f32.gmra.mxu0 %v304
        %v521 = vpop.f32.mrf.mxu0
        %v522 = vadd.f32 %v243, %v521
        %v523 = vpop.f32.mrf.mxu0
        %524 = vmatprep.mubr.f32.mxu0 0.0
        %525 = vmatmul.mubr.f32.gmra.mxu0 %v307
        %v526 = vpop.f32.mrf.mxu0
        %v527 = vadd.f32 %v243, %v526
        %v528 = vpop.f32.mrf.mxu0
        %529 = vmatprep.mubr.f32.mxu0 0.0
        %530 = vmatmul.mubr.f32.gmra.mxu0 %v310
        %v531 = vpop.f32.mrf.mxu0
        %v532 = vadd.f32 %v243, %v531
        %v533 = vpop.f32.mrf.mxu0
        %534 = vmatprep.mubr.f32.mxu0 0.0
        %535 = vmatmul.mubr.f32.gmra.mxu0 %v313
        %v536 = vpop.f32.mrf.mxu0
        %v537 = vadd.f32 %v243, %v536
        %v538 = vpop.f32.mrf.mxu0
        %539 = vmatprep.mubr.f32.mxu0 0.0
        %540 = vmatmul.mubr.f32.gmra.mxu0 %v316
        %v541 = vpop.f32.mrf.mxu0
        %v542 = vadd.f32 %v243, %v541
        %v543 = vpop.f32.mrf.mxu0
        %544 = vmatprep.mubr.f32.mxu0 0.0
        %545 = vmatmul.mubr.f32.gmra.mxu0 %v319
        %v546 = vpop.f32.mrf.mxu0
        %v547 = vadd.f32 %v243, %v546
        %v548 = vpop.f32.mrf.mxu0
        %549 = vmatprep.mubr.f32.mxu0 0.0
        %550 = vmatmul.mubr.f32.gmra.mxu0 %v322
        %v551 = vpop.f32.mrf.mxu0
        %v552 = vadd.f32 %v243, %v551
        %v553 = vpop.f32.mrf.mxu0
        %554 = vmatprep.mubr.f32.mxu0 0.0
        %555 = vmatmul.mubr.f32.gmra.mxu0 %v325
        %v556 = vpop.f32.mrf.mxu0
        %v557 = vadd.f32 %v243, %v556
        %v558 = vpop.f32.mrf.mxu0
        %559 = vmatprep.mubr.f32.mxu0 0.0
        %560 = vmatmul.mubr.f32.gmra.mxu0 %v328
        %v561 = vpop.f32.mrf.mxu0
        %v562 = vadd.f32 %v243, %v561
        %v563 = vpop.f32.mrf.mxu0
        %564 = vmatprep.mubr.f32.mxu0 0.0
        %565 = vmatmul.mubr.f32.gmra.mxu0 %v331
        %v566 = vpop.f32.mrf.mxu0
        %v567 = vadd.f32 %v243, %v566
        %v568 = vpop.f32.mrf.mxu0
        %569 = vmatprep.mubr.f32.mxu0 0.0
        %570 = vmatmul.mubr.f32.gmra.mxu0 %v334
        %v571 = vpop.f32.mrf.mxu0
        %v572 = vadd.f32 %v243, %v571
        %v573 = vpop.f32.mrf.mxu0
        %574 = vmatprep.mubr.f32.mxu0 0.0
        %575 = vmatmul.mubr.f32.gmra.mxu0 %v337
        %v576 = vpop.f32.mrf.mxu0
        %v577 = vadd.f32 %v243, %v576
        %v578 = vpop.f32.mrf.mxu0
        %579 = vmatprep.mubr.f32.mxu0 0.0
        %580 = vmatmul.mubr.f32.gmra.mxu0 %v340
        %v581 = vpop.f32.mrf.mxu0
        %v582 = vadd.f32 %v243, %v581
        %v583 = vpop.f32.mrf.mxu0
        %584 = vmatprep.mubr.f32.mxu0 0.0
        %585 = vmatmul.mubr.f32.gmra.mxu0 %v343
        %v586 = vpop.f32.mrf.mxu0
        %v587 = vadd.f32 %v243, %v586
        %v588 = vpop.f32.mrf.mxu0
        %589 = vmatprep.mubr.f32.mxu0 0.0
        %590 = vmatmul.mubr.f32.gmra.mxu0 %v346
        %v591 = vpop.f32.mrf.mxu0
        %v592 = vadd.f32 %v243, %v591
        %v593 = vpop.f32.mrf.mxu0
        %594 = vmatprep.mubr.f32.mxu0 0.0
        %595 = vmatmul.mubr.f32.gmra.mxu0 %v349
        %v596 = vpop.f32.mrf.mxu0
        %v597 = vadd.f32 %v243, %v596
        %v598 = vpop.f32.mrf.mxu0
        %599 = vmatprep.mubr.f32.mxu0 0.0
        %600 = vmatmul.mubr.f32.gmra.mxu0 %v352
        %v601 = vpop.f32.mrf.mxu0
        %v602 = vadd.f32 %v243, %v601
        %v603 = vpop.f32.mrf.mxu0
        %604 = vmatprep.mubr.f32.mxu0 0.0
        %605 = vmatmul.mubr.f32.gmra.mxu0 %v355
        %v606 = vpop.f32.mrf.mxu0
        %v607 = vadd.f32 %v243, %v606
        %v608 = vpop.f32.mrf.mxu0
        %609 = vmatprep.mubr.f32.mxu0 0.0
        %610 = vmatmul.mubr.f32.gmra.mxu0 %v358
        %v611 = vpop.f32.mrf.mxu0
        %v612 = vadd.f32 %v243, %v611
        %v613 = vpop.f32.mrf.mxu0
        %614 = vdwg.mxu0
        %v615 = vmax.f32 %v427, 0.0
        %v616 = vmax.f32 %v432, 0.0
        %v617 = vmax.f32 %v437, 0.0
        %v618 = vmax.f32 %v442, 0.0
        %v619 = vmax.f32 %v447, 0.0
        %v620 = vmax.f32 %v452, 0.0
        %v621 = vmax.f32 %v457, 0.0
        %v622 = vmax.f32 %v462, 0.0
        %v623 = vmax.f32 %v467, 0.0
        %v624 = vmax.f32 %v472, 0.0
        %v625 = vmax.f32 %v477, 0.0
        %v626 = vmax.f32 %v482, 0.0
        %v627 = vmax.f32 %v487, 0.0
        %v628 = vmax.f32 %v492, 0.0
        %v629 = vmax.f32 %v497, 0.0
        %v630 = vmax.f32 %v502, 0.0
        %v631 = vmax.f32 %v507, 0.0
        %v632 = vmax.f32 %v512, 0.0
        %v633 = vmax.f32 %v517, 0.0
        %v634 = vmax.f32 %v522, 0.0
        %v635 = vmax.f32 %v527, 0.0
        %v636 = vmax.f32 %v532, 0.0
        %v637 = vmax.f32 %v537, 0.0
        %v638 = vmax.f32 %v542, 0.0
        %v639 = vmax.f32 %v547, 0.0
        %v640 = vmax.f32 %v552, 0.0
        %v641 = vmax.f32 %v557, 0.0
        %v642 = vmax.f32 %v562, 0.0
        %v643 = vmax.f32 %v567, 0.0
        %v644 = vmax.f32 %v572, 0.0
        %v645 = vmax.f32 %v577, 0.0
        %v646 = vmax.f32 %v582, 0.0
        %v647 = vmax.f32 %v587, 0.0
        %v648 = vmax.f32 %v592, 0.0
        %v649 = vmax.f32 %v597, 0.0
        %v650 = vmax.f32 %v602, 0.0
        %v651 = vmax.f32 %v607, 0.0
        %v652 = vmax.f32 %v612, 0.0
        %vm653 = vcmask 261120
        %654 = vst.msk [vmem:[%s172] sm:$0xff] %vm653, %v615
        %655 = vst.msk [vmem:[%s172 + $0x8] sm:$0xff] %vm653, %v616
        %656 = vst.msk [vmem:[%s172 + $0x10] sm:$0xff] %vm653, %v617
        %657 = vst.msk [vmem:[%s172 + $0x18] sm:$0xff] %vm653, %v618
        %658 = vst.msk [vmem:[%s172 + $0x20] sm:$0xff] %vm653, %v619
        %659 = vst.msk [vmem:[%s172 + $0x28] sm:$0xff] %vm653, %v620
        %660 = vst.msk [vmem:[%s172 + $0x30] sm:$0xff] %vm653, %v621
        %661 = vst.msk [vmem:[%s172 + $0x38] sm:$0xff] %vm653, %v622
        %662 = vst.msk [vmem:[%s172 + $0x40] sm:$0xff] %vm653, %v623
        %663 = vst.msk [vmem:[%s172 + $0x48] sm:$0xff] %vm653, %v624
        %664 = vst.msk [vmem:[%s172 + $0x50] sm:$0xff] %vm653, %v625
        %665 = vst.msk [vmem:[%s172 + $0x58] sm:$0xff] %vm653, %v626
        %666 = vst.msk [vmem:[%s172 + $0x60] sm:$0xff] %vm653, %v627
        %667 = vst.msk [vmem:[%s172 + $0x68] sm:$0xff] %vm653, %v628
        %668 = vst.msk [vmem:[%s172 + $0x70] sm:$0xff] %vm653, %v629
        %669 = vst.msk [vmem:[%s172 + $0x78] sm:$0xff] %vm653, %v630
        %670 = vst.msk [vmem:[%s172 + $0x80] sm:$0xff] %vm653, %v631
        %671 = vst.msk [vmem:[%s172 + $0x88] sm:$0xff] %vm653, %v632
        %672 = vst.msk [vmem:[%s172 + $0x90] sm:$0xff] %vm653, %v633
        %673 = vst.msk [vmem:[%s172 + $0x98] sm:$0xff] %vm653, %v634
        %674 = vst.msk [vmem:[%s172 + $0xa0] sm:$0xff] %vm653, %v635
        %675 = vst.msk [vmem:[%s172 + $0xa8] sm:$0xff] %vm653, %v636
        %676 = vst.msk [vmem:[%s172 + $0xb0] sm:$0xff] %vm653, %v637
        %677 = vst.msk [vmem:[%s172 + $0xb8] sm:$0xff] %vm653, %v638
        %678 = vst.msk [vmem:[%s172 + $0xc0] sm:$0xff] %vm653, %v639
        %679 = vst.msk [vmem:[%s172 + $0xc8] sm:$0xff] %vm653, %v640
        %680 = vst.msk [vmem:[%s172 + $0xd0] sm:$0xff] %vm653, %v641
        %681 = vst.msk [vmem:[%s172 + $0xd8] sm:$0xff] %vm653, %v642
        %682 = vst.msk [vmem:[%s172 + $0xe0] sm:$0xff] %vm653, %v643
        %683 = vst.msk [vmem:[%s172 + $0xe8] sm:$0xff] %vm653, %v644
        %684 = vst.msk [vmem:[%s172 + $0xf0] sm:$0xff] %vm653, %v645
        %685 = vst.msk [vmem:[%s172 + $0xf8] sm:$0xff] %vm653, %v646
        %686 = vst.msk [vmem:[%s172 + $0x100] sm:$0xff] %vm653, %v647
        %687 = vst.msk [vmem:[%s172 + $0x108] sm:$0xff] %vm653, %v648
        %688 = vst.msk [vmem:[%s172 + $0x110] sm:$0xff] %vm653, %v649
        %689 = vst.msk [vmem:[%s172 + $0x118] sm:$0xff] %vm653, %v650
        %690 = vst.msk [vmem:[%s172 + $0x120] sm:$0xff] %vm653, %v651
        %691 = vst.msk [vmem:[%s172 + $0x128] sm:$0xff] %vm653, %v652
        %s692 = sand.u32 %s90, 1
        %s693 = sand.u32 %s90, 1
        %s694 = smul.addr %s693, 304
        %s695 = scalar_lea.vmem [#allocation2], %s694
        // Predicated region
        $region33: #{dqn_forward.4} parent=31 // pred_check
          %p696 = pneg %p100
        $region34: #{dqn_forward.4} parent=31 // pred_check_branch
          %698 = sbr.rel (%p696) target = $region36
        $region35: #{dqn_forward.4} parent=31 // pred_region
          %s699 = smul.u32 38, %s14
          %s700 = ssub.s32 75, %s699
          %p701 = scmp.lt.s32.totalorder %s700, 38
          %s702 = scalar_select %p701, %s700, 38
          %s703 = smul.u32 128, %s702
          %p704 = scmp.ne.s32.totalorder 0, %s703
          %s705 = smul.addr %s699, 8
          %s706 = scalar_lea.vmem %s3, %s705
          // Predicated region
          $region37: #{dqn_forward.4} parent=35 // pred_check
            %p707 = pneg %p704
          $region38: #{dqn_forward.4} parent=35 // pred_check_branch
            %709 = sbr.rel (%p707) target = $region40
          $region39: #{dqn_forward.4} parent=35 // pred_region
            // Predicated region
            $region41: #{dqn_forward.4} parent=39 // pred_check
              _
            $region42: #{dqn_forward.4} parent=39 // pred_check_branch
              %711 = sbr.rel (0) target = $region44
            $region43: #{dqn_forward.4} parent=39 // pred_region
              // Predicated region
              $region63: #{dqn_forward.4} parent=43 // pred_check
                _
              $region64: #{dqn_forward.4} parent=43 // pred_check_branch
                %836 = sbr.rel (0) target = $region66
              $region65: #{dqn_forward.4} parent=43 // pred_region
                %s837 = sdiv.u32.pop %s702, 38
                %s838 = srem.u32.pop %s702, 38
                // While loop
                $region67: #{dqn_forward.4} parent=65 // loop_pre_header
                  _
                $region68: #{dqn_forward.4} parent=65 // loop_header
                  %s840 = sphi 0, %s842
                  %p841 = scmp.ge.s32.totalorder %s840, %s837
                  %s845 = sphi 0, %s926
                  %s846 = sphi %s695, %s929
                  %s847 = sphi %s706, %s930
                $region69: #{dqn_forward.4} parent=65 // loop_header_branch
                  %844 = sbr.rel (%p841) target = $region73
                $region70: #{dqn_forward.4} parent=65 // loop_body
                  %v848 = vld [vmem:[%s846] sm:$0xff]
                  %849 = vst [vmem:[%s847] sm:$0xff] %v848
                  %v850 = vld [vmem:[%s846 + $0x8] sm:$0xff]
                  %851 = vst [vmem:[%s847 + $0x8] sm:$0xff] %v850
                  %v852 = vld [vmem:[%s846 + $0x10] sm:$0xff]
                  %853 = vst [vmem:[%s847 + $0x10] sm:$0xff] %v852
                  %v854 = vld [vmem:[%s846 + $0x18] sm:$0xff]
                  %855 = vst [vmem:[%s847 + $0x18] sm:$0xff] %v854
                  %v856 = vld [vmem:[%s846 + $0x20] sm:$0xff]
                  %857 = vst [vmem:[%s847 + $0x20] sm:$0xff] %v856
                  %v858 = vld [vmem:[%s846 + $0x28] sm:$0xff]
                  %859 = vst [vmem:[%s847 + $0x28] sm:$0xff] %v858
                  %v860 = vld [vmem:[%s846 + $0x30] sm:$0xff]
                  %861 = vst [vmem:[%s847 + $0x30] sm:$0xff] %v860
                  %v862 = vld [vmem:[%s846 + $0x38] sm:$0xff]
                  %863 = vst [vmem:[%s847 + $0x38] sm:$0xff] %v862
                  %v864 = vld [vmem:[%s846 + $0x40] sm:$0xff]
                  %865 = vst [vmem:[%s847 + $0x40] sm:$0xff] %v864
                  %v866 = vld [vmem:[%s846 + $0x48] sm:$0xff]
                  %867 = vst [vmem:[%s847 + $0x48] sm:$0xff] %v866
                  %v868 = vld [vmem:[%s846 + $0x50] sm:$0xff]
                  %869 = vst [vmem:[%s847 + $0x50] sm:$0xff] %v868
                  %v870 = vld [vmem:[%s846 + $0x58] sm:$0xff]
                  %871 = vst [vmem:[%s847 + $0x58] sm:$0xff] %v870
                  %v872 = vld [vmem:[%s846 + $0x60] sm:$0xff]
                  %873 = vst [vmem:[%s847 + $0x60] sm:$0xff] %v872
                  %v874 = vld [vmem:[%s846 + $0x68] sm:$0xff]
                  %875 = vst [vmem:[%s847 + $0x68] sm:$0xff] %v874
                  %v876 = vld [vmem:[%s846 + $0x70] sm:$0xff]
                  %877 = vst [vmem:[%s847 + $0x70] sm:$0xff] %v876
                  %v878 = vld [vmem:[%s846 + $0x78] sm:$0xff]
                  %879 = vst [vmem:[%s847 + $0x78] sm:$0xff] %v878
                  %v880 = vld [vmem:[%s846 + $0x80] sm:$0xff]
                  %881 = vst [vmem:[%s847 + $0x80] sm:$0xff] %v880
                  %v882 = vld [vmem:[%s846 + $0x88] sm:$0xff]
                  %883 = vst [vmem:[%s847 + $0x88] sm:$0xff] %v882
                  %v884 = vld [vmem:[%s846 + $0x90] sm:$0xff]
                  %885 = vst [vmem:[%s847 + $0x90] sm:$0xff] %v884
                  %v886 = vld [vmem:[%s846 + $0x98] sm:$0xff]
                  %887 = vst [vmem:[%s847 + $0x98] sm:$0xff] %v886
                  %v888 = vld [vmem:[%s846 + $0xa0] sm:$0xff]
                  %889 = vst [vmem:[%s847 + $0xa0] sm:$0xff] %v888
                  %v890 = vld [vmem:[%s846 + $0xa8] sm:$0xff]
                  %891 = vst [vmem:[%s847 + $0xa8] sm:$0xff] %v890
                  %v892 = vld [vmem:[%s846 + $0xb0] sm:$0xff]
                  %893 = vst [vmem:[%s847 + $0xb0] sm:$0xff] %v892
                  %v894 = vld [vmem:[%s846 + $0xb8] sm:$0xff]
                  %895 = vst [vmem:[%s847 + $0xb8] sm:$0xff] %v894
                  %v896 = vld [vmem:[%s846 + $0xc0] sm:$0xff]
                  %897 = vst [vmem:[%s847 + $0xc0] sm:$0xff] %v896
                  %v898 = vld [vmem:[%s846 + $0xc8] sm:$0xff]
                  %899 = vst [vmem:[%s847 + $0xc8] sm:$0xff] %v898
                  %v900 = vld [vmem:[%s846 + $0xd0] sm:$0xff]
                  %901 = vst [vmem:[%s847 + $0xd0] sm:$0xff] %v900
                  %v902 = vld [vmem:[%s846 + $0xd8] sm:$0xff]
                  %903 = vst [vmem:[%s847 + $0xd8] sm:$0xff] %v902
                  %v904 = vld [vmem:[%s846 + $0xe0] sm:$0xff]
                  %905 = vst [vmem:[%s847 + $0xe0] sm:$0xff] %v904
                  %v906 = vld [vmem:[%s846 + $0xe8] sm:$0xff]
                  %907 = vst [vmem:[%s847 + $0xe8] sm:$0xff] %v906
                  %v908 = vld [vmem:[%s846 + $0xf0] sm:$0xff]
                  %909 = vst [vmem:[%s847 + $0xf0] sm:$0xff] %v908
                  %v910 = vld [vmem:[%s846 + $0xf8] sm:$0xff]
                  %911 = vst [vmem:[%s847 + $0xf8] sm:$0xff] %v910
                  %v912 = vld [vmem:[%s846 + $0x100] sm:$0xff]
                  %913 = vst [vmem:[%s847 + $0x100] sm:$0xff] %v912
                  %v914 = vld [vmem:[%s846 + $0x108] sm:$0xff]
                  %915 = vst [vmem:[%s847 + $0x108] sm:$0xff] %v914
                  %v916 = vld [vmem:[%s846 + $0x110] sm:$0xff]
                  %917 = vst [vmem:[%s847 + $0x110] sm:$0xff] %v916
                  %v918 = vld [vmem:[%s846 + $0x118] sm:$0xff]
                  %919 = vst [vmem:[%s847 + $0x118] sm:$0xff] %v918
                  %v920 = vld [vmem:[%s846 + $0x120] sm:$0xff]
                  %921 = vst [vmem:[%s847 + $0x120] sm:$0xff] %v920
                  %v922 = vld [vmem:[%s846 + $0x128] sm:$0xff]
                  %923 = vst [vmem:[%s847 + $0x128] sm:$0xff] %v922
                  %s924 = sadd.s32 1, %s845
                  %p925 = scmp.ge.s32.totalorder %s924, %s837
                  %s926 = scalar_select %p925, 0, %s924
                  %s927 = smul.u32 %s926, 304
                  %s928 = smul.u32 %s926, 304
                  %s929 = scalar_lea.vmem %s695, %s927 [#allocation2]
                  %s930 = scalar_lea.vmem %s706, %s928
                $region71: #{dqn_forward.4} parent=65 // loop_footer
                  %s842 = sadd.s32 %s840, 1
                $region72: #{dqn_forward.4} parent=65 // loop_footer_branch
                  %839 = sbr.rel target = $region68
                $region73: #{dqn_forward.4} parent=65 // loop_exit
                  _
                %s931 = sdiv.u32.pop %s702, 38
                %s932 = srem.u32.pop %s702, 38
                %s933 = smul.u32 %s931, 38
                %s934 = smul.u32 8, %s933
                %s935 = scalar_lea.vmem %s695, %s934 [#allocation2]
                %s936 = smul.u32 8, %s933
                %s937 = scalar_lea.vmem %s706, %s936
                // While loop
                $region74: #{dqn_forward.4} parent=65 // loop_pre_header
                  _
                $region75: #{dqn_forward.4} parent=65 // loop_header
                  %s939 = sphi 0, %s941
                  %p940 = scmp.ge.s32.totalorder %s939, %s932
                  %s944 = sphi 0, %s951
                  %s945 = sphi %s935, %s954
                  %s946 = sphi %s937, %s955
                $region76: #{dqn_forward.4} parent=65 // loop_header_branch
                  %943 = sbr.rel (%p940) target = $region80
                $region77: #{dqn_forward.4} parent=65 // loop_body
                  %v947 = vld [vmem:[%s945] sm:$0xff]
                  %948 = vst [vmem:[%s946] sm:$0xff] %v947
                  %s949 = sadd.s32 1, %s944
                  %p950 = scmp.ge.s32.totalorder %s949, %s932
                  %s951 = scalar_select %p950, 0, %s949
                  %s952 = smul.u32 %s951, 8
                  %s953 = smul.u32 %s951, 8
                  %s954 = scalar_lea.vmem %s935, %s952 [#allocation2]
                  %s955 = scalar_lea.vmem %s937, %s953
                $region78: #{dqn_forward.4} parent=65 // loop_footer
                  %s941 = sadd.s32 %s939, 1
                $region79: #{dqn_forward.4} parent=65 // loop_footer_branch
                  %938 = sbr.rel target = $region75
                $region80: #{dqn_forward.4} parent=65 // loop_exit
                  _
              $region66: #{dqn_forward.4} parent=43 // pred_fallthru
                _
              // Predicated region
              $region81: #{dqn_forward.4} parent=43 // pred_check
                _
              $region82: #{dqn_forward.4} parent=43 // pred_check_branch
                %957 = sbr.rel target = $region84
              $region83: #{dqn_forward.4} parent=43 // pred_region
                _
              $region84: #{dqn_forward.4} parent=43 // pred_fallthru
                _
            $region44: #{dqn_forward.4} parent=39 // pred_fallthru
              _
            // Predicated region
            $region45: #{dqn_forward.4} parent=39 // pred_check
              _
            $region46: #{dqn_forward.4} parent=39 // pred_check_branch
              %713 = sbr.rel target = $region48
            $region47: #{dqn_forward.4} parent=39 // pred_region
              %s715 = ssub.s32 256, 1
              %s716 = sdiv.u32.pop %s702, 38
              %s717 = srem.u32.pop %s702, 38
              // While loop
              $region49: #{dqn_forward.4} parent=47 // loop_pre_header
                _
              $region50: #{dqn_forward.4} parent=47 // loop_header
                %s719 = sphi 0, %s721
                %p720 = scmp.ge.s32.totalorder %s719, %s716
                %s724 = sphi 0, %s805
                %s725 = sphi %s695, %s808
                %s726 = sphi %s706, %s809
              $region51: #{dqn_forward.4} parent=47 // loop_header_branch
                %723 = sbr.rel (%p720) target = $region55
              $region52: #{dqn_forward.4} parent=47 // loop_body
                %v727 = vld [vmem:[%s725] sm:%s715]
                %728 = vst [vmem:[%s726] sm:%s715] %v727
                %v729 = vld [vmem:[%s725 + $0x8] sm:%s715]
                %730 = vst [vmem:[%s726 + $0x8] sm:%s715] %v729
                %v731 = vld [vmem:[%s725 + $0x10] sm:%s715]
                %732 = vst [vmem:[%s726 + $0x10] sm:%s715] %v731
                %v733 = vld [vmem:[%s725 + $0x18] sm:%s715]
                %734 = vst [vmem:[%s726 + $0x18] sm:%s715] %v733
                %v735 = vld [vmem:[%s725 + $0x20] sm:%s715]
                %736 = vst [vmem:[%s726 + $0x20] sm:%s715] %v735
                %v737 = vld [vmem:[%s725 + $0x28] sm:%s715]
                %738 = vst [vmem:[%s726 + $0x28] sm:%s715] %v737
                %v739 = vld [vmem:[%s725 + $0x30] sm:%s715]
                %740 = vst [vmem:[%s726 + $0x30] sm:%s715] %v739
                %v741 = vld [vmem:[%s725 + $0x38] sm:%s715]
                %742 = vst [vmem:[%s726 + $0x38] sm:%s715] %v741
                %v743 = vld [vmem:[%s725 + $0x40] sm:%s715]
                %744 = vst [vmem:[%s726 + $0x40] sm:%s715] %v743
                %v745 = vld [vmem:[%s725 + $0x48] sm:%s715]
                %746 = vst [vmem:[%s726 + $0x48] sm:%s715] %v745
                %v747 = vld [vmem:[%s725 + $0x50] sm:%s715]
                %748 = vst [vmem:[%s726 + $0x50] sm:%s715] %v747
                %v749 = vld [vmem:[%s725 + $0x58] sm:%s715]
                %750 = vst [vmem:[%s726 + $0x58] sm:%s715] %v749
                %v751 = vld [vmem:[%s725 + $0x60] sm:%s715]
                %752 = vst [vmem:[%s726 + $0x60] sm:%s715] %v751
                %v753 = vld [vmem:[%s725 + $0x68] sm:%s715]
                %754 = vst [vmem:[%s726 + $0x68] sm:%s715] %v753
                %v755 = vld [vmem:[%s725 + $0x70] sm:%s715]
                %756 = vst [vmem:[%s726 + $0x70] sm:%s715] %v755
                %v757 = vld [vmem:[%s725 + $0x78] sm:%s715]
                %758 = vst [vmem:[%s726 + $0x78] sm:%s715] %v757
                %v759 = vld [vmem:[%s725 + $0x80] sm:%s715]
                %760 = vst [vmem:[%s726 + $0x80] sm:%s715] %v759
                %v761 = vld [vmem:[%s725 + $0x88] sm:%s715]
                %762 = vst [vmem:[%s726 + $0x88] sm:%s715] %v761
                %v763 = vld [vmem:[%s725 + $0x90] sm:%s715]
                %764 = vst [vmem:[%s726 + $0x90] sm:%s715] %v763
                %v765 = vld [vmem:[%s725 + $0x98] sm:%s715]
                %766 = vst [vmem:[%s726 + $0x98] sm:%s715] %v765
                %v767 = vld [vmem:[%s725 + $0xa0] sm:%s715]
                %768 = vst [vmem:[%s726 + $0xa0] sm:%s715] %v767
                %v769 = vld [vmem:[%s725 + $0xa8] sm:%s715]
                %770 = vst [vmem:[%s726 + $0xa8] sm:%s715] %v769
                %v771 = vld [vmem:[%s725 + $0xb0] sm:%s715]
                %772 = vst [vmem:[%s726 + $0xb0] sm:%s715] %v771
                %v773 = vld [vmem:[%s725 + $0xb8] sm:%s715]
                %774 = vst [vmem:[%s726 + $0xb8] sm:%s715] %v773
                %v775 = vld [vmem:[%s725 + $0xc0] sm:%s715]
                %776 = vst [vmem:[%s726 + $0xc0] sm:%s715] %v775
                %v777 = vld [vmem:[%s725 + $0xc8] sm:%s715]
                %778 = vst [vmem:[%s726 + $0xc8] sm:%s715] %v777
                %v779 = vld [vmem:[%s725 + $0xd0] sm:%s715]
                %780 = vst [vmem:[%s726 + $0xd0] sm:%s715] %v779
                %v781 = vld [vmem:[%s725 + $0xd8] sm:%s715]
                %782 = vst [vmem:[%s726 + $0xd8] sm:%s715] %v781
                %v783 = vld [vmem:[%s725 + $0xe0] sm:%s715]
                %784 = vst [vmem:[%s726 + $0xe0] sm:%s715] %v783
                %v785 = vld [vmem:[%s725 + $0xe8] sm:%s715]
                %786 = vst [vmem:[%s726 + $0xe8] sm:%s715] %v785
                %v787 = vld [vmem:[%s725 + $0xf0] sm:%s715]
                %788 = vst [vmem:[%s726 + $0xf0] sm:%s715] %v787
                %v789 = vld [vmem:[%s725 + $0xf8] sm:%s715]
                %790 = vst [vmem:[%s726 + $0xf8] sm:%s715] %v789
                %v791 = vld [vmem:[%s725 + $0x100] sm:%s715]
                %792 = vst [vmem:[%s726 + $0x100] sm:%s715] %v791
                %v793 = vld [vmem:[%s725 + $0x108] sm:%s715]
                %794 = vst [vmem:[%s726 + $0x108] sm:%s715] %v793
                %v795 = vld [vmem:[%s725 + $0x110] sm:%s715]
                %796 = vst [vmem:[%s726 + $0x110] sm:%s715] %v795
                %v797 = vld [vmem:[%s725 + $0x118] sm:%s715]
                %798 = vst [vmem:[%s726 + $0x118] sm:%s715] %v797
                %v799 = vld [vmem:[%s725 + $0x120] sm:%s715]
                %800 = vst [vmem:[%s726 + $0x120] sm:%s715] %v799
                %v801 = vld [vmem:[%s725 + $0x128] sm:%s715]
                %802 = vst [vmem:[%s726 + $0x128] sm:%s715] %v801
                %s803 = sadd.s32 1, %s724
                %p804 = scmp.ge.s32.totalorder %s803, %s716
                %s805 = scalar_select %p804, 0, %s803
                %s806 = smul.u32 %s805, 304
                %s807 = smul.u32 %s805, 304
                %s808 = scalar_lea.vmem %s695, %s806 [#allocation2]
                %s809 = scalar_lea.vmem %s706, %s807
              $region53: #{dqn_forward.4} parent=47 // loop_footer
                %s721 = sadd.s32 %s719, 1
              $region54: #{dqn_forward.4} parent=47 // loop_footer_branch
                %718 = sbr.rel target = $region50
              $region55: #{dqn_forward.4} parent=47 // loop_exit
                _
              %s810 = sdiv.u32.pop %s702, 38
              %s811 = srem.u32.pop %s702, 38
              %s812 = smul.u32 %s810, 38
              %s813 = smul.u32 8, %s812
              %s814 = scalar_lea.vmem %s695, %s813 [#allocation2]
              %s815 = smul.u32 8, %s812
              %s816 = scalar_lea.vmem %s706, %s815
              // While loop
              $region56: #{dqn_forward.4} parent=47 // loop_pre_header
                _
              $region57: #{dqn_forward.4} parent=47 // loop_header
                %s818 = sphi 0, %s820
                %p819 = scmp.ge.s32.totalorder %s818, %s811
                %s823 = sphi 0, %s830
                %s824 = sphi %s814, %s833
                %s825 = sphi %s816, %s834
              $region58: #{dqn_forward.4} parent=47 // loop_header_branch
                %822 = sbr.rel (%p819) target = $region62
              $region59: #{dqn_forward.4} parent=47 // loop_body
                %v826 = vld [vmem:[%s824] sm:%s715]
                %827 = vst [vmem:[%s825] sm:%s715] %v826
                %s828 = sadd.s32 1, %s823
                %p829 = scmp.ge.s32.totalorder %s828, %s811
                %s830 = scalar_select %p829, 0, %s828
                %s831 = smul.u32 %s830, 8
                %s832 = smul.u32 %s830, 8
                %s833 = scalar_lea.vmem %s814, %s831 [#allocation2]
                %s834 = scalar_lea.vmem %s816, %s832
              $region60: #{dqn_forward.4} parent=47 // loop_footer
                %s820 = sadd.s32 %s818, 1
              $region61: #{dqn_forward.4} parent=47 // loop_footer_branch
                %817 = sbr.rel target = $region57
              $region62: #{dqn_forward.4} parent=47 // loop_exit
                _
            $region48: #{dqn_forward.4} parent=39 // pred_fallthru
              _
          $region40: #{dqn_forward.4} parent=35 // pred_fallthru
            _
          %958 = vnop
        $region36: #{dqn_forward.4} parent=31 // pred_fallthru
          _
      $region32: #{dqn_forward.4} parent=5 // pred_fallthru
        _
      %p959 = scmp.le.s32.totalorder 2, %s9
      // Predicated region
      $region85: #{dqn_forward.4} parent=5 // pred_check
        %p960 = pneg %p959
      $region86: #{dqn_forward.4} parent=5 // pred_check_branch
        %962 = sbr.rel (%p960) target = $region88
      $region87: #{dqn_forward.4} parent=5 // pred_region
        %s963 = ssub.s32 %s9, 2
        // Predicated region
        $region89: #{dqn_forward.4} parent=87 // pred_check
          %p964 = pneg %p106
        $region90: #{dqn_forward.4} parent=87 // pred_check_branch
          %966 = sbr.rel (%p964) target = $region92
        $region91: #{dqn_forward.4} parent=87 // pred_region
          %s967 = sand.u32 %s91, 1
          %s968 = sand.u32 %s91, 1
          %s969 = smul.addr %s968, 304
          %s970 = scalar_lea.vmem [#allocation2], %s969
        $region92: #{dqn_forward.4} parent=87 // pred_fallthru
          _
      $region88: #{dqn_forward.4} parent=5 // pred_fallthru
        _
    $region6: #{dqn_forward.4} parent=1 // loop_footer
      %s13 = sadd.s32 1, %s9
    $region7: #{dqn_forward.4} parent=1 // loop_footer_branch
      %8 = sbr.rel target = $region3
    $region8: #{dqn_forward.4} parent=1 // loop_exit
      _

// kernel: dqn_forward.5
$region0: #{dqn_forward.5}
  #allocation0 [shape = 'u32[]', space=smem, size = 0x4, offset = 0x4, fixed_abs, tag = 'smem constant byte address 0x4 - core index']
  #allocation1 [shape = 'u32[144,128]{1,0:T(1,128)}', space=vmem, size = 0x12000, scoped, tag = 'internal scratch']
  %s0 = inlined_call_operand.vmem [shape: f32[600,288], index: 0, kind: input, shape index: {}]
  %s1 = inlined_call_operand.vmem [shape: f32[288,64], index: 1, kind: input, shape index: {}]
  %s2 = inlined_call_operand.vmem [shape: f32[1,64], index: 2, kind: input, shape index: {}]
  %s3 = inlined_call_operand.vmem [shape: f32[600,64], index: 3, kind: output, shape index: {}]
  %s4 = sld [smem:[#allocation0]]
  $region93: #{dqn_forward.5} parent=0
    _
  %s6 = ssub.s32 1, %s4
  %s7 = scalar_select 0, %s6, %s4
  $region1: #{dqn_forward.5} parent=0
    #allocation2 [shape = 'u8[311296]{0}', space=vmem, size = 0x4c000, scoped, tag = 'output window, operand 0']
    loop: start=0, step=1, limit=4
    $region2: #{dqn_forward.5} parent=1 // loop_pre_header
      _
    $region3: #{dqn_forward.5} parent=1 // loop_header
      %s9 = sphi 0, %s13
      %p10 = scmp.ge.s32.totalorder %s9, 4
      %s19 = sphi 0, %s21
      %s22 = sphi 0, %s19
      %s23 = sphi 0, %s22
      %s39 = sphi 0, %s23
      %s43 = sphi 0, %s43
      %s45 = sphi 0, %s43
      %s46 = sphi 0, %s45
      %s60 = sphi 0, %s46
      %s64 = sphi 0, %s64
      %s66 = sphi 0, %s64
      %s67 = sphi 0, %s66
      %s81 = sphi 0, %s67
      %s87 = sphi 0, %s89
      %s90 = sphi 0, %s87
      %s91 = sphi 0, %s90
      %s107 = sphi 0, %s91
    $region4: #{dqn_forward.5} parent=1 // loop_header_branch
      %12 = sbr.rel (%p10) target = $region8
    $region5: #{dqn_forward.5} parent=1 // loop_body
      %s14 = ssub.s32 %s9, 1
      %s15 = ssub.s32 %s9, 2
      %s16 = sadd.s32 %s9, 1
      %s17 = ssub.s32 %s9, %s16
      %p18 = scmp.eq.s32.totalorder %s17, 0
      %s20 = sadd.s32 %s19, 1
      %s21 = scalar_select %p18, %s19, %s20
      %p24 = pneg %p18
      %p25 = scmp.eq.s32.totalorder %s9, 1
      %p26 = por %p24, %p25
      %p27 = scmp.ne.s32.totalorder %s19, %s22
      %p28 = scmp.eq.s32.totalorder %s9, 0
      %p29 = por %p27, %p28
      %p30 = scmp.ne.s32.totalorder %s19, %s22
      %p31 = scmp.eq.s32.totalorder %s14, 1
      %p32 = por %p30, %p31
      %p33 = scmp.ne.s32.totalorder %s22, %s23
      %p34 = scmp.eq.s32.totalorder %s14, 0
      %p35 = por %p33, %p34
      %p36 = scmp.ne.s32.totalorder %s22, %s23
      %p37 = scmp.eq.s32.totalorder %s15, 1
      %p38 = por %p36, %p37
      %p40 = scmp.ne.s32.totalorder %s23, %s39
      %p41 = scmp.eq.s32.totalorder %s15, 0
      %p42 = por %p40, %p41
      %s44 = sadd.s32 %s43, 1
      %p47 = scmp.eq.s32.totalorder %s9, 1
      %p48 = scmp.ne.s32.totalorder %s43, %s45
      %p49 = scmp.eq.s32.totalorder %s9, 0
      %p50 = por %p48, %p49
      %p51 = scmp.ne.s32.totalorder %s43, %s45
      %p52 = scmp.eq.s32.totalorder %s14, 1
      %p53 = por %p51, %p52
      %p54 = scmp.ne.s32.totalorder %s45, %s46
      %p55 = scmp.eq.s32.totalorder %s14, 0
      %p56 = por %p54, %p55
      %p57 = scmp.ne.s32.totalorder %s45, %s46
      %p58 = scmp.eq.s32.totalorder %s15, 1
      %p59 = por %p57, %p58
      %p61 = scmp.ne.s32.totalorder %s46, %s60
      %p62 = scmp.eq.s32.totalorder %s15, 0
      %p63 = por %p61, %p62
      %s65 = sadd.s32 %s64, 1
      %p68 = scmp.eq.s32.totalorder %s9, 1
      %p69 = scmp.ne.s32.totalorder %s64, %s66
      %p70 = scmp.eq.s32.totalorder %s9, 0
      %p71 = por %p69, %p70
      %p72 = scmp.ne.s32.totalorder %s64, %s66
      %p73 = scmp.eq.s32.totalorder %s14, 1
      %p74 = por %p72, %p73
      %p75 = scmp.ne.s32.totalorder %s66, %s67
      %p76 = scmp.eq.s32.totalorder %s14, 0
      %p77 = por %p75, %p76
      %p78 = scmp.ne.s32.totalorder %s66, %s67
      %p79 = scmp.eq.s32.totalorder %s15, 1
      %p80 = por %p78, %p79
      %p82 = scmp.ne.s32.totalorder %s67, %s81
      %p83 = scmp.eq.s32.totalorder %s15, 0
      %p84 = por %p82, %p83
      %s85 = ssub.s32 %s9, %s16
      %p86 = scmp.eq.s32.totalorder %s85, 0
      %s88 = sadd.s32 %s87, 1
      %s89 = scalar_select %p86, %s87, %s88
      %p92 = pneg %p86
      %p93 = scmp.eq.s32.totalorder %s9, 1
      %p94 = por %p92, %p93
      %p95 = scmp.ne.s32.totalorder %s87, %s90
      %p96 = scmp.eq.s32.totalorder %s9, 0
      %p97 = por %p95, %p96
      %p98 = scmp.ne.s32.totalorder %s87, %s90
      %p99 = scmp.eq.s32.totalorder %s14, 1
      %p100 = por %p98, %p99
      %p101 = scmp.ne.s32.totalorder %s90, %s91
      %p102 = scmp.eq.s32.totalorder %s14, 0
      %p103 = por %p101, %p102
      %p104 = scmp.ne.s32.totalorder %s90, %s91
      %p105 = scmp.eq.s32.totalorder %s15, 1
      %p106 = por %p104, %p105
      %p108 = scmp.ne.s32.totalorder %s91, %s107
      %p109 = scmp.eq.s32.totalorder %s15, 0
      %p110 = por %p108, %p109
      %p111 = scmp.le.s32.totalorder 1, %s9
      %p112 = scmp.lt.s32.totalorder %s9, 3
      %p113 = pnand %p111, %p112
      %p114 = pneg %p113
      // Predicated region
      $region9: #{dqn_forward.5} parent=5 // pred_check
        _
      $region10: #{dqn_forward.5} parent=5 // pred_check_branch
        %116 = sbr.rel (%p113) target = $region12
      $region11: #{dqn_forward.5} parent=5 // pred_region
        %s117 = ssub.s32 %s9, 1
        // Predicated region
        $region13: #{dqn_forward.5} parent=11 // pred_check
          %p118 = pneg %p56
        $region14: #{dqn_forward.5} parent=11 // pred_check_branch
          %120 = sbr.rel (%p118) target = $region16
        $region15: #{dqn_forward.5} parent=11 // pred_region
          _
        $region16: #{dqn_forward.5} parent=11 // pred_fallthru
          _
        // Predicated region
        $region17: #{dqn_forward.5} parent=11 // pred_check
          %p121 = pneg %p77
        $region18: #{dqn_forward.5} parent=11 // pred_check_branch
          %123 = sbr.rel (%p121) target = $region20
        $region19: #{dqn_forward.5} parent=11 // pred_region
          _
        $region20: #{dqn_forward.5} parent=11 // pred_fallthru
          _
      $region12: #{dqn_forward.5} parent=5 // pred_fallthru
        _
      %p124 = scmp.lt.s32.totalorder %s9, 2
      // Predicated region
      $region21: #{dqn_forward.5} parent=5 // pred_check
        %p125 = pneg %p124
      $region22: #{dqn_forward.5} parent=5 // pred_check_branch
        %127 = sbr.rel (%p125) target = $region24
      $region23: #{dqn_forward.5} parent=5 // pred_region
        // Predicated region
        $region25: #{dqn_forward.5} parent=23 // pred_check
          %p128 = pneg %p29
        $region26: #{dqn_forward.5} parent=23 // pred_check_branch
          %130 = sbr.rel (%p128) target = $region28
        $region27: #{dqn_forward.5} parent=23 // pred_region
          %s131 = smul.u32 38, %s9
          %s132 = ssub.s32 75, %s131
          %p133 = scmp.lt.s32.totalorder %s132, 38
          %s134 = scalar_select %p133, %s132, 38
          %s135 = smul.u32 128, %s134
          %s136 = smul.u32 %s135, 3
          %p137 = scmp.lt.s32.totalorder %s131, 74
          %s138 = scalar_select %p137, %s131, 74
          %s139 = smul.addr %s138, 3
          %s140 = smul.addr %s139, 8
          %s141 = scalar_lea.vmem %s0, %s140
          %s142 = smul.u32 38, %s9
          %s143 = ssub.s32 75, %s142
          %p144 = scmp.lt.s32.totalorder %s143, 38
          %s145 = scalar_select %p144, %s143, 38
          %s146 = smul.u32 128, %s145
          %s147 = smul.u32 %s146, 3
        $region28: #{dqn_forward.5} parent=23 // pred_fallthru
          _
      $region24: #{dqn_forward.5} parent=5 // pred_fallthru
        _
      %p148 = scmp.le.s32.totalorder 1, %s9
      %p149 = scmp.lt.s32.totalorder %s9, 3
      %p150 = pnand %p148, %p149
      %p151 = pneg %p150
      // Predicated region
      $region29: #{dqn_forward.5} parent=5 // pred_check
        _
      $region30: #{dqn_forward.5} parent=5 // pred_check_branch
        %153 = sbr.rel (%p150) target = $region32
      $region31: #{dqn_forward.5} parent=5 // pred_region
        %s154 = ssub.s32 %s9, 1
        %s155 = smul.u32 38, %s14
        %s156 = ssub.s32 75, %s155
        %p157 = scmp.lt.s32.totalorder %s156, 38
        %s158 = scalar_select %p157, %s156, 38
        %s159 = smul.u32 128, %s158
        %s160 = smul.u32 %s159, 3
        %p161 = scmp.lt.s32.totalorder %s155, 74
        %s162 = scalar_select %p161, %s155, 74
        %s163 = smul.addr %s162, 3
        %s164 = smul.addr %s163, 8
        %s165 = scalar_lea.vmem %s0, %s164
        %p166 = pneg %p35
        %p167 = pneg %p32
        %p168 = pneg %p56
        %p169 = pneg %p53
        %p170 = pneg %p77
        %p171 = pneg %p74
        %p172 = pneg %p103
        %p173 = pneg %p100
        %s174 = sand.u32 %s90, 1
        %s175 = sand.u32 %s90, 1
        %s176 = smul.addr %s175, 304
        %s177 = scalar_lea.vmem [#allocation2], %s176
        %s178 = smul.u32 38, %s14
        %s179 = ssub.s32 75, %s178
        %p180 = scmp.lt.s32.totalorder %s179, 38
        %s181 = scalar_select %p180, %s179, 38
        %s182 = smul.u32 128, %s181
        %s183 = smul.u32 %s182, 3
        %p184 = scmp.lt.s32.totalorder %s178, 74
        %s185 = scalar_select %p184, %s178, 74
        %s186 = smul.addr %s185, 3
        %s187 = smul.addr %s186, 8
        %s188 = scalar_lea.vmem %s0, %s187
        %s189 = smul.u32 38, %s14
        %s190 = ssub.s32 75, %s189
        %p191 = scmp.lt.s32.totalorder %s190, 38
        %s192 = scalar_select %p191, %s190, 38
        %s193 = smul.u32 128, %s192
        %s194 = smul.u32 %s193, 3
        %s195 = smul.u32 38, %s14
        %s196 = ssub.s32 75, %s195
        %p197 = scmp.lt.s32.totalorder %s196, 38
        %s198 = scalar_select %p197, %s196, 38
        %s199 = smul.u32 128, %s198
        %v200 = vld [vmem:[%s188] sm:$0xff]
        %v201 = vld [vmem:[%s188 + $0x8] sm:$0xff]
        %v202 = vld [vmem:[%s188 + $0x10] sm:$0xff]
        %v203 = vld [vmem:[%s188 + $0x18] sm:$0xff]
        %v204 = vld [vmem:[%s188 + $0x20] sm:$0xff]
        %v205 = vld [vmem:[%s188 + $0x28] sm:$0xff]
        %v206 = vld [vmem:[%s188 + $0x30] sm:$0xff]
        %v207 = vld [vmem:[%s188 + $0x38] sm:$0xff]
        %v208 = vld [vmem:[%s188 + $0x40] sm:$0xff]
        %v209 = vld [vmem:[%s188 + $0x48] sm:$0xff]
        %v210 = vld [vmem:[%s188 + $0x50] sm:$0xff]
        %v211 = vld [vmem:[%s188 + $0x58] sm:$0xff]
        %v212 = vld [vmem:[%s188 + $0x60] sm:$0xff]
        %v213 = vld [vmem:[%s188 + $0x68] sm:$0xff]
        %v214 = vld [vmem:[%s188 + $0x70] sm:$0xff]
        %v215 = vld [vmem:[%s188 + $0x78] sm:$0xff]
        %v216 = vld [vmem:[%s188 + $0x80] sm:$0xff]
        %v217 = vld [vmem:[%s188 + $0x88] sm:$0xff]
        %v218 = vld [vmem:[%s188 + $0x90] sm:$0xff]
        %v219 = vld [vmem:[%s188 + $0x98] sm:$0xff]
        %v220 = vld [vmem:[%s188 + $0xa0] sm:$0xff]
        %v221 = vld [vmem:[%s188 + $0xa8] sm:$0xff]
        %v222 = vld [vmem:[%s188 + $0xb0] sm:$0xff]
        %v223 = vld [vmem:[%s188 + $0xb8] sm:$0xff]
        %v224 = vld [vmem:[%s188 + $0xc0] sm:$0xff]
        %v225 = vld [vmem:[%s188 + $0xc8] sm:$0xff]
        %v226 = vld [vmem:[%s188 + $0xd0] sm:$0xff]
        %v227 = vld [vmem:[%s188 + $0xd8] sm:$0xff]
        %v228 = vld [vmem:[%s188 + $0xe0] sm:$0xff]
        %v229 = vld [vmem:[%s188 + $0xe8] sm:$0xff]
        %v230 = vld [vmem:[%s188 + $0xf0] sm:$0xff]
        %v231 = vld [vmem:[%s188 + $0xf8] sm:$0xff]
        %v232 = vld [vmem:[%s188 + $0x100] sm:$0xff]
        %v233 = vld [vmem:[%s188 + $0x108] sm:$0xff]
        %v234 = vld [vmem:[%s188 + $0x110] sm:$0xff]
        %v235 = vld [vmem:[%s188 + $0x118] sm:$0xff]
        %v236 = vld [vmem:[%s188 + $0x120] sm:$0xff]
        %v237 = vld [vmem:[%s188 + $0x128] sm:$0xff]
        %v238 = vld [vmem:[%s188 + $0x130] sm:$0xff]
        %v239 = vld [vmem:[%s188 + $0x138] sm:$0xff]
        %v240 = vld [vmem:[%s188 + $0x140] sm:$0xff]
        %v241 = vld [vmem:[%s188 + $0x148] sm:$0xff]
        %v242 = vld [vmem:[%s188 + $0x150] sm:$0xff]
        %v243 = vld [vmem:[%s188 + $0x158] sm:$0xff]
        %v244 = vld [vmem:[%s188 + $0x160] sm:$0xff]
        %v245 = vld [vmem:[%s188 + $0x168] sm:$0xff]
        %v246 = vld [vmem:[%s188 + $0x170] sm:$0xff]
        %v247 = vld [vmem:[%s188 + $0x178] sm:$0xff]
        %v248 = vld [vmem:[%s188 + $0x180] sm:$0xff]
        %v249 = vld [vmem:[%s188 + $0x188] sm:$0xff]
        %v250 = vld [vmem:[%s188 + $0x190] sm:$0xff]
        %v251 = vld [vmem:[%s188 + $0x198] sm:$0xff]
        %v252 = vld [vmem:[%s188 + $0x1a0] sm:$0xff]
        %v253 = vld [vmem:[%s188 + $0x1a8] sm:$0xff]
        %v254 = vld [vmem:[%s188 + $0x1b0] sm:$0xff]
        %v255 = vld [vmem:[%s188 + $0x1b8] sm:$0xff]
        %v256 = vld [vmem:[%s188 + $0x1c0] sm:$0xff]
        %v257 = vld [vmem:[%s188 + $0x1c8] sm:$0xff]
        %v258 = vld [vmem:[%s188 + $0x1d0] sm:$0xff]
        %v259 = vld [vmem:[%s188 + $0x1d8] sm:$0xff]
        %v260 = vld [vmem:[%s188 + $0x1e0] sm:$0xff]
        %v261 = vld [vmem:[%s188 + $0x1e8] sm:$0xff]
        %v262 = vld [vmem:[%s188 + $0x1f0] sm:$0xff]
        %v263 = vld [vmem:[%s188 + $0x1f8] sm:$0xff]
        %v264 = vld [vmem:[%s188 + $0x200] sm:$0xff]
        %v265 = vld [vmem:[%s188 + $0x208] sm:$0xff]
        %v266 = vld [vmem:[%s188 + $0x210] sm:$0xff]
        %v267 = vld [vmem:[%s188 + $0x218] sm:$0xff]
        %v268 = vld [vmem:[%s188 + $0x220] sm:$0xff]
        %v269 = vld [vmem:[%s188 + $0x228] sm:$0xff]
        %v270 = vld [vmem:[%s188 + $0x230] sm:$0xff]
        %v271 = vld [vmem:[%s188 + $0x238] sm:$0xff]
        %v272 = vld [vmem:[%s188 + $0x240] sm:$0xff]
        %v273 = vld [vmem:[%s188 + $0x248] sm:$0xff]
        %v274 = vld [vmem:[%s188 + $0x250] sm:$0xff]
        %v275 = vld [vmem:[%s188 + $0x258] sm:$0xff]
        %v276 = vld [vmem:[%s188 + $0x260] sm:$0xff]
        %v277 = vld [vmem:[%s188 + $0x268] sm:$0xff]
        %v278 = vld [vmem:[%s188 + $0x270] sm:$0xff]
        %v279 = vld [vmem:[%s188 + $0x278] sm:$0xff]
        %v280 = vld [vmem:[%s188 + $0x280] sm:$0xff]
        %v281 = vld [vmem:[%s188 + $0x288] sm:$0xff]
        %v282 = vld [vmem:[%s188 + $0x290] sm:$0xff]
        %v283 = vld [vmem:[%s188 + $0x298] sm:$0xff]
        %v284 = vld [vmem:[%s188 + $0x2a0] sm:$0xff]
        %v285 = vld [vmem:[%s188 + $0x2a8] sm:$0xff]
        %v286 = vld [vmem:[%s188 + $0x2b0] sm:$0xff]
        %v287 = vld [vmem:[%s188 + $0x2b8] sm:$0xff]
        %v288 = vld [vmem:[%s188 + $0x2c0] sm:$0xff]
        %v289 = vld [vmem:[%s188 + $0x2c8] sm:$0xff]
        %v290 = vld [vmem:[%s188 + $0x2d0] sm:$0xff]
        %v291 = vld [vmem:[%s188 + $0x2d8] sm:$0xff]
        %v292 = vld [vmem:[%s188 + $0x2e0] sm:$0xff]
        %v293 = vld [vmem:[%s188 + $0x2e8] sm:$0xff]
        %v294 = vld [vmem:[%s188 + $0x2f0] sm:$0xff]
        %v295 = vld [vmem:[%s188 + $0x2f8] sm:$0xff]
        %v296 = vld [vmem:[%s188 + $0x300] sm:$0xff]
        %v297 = vld [vmem:[%s188 + $0x308] sm:$0xff]
        %v298 = vld [vmem:[%s188 + $0x310] sm:$0xff]
        %v299 = vld [vmem:[%s188 + $0x318] sm:$0xff]
        %v300 = vld [vmem:[%s188 + $0x320] sm:$0xff]
        %v301 = vld [vmem:[%s188 + $0x328] sm:$0xff]
        %v302 = vld [vmem:[%s188 + $0x330] sm:$0xff]
        %v303 = vld [vmem:[%s188 + $0x338] sm:$0xff]
        %v304 = vld [vmem:[%s188 + $0x340] sm:$0xff]
        %v305 = vld [vmem:[%s188 + $0x348] sm:$0xff]
        %v306 = vld [vmem:[%s188 + $0x350] sm:$0xff]
        %v307 = vld [vmem:[%s188 + $0x358] sm:$0xff]
        %v308 = vld [vmem:[%s188 + $0x360] sm:$0xff]
        %v309 = vld [vmem:[%s188 + $0x368] sm:$0xff]
        %v310 = vld [vmem:[%s188 + $0x370] sm:$0xff]
        %v311 = vld [vmem:[%s188 + $0x378] sm:$0xff]
        %v312 = vld [vmem:[%s188 + $0x380] sm:$0xff]
        %v313 = vld [vmem:[%s188 + $0x388] sm:$0xff]
        %v314 = vld [vmem:[%s1] sm:$0xff]
        %v315 = vld [vmem:[%s1 + $0x8] sm:$0xff]
        %v316 = vld [vmem:[%s1 + $0x10] sm:$0xff]
        %v317 = vld [vmem:[%s1 + $0x18] sm:$0xff]
        %v318 = vld [vmem:[%s1 + $0x20] sm:$0xff]
        %v319 = vld [vmem:[%s1 + $0x28] sm:$0xff]
        %v320 = vld [vmem:[%s1 + $0x30] sm:$0xff]
        %v321 = vld [vmem:[%s1 + $0x38] sm:$0xff]
        %v322 = vld [vmem:[%s1 + $0x40] sm:$0xff]
        %v323 = vld [vmem:[%s1 + $0x48] sm:$0xff]
        %v324 = vld [vmem:[%s1 + $0x50] sm:$0xff]
        %v325 = vld [vmem:[%s1 + $0x58] sm:$0xff]
        %v326 = vld [vmem:[%s1 + $0x60] sm:$0xff]
        %v327 = vld [vmem:[%s1 + $0x68] sm:$0xff]
        %v328 = vld [vmem:[%s1 + $0x70] sm:$0xff]
        %v329 = vld [vmem:[%s1 + $0x78] sm:$0xff]
        %v330 = vld [vmem:[%s1 + $0x80] sm:$0xff]
        %v331 = vld [vmem:[%s1 + $0x88] sm:$0xff]
        %v332 = vld [vmem:[%s1 + $0x90] sm:$0xff]
        %v333 = vld [vmem:[%s1 + $0x98] sm:$0xff]
        %v334 = vld [vmem:[%s1 + $0xa0] sm:$0xff]
        %v335 = vld [vmem:[%s1 + $0xa8] sm:$0xff]
        %v336 = vld [vmem:[%s1 + $0xb0] sm:$0xff]
        %v337 = vld [vmem:[%s1 + $0xb8] sm:$0xff]
        %v338 = vld [vmem:[%s1 + $0xc0] sm:$0xff]
        %v339 = vld [vmem:[%s1 + $0xc8] sm:$0xff]
        %v340 = vld [vmem:[%s1 + $0xd0] sm:$0xff]
        %v341 = vld [vmem:[%s1 + $0xd8] sm:$0xff]
        %v342 = vld [vmem:[%s1 + $0xe0] sm:$0xff]
        %v343 = vld [vmem:[%s1 + $0xe8] sm:$0xff]
        %v344 = vld [vmem:[%s1 + $0xf0] sm:$0xff]
        %v345 = vld [vmem:[%s1 + $0xf8] sm:$0xff]
        %v346 = vld [vmem:[%s1 + $0x100] sm:$0xff]
        %v347 = vld [vmem:[%s1 + $0x108] sm:$0xff]
        %v348 = vld [vmem:[%s1 + $0x110] sm:$0xff]
        %v349 = vld [vmem:[%s1 + $0x118] sm:$0xff]
        %v350 = vld [vmem:[%s2] sm:$0x1]
        %v352 = vlaneseq
        %v353 = vshrl.u32 %v352, 7
        %v354 = vsub.s32 0, %v353
        %v355 = vrot.slane %v350, %v354
        %vm357 = vcmask 261120
        %v359 = vsel %vm357, %v202, 0
        %v362 = vsel %vm357, %v205, 0
        %v365 = vsel %vm357, %v208, 0
        %v368 = vsel %vm357, %v211, 0
        %v371 = vsel %vm357, %v214, 0
        %v374 = vsel %vm357, %v217, 0
        %v377 = vsel %vm357, %v220, 0
        %v380 = vsel %vm357, %v223, 0
        %v383 = vsel %vm357, %v226, 0
        %v386 = vsel %vm357, %v229, 0
        %v389 = vsel %vm357, %v232, 0
        %v392 = vsel %vm357, %v235, 0
        %v395 = vsel %vm357, %v238, 0
        %v398 = vsel %vm357, %v241, 0
        %v401 = vsel %vm357, %v244, 0
        %v404 = vsel %vm357, %v247, 0
        %v407 = vsel %vm357, %v250, 0
        %v410 = vsel %vm357, %v253, 0
        %v413 = vsel %vm357, %v256, 0
        %v416 = vsel %vm357, %v259, 0
        %v419 = vsel %vm357, %v262, 0
        %v422 = vsel %vm357, %v265, 0
        %v425 = vsel %vm357, %v268, 0
        %v428 = vsel %vm357, %v271, 0
        %v431 = vsel %vm357, %v274, 0
        %v434 = vsel %vm357, %v277, 0
        %v437 = vsel %vm357, %v280, 0
        %v440 = vsel %vm357, %v283, 0
        %v443 = vsel %vm357, %v286, 0
        %v446 = vsel %vm357, %v289, 0
        %v449 = vsel %vm357, %v292, 0
        %v452 = vsel %vm357, %v295, 0
        %v455 = vsel %vm357, %v298, 0
        %v458 = vsel %vm357, %v301, 0
        %v461 = vsel %vm357, %v304, 0
        %v464 = vsel %vm357, %v307, 0
        %v467 = vsel %vm357, %v310, 0
        %v470 = vsel %vm357, %v313, 0
        %472 = vmatprep.subr.mxu0 0.0
        %473 = vmatpush1.msra.mxu0 %v329
        %474 = vmatprep.subr.mxu0 0.0
        %475 = vmatpush1.msra.mxu0 %v328
        %476 = vmatprep.subr.mxu0 0.0
        %477 = vmatpush1.msra.mxu0 %v327
        %478 = vmatprep.subr.mxu0 0.0
        %479 = vmatpush1.msra.mxu0 %v326
        %480 = vmatprep.subr.mxu0 0.0
        %481 = vmatpush1.msra.mxu0 %v325
        %482 = vmatprep.subr.mxu0 0.0
        %483 = vmatpush1.msra.mxu0 %v324
        %484 = vmatprep.subr.mxu0 0.0
        %485 = vmatpush1.msra.mxu0 %v323
        %486 = vmatprep.subr.mxu0 0.0
        %487 = vmatpush1.msra.mxu0 %v322
        %488 = vmatprep.subr.mxu0 0.0
        %489 = vmatpush1.msra.mxu0 %v321
        %490 = vmatprep.subr.mxu0 0.0
        %491 = vmatpush1.msra.mxu0 %v320
        %492 = vmatprep.subr.mxu0 0.0
        %493 = vmatpush1.msra.mxu0 %v319
        %494 = vmatprep.subr.mxu0 0.0
        %495 = vmatpush1.msra.mxu0 %v318
        %496 = vmatprep.subr.mxu0 0.0
        %497 = vmatpush1.msra.mxu0 %v317
        %498 = vmatprep.subr.mxu0 0.0
        %499 = vmatpush1.msra.mxu0 %v316
        %500 = vmatprep.subr.mxu0 0.0
        %501 = vmatpush1.msra.mxu0 %v315
        %502 = vmatprep.subr.mxu0 0.0
        %503 = vmatpush1.msra.mxu0 %v314
        %504 = vmatprep.subr.mxu0 0.0
        %505 = vmatpush2.msra.mxu0 %v345
        %506 = vmatprep.subr.mxu0 0.0
        %507 = vmatpush2.msra.mxu0 %v344
        %508 = vmatprep.subr.mxu0 0.0
        %509 = vmatpush2.msra.mxu0 %v343
        %510 = vmatprep.subr.mxu0 0.0
        %511 = vmatpush2.msra.mxu0 %v342
        %512 = vmatprep.subr.mxu0 0.0
        %513 = vmatpush2.msra.mxu0 %v341
        %514 = vmatprep.subr.mxu0 0.0
        %515 = vmatpush2.msra.mxu0 %v340
        %516 = vmatprep.subr.mxu0 0.0
        %517 = vmatpush2.msra.mxu0 %v339
        %518 = vmatprep.subr.mxu0 0.0
        %519 = vmatpush2.msra.mxu0 %v338
        %520 = vmatprep.subr.mxu0 0.0
        %521 = vmatpush2.msra.mxu0 %v337
        %522 = vmatprep.subr.mxu0 0.0
        %523 = vmatpush2.msra.mxu0 %v336
        %524 = vmatprep.subr.mxu0 0.0
        %525 = vmatpush2.msra.mxu0 %v335
        %526 = vmatprep.subr.mxu0 0.0
        %527 = vmatpush2.msra.mxu0 %v334
        %528 = vmatprep.subr.mxu0 0.0
        %529 = vmatpush2.msra.mxu0 %v333
        %530 = vmatprep.subr.mxu0 0.0
        %531 = vmatpush2.msra.mxu0 %v332
        %532 = vmatprep.subr.mxu0 0.0
        %533 = vmatpush2.msra.mxu0 %v331
        %534 = vmatprep.subr.mxu0 0.0
        %535 = vmatpush2.msra.mxu0 %v330
        %536 = vmatprep.mubr.f32.mxu0 %v201
        %537 = vmatmul.mubr.f32.gmra.mxu0 %v200
        %v538 = vpop.f32.mrf.mxu0
        %v539 = vadd.f32 %v355, %v538
        %v540 = vpop.f32.mrf.mxu0
        %541 = vmatprep.mubr.f32.mxu0 %v204
        %542 = vmatmul.mubr.f32.gmra.mxu0 %v203
        %v543 = vpop.f32.mrf.mxu0
        %v544 = vadd.f32 %v355, %v543
        %v545 = vpop.f32.mrf.mxu0
        %546 = vmatprep.mubr.f32.mxu0 %v207
        %547 = vmatmul.mubr.f32.gmra.mxu0 %v206
        %v548 = vpop.f32.mrf.mxu0
        %v549 = vadd.f32 %v355, %v548
        %v550 = vpop.f32.mrf.mxu0
        %551 = vmatprep.mubr.f32.mxu0 %v210
        %552 = vmatmul.mubr.f32.gmra.mxu0 %v209
        %v553 = vpop.f32.mrf.mxu0
        %v554 = vadd.f32 %v355, %v553
        %v555 = vpop.f32.mrf.mxu0
        %556 = vmatprep.mubr.f32.mxu0 %v213
        %557 = vmatmul.mubr.f32.gmra.mxu0 %v212
        %v558 = vpop.f32.mrf.mxu0
        %v559 = vadd.f32 %v355, %v558
        %v560 = vpop.f32.mrf.mxu0
        %561 = vmatprep.mubr.f32.mxu0 %v216
        %562 = vmatmul.mubr.f32.gmra.mxu0 %v215
        %v563 = vpop.f32.mrf.mxu0
        %v564 = vadd.f32 %v355, %v563
        %v565 = vpop.f32.mrf.mxu0
        %566 = vmatprep.mubr.f32.mxu0 %v219
        %567 = vmatmul.mubr.f32.gmra.mxu0 %v218
        %v568 = vpop.f32.mrf.mxu0
        %v569 = vadd.f32 %v355, %v568
        %v570 = vpop.f32.mrf.mxu0
        %571 = vmatprep.mubr.f32.mxu0 %v222
        %572 = vmatmul.mubr.f32.gmra.mxu0 %v221
        %v573 = vpop.f32.mrf.mxu0
        %v574 = vadd.f32 %v355, %v573
        %v575 = vpop.f32.mrf.mxu0
        %576 = vmatprep.mubr.f32.mxu0 %v225
        %577 = vmatmul.mubr.f32.gmra.mxu0 %v224
        %v578 = vpop.f32.mrf.mxu0
        %v579 = vadd.f32 %v355, %v578
        %v580 = vpop.f32.mrf.mxu0
        %581 = vmatprep.mubr.f32.mxu0 %v228
        %582 = vmatmul.mubr.f32.gmra.mxu0 %v227
        %v583 = vpop.f32.mrf.mxu0
        %v584 = vadd.f32 %v355, %v583
        %v585 = vpop.f32.mrf.mxu0
        %586 = vmatprep.mubr.f32.mxu0 %v231
        %587 = vmatmul.mubr.f32.gmra.mxu0 %v230
        %v588 = vpop.f32.mrf.mxu0
        %v589 = vadd.f32 %v355, %v588
        %v590 = vpop.f32.mrf.mxu0
        %591 = vmatprep.mubr.f32.mxu0 %v234
        %592 = vmatmul.mubr.f32.gmra.mxu0 %v233
        %v593 = vpop.f32.mrf.mxu0
        %v594 = vadd.f32 %v355, %v593
        %v595 = vpop.f32.mrf.mxu0
        %596 = vmatprep.mubr.f32.mxu0 %v237
        %597 = vmatmul.mubr.f32.gmra.mxu0 %v236
        %v598 = vpop.f32.mrf.mxu0
        %v599 = vadd.f32 %v355, %v598
        %v600 = vpop.f32.mrf.mxu0
        %601 = vmatprep.mubr.f32.mxu0 %v240
        %602 = vmatmul.mubr.f32.gmra.mxu0 %v239
        %v603 = vpop.f32.mrf.mxu0
        %v604 = vadd.f32 %v355, %v603
        %v605 = vpop.f32.mrf.mxu0
        %606 = vmatprep.mubr.f32.mxu0 %v243
        %607 = vmatmul.mubr.f32.gmra.mxu0 %v242
        %v608 = vpop.f32.mrf.mxu0
        %v609 = vadd.f32 %v355, %v608
        %v610 = vpop.f32.mrf.mxu0
        %611 = vmatprep.mubr.f32.mxu0 %v246
        %612 = vmatmul.mubr.f32.gmra.mxu0 %v245
        %v613 = vpop.f32.mrf.mxu0
        %v614 = vadd.f32 %v355, %v613
        %v615 = vpop.f32.mrf.mxu0
        %616 = vmatprep.mubr.f32.mxu0 %v249
        %617 = vmatmul.mubr.f32.gmra.mxu0 %v248
        %v618 = vpop.f32.mrf.mxu0
        %v619 = vadd.f32 %v355, %v618
        %v620 = vpop.f32.mrf.mxu0
        %621 = vmatprep.mubr.f32.mxu0 %v252
        %622 = vmatmul.mubr.f32.gmra.mxu0 %v251
        %v623 = vpop.f32.mrf.mxu0
        %v624 = vadd.f32 %v355, %v623
        %v625 = vpop.f32.mrf.mxu0
        %626 = vmatprep.mubr.f32.mxu0 %v255
        %627 = vmatmul.mubr.f32.gmra.mxu0 %v254
        %v628 = vpop.f32.mrf.mxu0
        %v629 = vadd.f32 %v355, %v628
        %v630 = vpop.f32.mrf.mxu0
        %631 = vmatprep.mubr.f32.mxu0 %v258
        %632 = vmatmul.mubr.f32.gmra.mxu0 %v257
        %v633 = vpop.f32.mrf.mxu0
        %v634 = vadd.f32 %v355, %v633
        %v635 = vpop.f32.mrf.mxu0
        %636 = vmatprep.mubr.f32.mxu0 %v261
        %637 = vmatmul.mubr.f32.gmra.mxu0 %v260
        %v638 = vpop.f32.mrf.mxu0
        %v639 = vadd.f32 %v355, %v638
        %v640 = vpop.f32.mrf.mxu0
        %641 = vmatprep.mubr.f32.mxu0 %v264
        %642 = vmatmul.mubr.f32.gmra.mxu0 %v263
        %v643 = vpop.f32.mrf.mxu0
        %v644 = vadd.f32 %v355, %v643
        %v645 = vpop.f32.mrf.mxu0
        %646 = vmatprep.mubr.f32.mxu0 %v267
        %647 = vmatmul.mubr.f32.gmra.mxu0 %v266
        %v648 = vpop.f32.mrf.mxu0
        %v649 = vadd.f32 %v355, %v648
        %v650 = vpop.f32.mrf.mxu0
        %651 = vmatprep.mubr.f32.mxu0 %v270
        %652 = vmatmul.mubr.f32.gmra.mxu0 %v269
        %v653 = vpop.f32.mrf.mxu0
        %v654 = vadd.f32 %v355, %v653
        %v655 = vpop.f32.mrf.mxu0
        %656 = vmatprep.mubr.f32.mxu0 %v273
        %657 = vmatmul.mubr.f32.gmra.mxu0 %v272
        %v658 = vpop.f32.mrf.mxu0
        %v659 = vadd.f32 %v355, %v658
        %v660 = vpop.f32.mrf.mxu0
        %661 = vmatprep.mubr.f32.mxu0 %v276
        %662 = vmatmul.mubr.f32.gmra.mxu0 %v275
        %v663 = vpop.f32.mrf.mxu0
        %v664 = vadd.f32 %v355, %v663
        %v665 = vpop.f32.mrf.mxu0
        %666 = vmatprep.mubr.f32.mxu0 %v279
        %667 = vmatmul.mubr.f32.gmra.mxu0 %v278
        %v668 = vpop.f32.mrf.mxu0
        %v669 = vadd.f32 %v355, %v668
        %v670 = vpop.f32.mrf.mxu0
        %671 = vmatprep.mubr.f32.mxu0 %v282
        %672 = vmatmul.mubr.f32.gmra.mxu0 %v281
        %v673 = vpop.f32.mrf.mxu0
        %v674 = vadd.f32 %v355, %v673
        %v675 = vpop.f32.mrf.mxu0
        %676 = vmatprep.mubr.f32.mxu0 %v285
        %677 = vmatmul.mubr.f32.gmra.mxu0 %v284
        %v678 = vpop.f32.mrf.mxu0
        %v679 = vadd.f32 %v355, %v678
        %v680 = vpop.f32.mrf.mxu0
        %681 = vmatprep.mubr.f32.mxu0 %v288
        %682 = vmatmul.mubr.f32.gmra.mxu0 %v287
        %v683 = vpop.f32.mrf.mxu0
        %v684 = vadd.f32 %v355, %v683
        %v685 = vpop.f32.mrf.mxu0
        %686 = vmatprep.mubr.f32.mxu0 %v291
        %687 = vmatmul.mubr.f32.gmra.mxu0 %v290
        %v688 = vpop.f32.mrf.mxu0
        %v689 = vadd.f32 %v355, %v688
        %v690 = vpop.f32.mrf.mxu0
        %691 = vmatprep.mubr.f32.mxu0 %v294
        %692 = vmatmul.mubr.f32.gmra.mxu0 %v293
        %v693 = vpop.f32.mrf.mxu0
        %v694 = vadd.f32 %v355, %v693
        %v695 = vpop.f32.mrf.mxu0
        %696 = vmatprep.mubr.f32.mxu0 %v297
        %697 = vmatmul.mubr.f32.gmra.mxu0 %v296
        %v698 = vpop.f32.mrf.mxu0
        %v699 = vadd.f32 %v355, %v698
        %v700 = vpop.f32.mrf.mxu0
        %701 = vmatprep.mubr.f32.mxu0 %v300
        %702 = vmatmul.mubr.f32.gmra.mxu0 %v299
        %v703 = vpop.f32.mrf.mxu0
        %v704 = vadd.f32 %v355, %v703
        %v705 = vpop.f32.mrf.mxu0
        %706 = vmatprep.mubr.f32.mxu0 %v303
        %707 = vmatmul.mubr.f32.gmra.mxu0 %v302
        %v708 = vpop.f32.mrf.mxu0
        %v709 = vadd.f32 %v355, %v708
        %v710 = vpop.f32.mrf.mxu0
        %711 = vmatprep.mubr.f32.mxu0 %v306
        %712 = vmatmul.mubr.f32.gmra.mxu0 %v305
        %v713 = vpop.f32.mrf.mxu0
        %v714 = vadd.f32 %v355, %v713
        %v715 = vpop.f32.mrf.mxu0
        %716 = vmatprep.mubr.f32.mxu0 %v309
        %717 = vmatmul.mubr.f32.gmra.mxu0 %v308
        %v718 = vpop.f32.mrf.mxu0
        %v719 = vadd.f32 %v355, %v718
        %v720 = vpop.f32.mrf.mxu0
        %721 = vmatprep.mubr.f32.mxu0 %v312
        %722 = vmatmul.mubr.f32.gmra.mxu0 %v311
        %v723 = vpop.f32.mrf.mxu0
        %v724 = vadd.f32 %v355, %v723
        %v725 = vpop.f32.mrf.mxu0
        %726 = vdwg.mxu0
        %727 = vmatprep.subr.mxu0 0.0
        %728 = vmatpush1.msra.mxu0 0.0
        %729 = vmatprep.subr.mxu0 0.0
        %730 = vmatpush1.msra.mxu0 0.0
        %731 = vmatprep.subr.mxu0 0.0
        %732 = vmatpush1.msra.mxu0 0.0
        %733 = vmatprep.subr.mxu0 0.0
        %734 = vmatpush1.msra.mxu0 0.0
        %735 = vmatprep.subr.mxu0 0.0
        %736 = vmatpush1.msra.mxu0 0.0
        %737 = vmatprep.subr.mxu0 0.0
        %738 = vmatpush1.msra.mxu0 0.0
        %739 = vmatprep.subr.mxu0 0.0
        %740 = vmatpush1.msra.mxu0 0.0
        %741 = vmatprep.subr.mxu0 0.0
        %742 = vmatpush1.msra.mxu0 0.0
        %743 = vmatprep.subr.mxu0 0.0
        %744 = vmatpush1.msra.mxu0 0.0
        %745 = vmatprep.subr.mxu0 0.0
        %746 = vmatpush1.msra.mxu0 0.0
        %747 = vmatprep.subr.mxu0 0.0
        %748 = vmatpush1.msra.mxu0 0.0
        %749 = vmatprep.subr.mxu0 0.0
        %750 = vmatpush1.msra.mxu0 0.0
        %751 = vmatprep.subr.mxu0 0.0
        %752 = vmatpush1.msra.mxu0 %v349
        %753 = vmatprep.subr.mxu0 0.0
        %754 = vmatpush1.msra.mxu0 %v348
        %755 = vmatprep.subr.mxu0 0.0
        %756 = vmatpush1.msra.mxu0 %v347
        %757 = vmatprep.subr.mxu0 0.0
        %758 = vmatpush1.msra.mxu0 %v346
        %759 = vmatprep.subr.mxu0 0.0
        %760 = vmatpush2.msra.mxu0 0.0
        %761 = vmatprep.subr.mxu0 0.0
        %762 = vmatpush2.msra.mxu0 0.0
        %763 = vmatprep.subr.mxu0 0.0
        %764 = vmatpush2.msra.mxu0 0.0
        %765 = vmatprep.subr.mxu0 0.0
        %766 = vmatpush2.msra.mxu0 0.0
        %767 = vmatprep.subr.mxu0 0.0
        %768 = vmatpush2.msra.mxu0 0.0
        %769 = vmatprep.subr.mxu0 0.0
        %770 = vmatpush2.msra.mxu0 0.0
        %771 = vmatprep.subr.mxu0 0.0
        %772 = vmatpush2.msra.mxu0 0.0
        %773 = vmatprep.subr.mxu0 0.0
        %774 = vmatpush2.msra.mxu0 0.0
        %775 = vmatprep.subr.mxu0 0.0
        %776 = vmatpush2.msra.mxu0 0.0
        %777 = vmatprep.subr.mxu0 0.0
        %778 = vmatpush2.msra.mxu0 0.0
        %779 = vmatprep.subr.mxu0 0.0
        %780 = vmatpush2.msra.mxu0 0.0
        %781 = vmatprep.subr.mxu0 0.0
        %782 = vmatpush2.msra.mxu0 0.0
        %783 = vmatprep.subr.mxu0 0.0
        %784 = vmatpush2.msra.mxu0 0.0
        %785 = vmatprep.subr.mxu0 0.0
        %786 = vmatpush2.msra.mxu0 0.0
        %787 = vmatprep.subr.mxu0 0.0
        %788 = vmatpush2.msra.mxu0 0.0
        %789 = vmatprep.subr.mxu0 0.0
        %790 = vmatpush2.msra.mxu0 0.0
        %791 = vmatprep.mubr.f32.mxu0 0.0
        %792 = vmatmul.mubr.f32.gmra.mxu0 %v359
        %v793 = vpop.f32.mrf.mxu0
        %v794 = vadd.f32 %v539, %v793
        %v795 = vpop.f32.mrf.mxu0
        %796 = vmatprep.mubr.f32.mxu0 0.0
        %797 = vmatmul.mubr.f32.gmra.mxu0 %v362
        %v798 = vpop.f32.mrf.mxu0
        %v799 = vadd.f32 %v544, %v798
        %v800 = vpop.f32.mrf.mxu0
        %801 = vmatprep.mubr.f32.mxu0 0.0
        %802 = vmatmul.mubr.f32.gmra.mxu0 %v365
        %v803 = vpop.f32.mrf.mxu0
        %v804 = vadd.f32 %v549, %v803
        %v805 = vpop.f32.mrf.mxu0
        %806 = vmatprep.mubr.f32.mxu0 0.0
        %807 = vmatmul.mubr.f32.gmra.mxu0 %v368
        %v808 = vpop.f32.mrf.mxu0
        %v809 = vadd.f32 %v554, %v808
        %v810 = vpop.f32.mrf.mxu0
        %811 = vmatprep.mubr.f32.mxu0 0.0
        %812 = vmatmul.mubr.f32.gmra.mxu0 %v371
        %v813 = vpop.f32.mrf.mxu0
        %v814 = vadd.f32 %v559, %v813
        %v815 = vpop.f32.mrf.mxu0
        %816 = vmatprep.mubr.f32.mxu0 0.0
        %817 = vmatmul.mubr.f32.gmra.mxu0 %v374
        %v818 = vpop.f32.mrf.mxu0
        %v819 = vadd.f32 %v564, %v818
        %v820 = vpop.f32.mrf.mxu0
        %821 = vmatprep.mubr.f32.mxu0 0.0
        %822 = vmatmul.mubr.f32.gmra.mxu0 %v377
        %v823 = vpop.f32.mrf.mxu0
        %v824 = vadd.f32 %v569, %v823
        %v825 = vpop.f32.mrf.mxu0
        %826 = vmatprep.mubr.f32.mxu0 0.0
        %827 = vmatmul.mubr.f32.gmra.mxu0 %v380
        %v828 = vpop.f32.mrf.mxu0
        %v829 = vadd.f32 %v574, %v828
        %v830 = vpop.f32.mrf.mxu0
        %831 = vmatprep.mubr.f32.mxu0 0.0
        %832 = vmatmul.mubr.f32.gmra.mxu0 %v383
        %v833 = vpop.f32.mrf.mxu0
        %v834 = vadd.f32 %v579, %v833
        %v835 = vpop.f32.mrf.mxu0
        %836 = vmatprep.mubr.f32.mxu0 0.0
        %837 = vmatmul.mubr.f32.gmra.mxu0 %v386
        %v838 = vpop.f32.mrf.mxu0
        %v839 = vadd.f32 %v584, %v838
        %v840 = vpop.f32.mrf.mxu0
        %841 = vmatprep.mubr.f32.mxu0 0.0
        %842 = vmatmul.mubr.f32.gmra.mxu0 %v389
        %v843 = vpop.f32.mrf.mxu0
        %v844 = vadd.f32 %v589, %v843
        %v845 = vpop.f32.mrf.mxu0
        %846 = vmatprep.mubr.f32.mxu0 0.0
        %847 = vmatmul.mubr.f32.gmra.mxu0 %v392
        %v848 = vpop.f32.mrf.mxu0
        %v849 = vadd.f32 %v594, %v848
        %v850 = vpop.f32.mrf.mxu0
        %851 = vmatprep.mubr.f32.mxu0 0.0
        %852 = vmatmul.mubr.f32.gmra.mxu0 %v395
        %v853 = vpop.f32.mrf.mxu0
        %v854 = vadd.f32 %v599, %v853
        %v855 = vpop.f32.mrf.mxu0
        %856 = vmatprep.mubr.f32.mxu0 0.0
        %857 = vmatmul.mubr.f32.gmra.mxu0 %v398
        %v858 = vpop.f32.mrf.mxu0
        %v859 = vadd.f32 %v604, %v858
        %v860 = vpop.f32.mrf.mxu0
        %861 = vmatprep.mubr.f32.mxu0 0.0
        %862 = vmatmul.mubr.f32.gmra.mxu0 %v401
        %v863 = vpop.f32.mrf.mxu0
        %v864 = vadd.f32 %v609, %v863
        %v865 = vpop.f32.mrf.mxu0
        %866 = vmatprep.mubr.f32.mxu0 0.0
        %867 = vmatmul.mubr.f32.gmra.mxu0 %v404
        %v868 = vpop.f32.mrf.mxu0
        %v869 = vadd.f32 %v614, %v868
        %v870 = vpop.f32.mrf.mxu0
        %871 = vmatprep.mubr.f32.mxu0 0.0
        %872 = vmatmul.mubr.f32.gmra.mxu0 %v407
        %v873 = vpop.f32.mrf.mxu0
        %v874 = vadd.f32 %v619, %v873
        %v875 = vpop.f32.mrf.mxu0
        %876 = vmatprep.mubr.f32.mxu0 0.0
        %877 = vmatmul.mubr.f32.gmra.mxu0 %v410
        %v878 = vpop.f32.mrf.mxu0
        %v879 = vadd.f32 %v624, %v878
        %v880 = vpop.f32.mrf.mxu0
        %881 = vmatprep.mubr.f32.mxu0 0.0
        %882 = vmatmul.mubr.f32.gmra.mxu0 %v413
        %v883 = vpop.f32.mrf.mxu0
        %v884 = vadd.f32 %v629, %v883
        %v885 = vpop.f32.mrf.mxu0
        %886 = vmatprep.mubr.f32.mxu0 0.0
        %887 = vmatmul.mubr.f32.gmra.mxu0 %v416
        %v888 = vpop.f32.mrf.mxu0
        %v889 = vadd.f32 %v634, %v888
        %v890 = vpop.f32.mrf.mxu0
        %891 = vmatprep.mubr.f32.mxu0 0.0
        %892 = vmatmul.mubr.f32.gmra.mxu0 %v419
        %v893 = vpop.f32.mrf.mxu0
        %v894 = vadd.f32 %v639, %v893
        %v895 = vpop.f32.mrf.mxu0
        %896 = vmatprep.mubr.f32.mxu0 0.0
        %897 = vmatmul.mubr.f32.gmra.mxu0 %v422
        %v898 = vpop.f32.mrf.mxu0
        %v899 = vadd.f32 %v644, %v898
        %v900 = vpop.f32.mrf.mxu0
        %901 = vmatprep.mubr.f32.mxu0 0.0
        %902 = vmatmul.mubr.f32.gmra.mxu0 %v425
        %v903 = vpop.f32.mrf.mxu0
        %v904 = vadd.f32 %v649, %v903
        %v905 = vpop.f32.mrf.mxu0
        %906 = vmatprep.mubr.f32.mxu0 0.0
        %907 = vmatmul.mubr.f32.gmra.mxu0 %v428
        %v908 = vpop.f32.mrf.mxu0
        %v909 = vadd.f32 %v654, %v908
        %v910 = vpop.f32.mrf.mxu0
        %911 = vmatprep.mubr.f32.mxu0 0.0
        %912 = vmatmul.mubr.f32.gmra.mxu0 %v431
        %v913 = vpop.f32.mrf.mxu0
        %v914 = vadd.f32 %v659, %v913
        %v915 = vpop.f32.mrf.mxu0
        %916 = vmatprep.mubr.f32.mxu0 0.0
        %917 = vmatmul.mubr.f32.gmra.mxu0 %v434
        %v918 = vpop.f32.mrf.mxu0
        %v919 = vadd.f32 %v664, %v918
        %v920 = vpop.f32.mrf.mxu0
        %921 = vmatprep.mubr.f32.mxu0 0.0
        %922 = vmatmul.mubr.f32.gmra.mxu0 %v437
        %v923 = vpop.f32.mrf.mxu0
        %v924 = vadd.f32 %v669, %v923
        %v925 = vpop.f32.mrf.mxu0
        %926 = vmatprep.mubr.f32.mxu0 0.0
        %927 = vmatmul.mubr.f32.gmra.mxu0 %v440
        %v928 = vpop.f32.mrf.mxu0
        %v929 = vadd.f32 %v674, %v928
        %v930 = vpop.f32.mrf.mxu0
        %931 = vmatprep.mubr.f32.mxu0 0.0
        %932 = vmatmul.mubr.f32.gmra.mxu0 %v443
        %v933 = vpop.f32.mrf.mxu0
        %v934 = vadd.f32 %v679, %v933
        %v935 = vpop.f32.mrf.mxu0
        %936 = vmatprep.mubr.f32.mxu0 0.0
        %937 = vmatmul.mubr.f32.gmra.mxu0 %v446
        %v938 = vpop.f32.mrf.mxu0
        %v939 = vadd.f32 %v684, %v938
        %v940 = vpop.f32.mrf.mxu0
        %941 = vmatprep.mubr.f32.mxu0 0.0
        %942 = vmatmul.mubr.f32.gmra.mxu0 %v449
        %v943 = vpop.f32.mrf.mxu0
        %v944 = vadd.f32 %v689, %v943
        %v945 = vpop.f32.mrf.mxu0
        %946 = vmatprep.mubr.f32.mxu0 0.0
        %947 = vmatmul.mubr.f32.gmra.mxu0 %v452
        %v948 = vpop.f32.mrf.mxu0
        %v949 = vadd.f32 %v694, %v948
        %v950 = vpop.f32.mrf.mxu0
        %951 = vmatprep.mubr.f32.mxu0 0.0
        %952 = vmatmul.mubr.f32.gmra.mxu0 %v455
        %v953 = vpop.f32.mrf.mxu0
        %v954 = vadd.f32 %v699, %v953
        %v955 = vpop.f32.mrf.mxu0
        %956 = vmatprep.mubr.f32.mxu0 0.0
        %957 = vmatmul.mubr.f32.gmra.mxu0 %v458
        %v958 = vpop.f32.mrf.mxu0
        %v959 = vadd.f32 %v704, %v958
        %v960 = vpop.f32.mrf.mxu0
        %961 = vmatprep.mubr.f32.mxu0 0.0
        %962 = vmatmul.mubr.f32.gmra.mxu0 %v461
        %v963 = vpop.f32.mrf.mxu0
        %v964 = vadd.f32 %v709, %v963
        %v965 = vpop.f32.mrf.mxu0
        %966 = vmatprep.mubr.f32.mxu0 0.0
        %967 = vmatmul.mubr.f32.gmra.mxu0 %v464
        %v968 = vpop.f32.mrf.mxu0
        %v969 = vadd.f32 %v714, %v968
        %v970 = vpop.f32.mrf.mxu0
        %971 = vmatprep.mubr.f32.mxu0 0.0
        %972 = vmatmul.mubr.f32.gmra.mxu0 %v467
        %v973 = vpop.f32.mrf.mxu0
        %v974 = vadd.f32 %v719, %v973
        %v975 = vpop.f32.mrf.mxu0
        %976 = vmatprep.mubr.f32.mxu0 0.0
        %977 = vmatmul.mubr.f32.gmra.mxu0 %v470
        %v978 = vpop.f32.mrf.mxu0
        %v979 = vadd.f32 %v724, %v978
        %v980 = vpop.f32.mrf.mxu0
        %981 = vdwg.mxu0
        %v982 = vmax.f32 %v794, 0.0
        %v983 = vmax.f32 %v799, 0.0
        %v984 = vmax.f32 %v804, 0.0
        %v985 = vmax.f32 %v809, 0.0
        %v986 = vmax.f32 %v814, 0.0
        %v987 = vmax.f32 %v819, 0.0
        %v988 = vmax.f32 %v824, 0.0
        %v989 = vmax.f32 %v829, 0.0
        %v990 = vmax.f32 %v834, 0.0
        %v991 = vmax.f32 %v839, 0.0
        %v992 = vmax.f32 %v844, 0.0
        %v993 = vmax.f32 %v849, 0.0
        %v994 = vmax.f32 %v854, 0.0
        %v995 = vmax.f32 %v859, 0.0
        %v996 = vmax.f32 %v864, 0.0
        %v997 = vmax.f32 %v869, 0.0
        %v998 = vmax.f32 %v874, 0.0
        %v999 = vmax.f32 %v879, 0.0
        %v1000 = vmax.f32 %v884, 0.0
        %v1001 = vmax.f32 %v889, 0.0
        %v1002 = vmax.f32 %v894, 0.0
        %v1003 = vmax.f32 %v899, 0.0
        %v1004 = vmax.f32 %v904, 0.0
        %v1005 = vmax.f32 %v909, 0.0
        %v1006 = vmax.f32 %v914, 0.0
        %v1007 = vmax.f32 %v919, 0.0
        %v1008 = vmax.f32 %v924, 0.0
        %v1009 = vmax.f32 %v929, 0.0
        %v1010 = vmax.f32 %v934, 0.0
        %v1011 = vmax.f32 %v939, 0.0
        %v1012 = vmax.f32 %v944, 0.0
        %v1013 = vmax.f32 %v949, 0.0
        %v1014 = vmax.f32 %v954, 0.0
        %v1015 = vmax.f32 %v959, 0.0
        %v1016 = vmax.f32 %v964, 0.0
        %v1017 = vmax.f32 %v969, 0.0
        %v1018 = vmax.f32 %v974, 0.0
        %v1019 = vmax.f32 %v979, 0.0
        %vm1020 = vcmask 523264
        %1021 = vst.msk [vmem:[%s177] sm:$0xff] %vm1020, %v982
        %1022 = vst.msk [vmem:[%s177 + $0x8] sm:$0xff] %vm1020, %v983
        %1023 = vst.msk [vmem:[%s177 + $0x10] sm:$0xff] %vm1020, %v984
        %1024 = vst.msk [vmem:[%s177 + $0x18] sm:$0xff] %vm1020, %v985
        %1025 = vst.msk [vmem:[%s177 + $0x20] sm:$0xff] %vm1020, %v986
        %1026 = vst.msk [vmem:[%s177 + $0x28] sm:$0xff] %vm1020, %v987
        %1027 = vst.msk [vmem:[%s177 + $0x30] sm:$0xff] %vm1020, %v988
        %1028 = vst.msk [vmem:[%s177 + $0x38] sm:$0xff] %vm1020, %v989
        %1029 = vst.msk [vmem:[%s177 + $0x40] sm:$0xff] %vm1020, %v990
        %1030 = vst.msk [vmem:[%s177 + $0x48] sm:$0xff] %vm1020, %v991
        %1031 = vst.msk [vmem:[%s177 + $0x50] sm:$0xff] %vm1020, %v992
        %1032 = vst.msk [vmem:[%s177 + $0x58] sm:$0xff] %vm1020, %v993
        %1033 = vst.msk [vmem:[%s177 + $0x60] sm:$0xff] %vm1020, %v994
        %1034 = vst.msk [vmem:[%s177 + $0x68] sm:$0xff] %vm1020, %v995
        %1035 = vst.msk [vmem:[%s177 + $0x70] sm:$0xff] %vm1020, %v996
        %1036 = vst.msk [vmem:[%s177 + $0x78] sm:$0xff] %vm1020, %v997
        %1037 = vst.msk [vmem:[%s177 + $0x80] sm:$0xff] %vm1020, %v998
        %1038 = vst.msk [vmem:[%s177 + $0x88] sm:$0xff] %vm1020, %v999
        %1039 = vst.msk [vmem:[%s177 + $0x90] sm:$0xff] %vm1020, %v1000
        %1040 = vst.msk [vmem:[%s177 + $0x98] sm:$0xff] %vm1020, %v1001
        %1041 = vst.msk [vmem:[%s177 + $0xa0] sm:$0xff] %vm1020, %v1002
        %1042 = vst.msk [vmem:[%s177 + $0xa8] sm:$0xff] %vm1020, %v1003
        %1043 = vst.msk [vmem:[%s177 + $0xb0] sm:$0xff] %vm1020, %v1004
        %1044 = vst.msk [vmem:[%s177 + $0xb8] sm:$0xff] %vm1020, %v1005
        %1045 = vst.msk [vmem:[%s177 + $0xc0] sm:$0xff] %vm1020, %v1006
        %1046 = vst.msk [vmem:[%s177 + $0xc8] sm:$0xff] %vm1020, %v1007
        %1047 = vst.msk [vmem:[%s177 + $0xd0] sm:$0xff] %vm1020, %v1008
        %1048 = vst.msk [vmem:[%s177 + $0xd8] sm:$0xff] %vm1020, %v1009
        %1049 = vst.msk [vmem:[%s177 + $0xe0] sm:$0xff] %vm1020, %v1010
        %1050 = vst.msk [vmem:[%s177 + $0xe8] sm:$0xff] %vm1020, %v1011
        %1051 = vst.msk [vmem:[%s177 + $0xf0] sm:$0xff] %vm1020, %v1012
        %1052 = vst.msk [vmem:[%s177 + $0xf8] sm:$0xff] %vm1020, %v1013
        %1053 = vst.msk [vmem:[%s177 + $0x100] sm:$0xff] %vm1020, %v1014
        %1054 = vst.msk [vmem:[%s177 + $0x108] sm:$0xff] %vm1020, %v1015
        %1055 = vst.msk [vmem:[%s177 + $0x110] sm:$0xff] %vm1020, %v1016
        %1056 = vst.msk [vmem:[%s177 + $0x118] sm:$0xff] %vm1020, %v1017
        %1057 = vst.msk [vmem:[%s177 + $0x120] sm:$0xff] %vm1020, %v1018
        %1058 = vst.msk [vmem:[%s177 + $0x128] sm:$0xff] %vm1020, %v1019
        %s1059 = sand.u32 %s90, 1
        %s1060 = sand.u32 %s90, 1
        %s1061 = smul.addr %s1060, 304
        %s1062 = scalar_lea.vmem [#allocation2], %s1061
        // Predicated region
        $region33: #{dqn_forward.5} parent=31 // pred_check
          %p1063 = pneg %p100
        $region34: #{dqn_forward.5} parent=31 // pred_check_branch
          %1065 = sbr.rel (%p1063) target = $region36
        $region35: #{dqn_forward.5} parent=31 // pred_region
          %s1066 = smul.u32 38, %s14
          %s1067 = ssub.s32 75, %s1066
          %p1068 = scmp.lt.s32.totalorder %s1067, 38
          %s1069 = scalar_select %p1068, %s1067, 38
          %s1070 = smul.u32 128, %s1069
          %p1071 = scmp.ne.s32.totalorder 0, %s1070
          %s1072 = smul.addr %s1066, 8
          %s1073 = scalar_lea.vmem %s3, %s1072
          // Predicated region
          $region37: #{dqn_forward.5} parent=35 // pred_check
            %p1074 = pneg %p1071
          $region38: #{dqn_forward.5} parent=35 // pred_check_branch
            %1076 = sbr.rel (%p1074) target = $region40
          $region39: #{dqn_forward.5} parent=35 // pred_region
            // Predicated region
            $region41: #{dqn_forward.5} parent=39 // pred_check
              _
            $region42: #{dqn_forward.5} parent=39 // pred_check_branch
              %1078 = sbr.rel (0) target = $region44
            $region43: #{dqn_forward.5} parent=39 // pred_region
              // Predicated region
              $region63: #{dqn_forward.5} parent=43 // pred_check
                _
              $region64: #{dqn_forward.5} parent=43 // pred_check_branch
                %1203 = sbr.rel (0) target = $region66
              $region65: #{dqn_forward.5} parent=43 // pred_region
                %s1204 = sdiv.u32.pop %s1069, 38
                %s1205 = srem.u32.pop %s1069, 38
                // While loop
                $region67: #{dqn_forward.5} parent=65 // loop_pre_header
                  _
                $region68: #{dqn_forward.5} parent=65 // loop_header
                  %s1207 = sphi 0, %s1209
                  %p1208 = scmp.ge.s32.totalorder %s1207, %s1204
                  %s1212 = sphi 0, %s1293
                  %s1213 = sphi %s1062, %s1296
                  %s1214 = sphi %s1073, %s1297
                $region69: #{dqn_forward.5} parent=65 // loop_header_branch
                  %1211 = sbr.rel (%p1208) target = $region73
                $region70: #{dqn_forward.5} parent=65 // loop_body
                  %v1215 = vld [vmem:[%s1213] sm:$0xff]
                  %1216 = vst [vmem:[%s1214] sm:$0xff] %v1215
                  %v1217 = vld [vmem:[%s1213 + $0x8] sm:$0xff]
                  %1218 = vst [vmem:[%s1214 + $0x8] sm:$0xff] %v1217
                  %v1219 = vld [vmem:[%s1213 + $0x10] sm:$0xff]
                  %1220 = vst [vmem:[%s1214 + $0x10] sm:$0xff] %v1219
                  %v1221 = vld [vmem:[%s1213 + $0x18] sm:$0xff]
                  %1222 = vst [vmem:[%s1214 + $0x18] sm:$0xff] %v1221
                  %v1223 = vld [vmem:[%s1213 + $0x20] sm:$0xff]
                  %1224 = vst [vmem:[%s1214 + $0x20] sm:$0xff] %v1223
                  %v1225 = vld [vmem:[%s1213 + $0x28] sm:$0xff]
                  %1226 = vst [vmem:[%s1214 + $0x28] sm:$0xff] %v1225
                  %v1227 = vld [vmem:[%s1213 + $0x30] sm:$0xff]
                  %1228 = vst [vmem:[%s1214 + $0x30] sm:$0xff] %v1227
                  %v1229 = vld [vmem:[%s1213 + $0x38] sm:$0xff]
                  %1230 = vst [vmem:[%s1214 + $0x38] sm:$0xff] %v1229
                  %v1231 = vld [vmem:[%s1213 + $0x40] sm:$0xff]
                  %1232 = vst [vmem:[%s1214 + $0x40] sm:$0xff] %v1231
                  %v1233 = vld [vmem:[%s1213 + $0x48] sm:$0xff]
                  %1234 = vst [vmem:[%s1214 + $0x48] sm:$0xff] %v1233
                  %v1235 = vld [vmem:[%s1213 + $0x50] sm:$0xff]
                  %1236 = vst [vmem:[%s1214 + $0x50] sm:$0xff] %v1235
                  %v1237 = vld [vmem:[%s1213 + $0x58] sm:$0xff]
                  %1238 = vst [vmem:[%s1214 + $0x58] sm:$0xff] %v1237
                  %v1239 = vld [vmem:[%s1213 + $0x60] sm:$0xff]
                  %1240 = vst [vmem:[%s1214 + $0x60] sm:$0xff] %v1239
                  %v1241 = vld [vmem:[%s1213 + $0x68] sm:$0xff]
                  %1242 = vst [vmem:[%s1214 + $0x68] sm:$0xff] %v1241
                  %v1243 = vld [vmem:[%s1213 + $0x70] sm:$0xff]
                  %1244 = vst [vmem:[%s1214 + $0x70] sm:$0xff] %v1243
                  %v1245 = vld [vmem:[%s1213 + $0x78] sm:$0xff]
                  %1246 = vst [vmem:[%s1214 + $0x78] sm:$0xff] %v1245
                  %v1247 = vld [vmem:[%s1213 + $0x80] sm:$0xff]
                  %1248 = vst [vmem:[%s1214 + $0x80] sm:$0xff] %v1247
                  %v1249 = vld [vmem:[%s1213 + $0x88] sm:$0xff]
                  %1250 = vst [vmem:[%s1214 + $0x88] sm:$0xff] %v1249
                  %v1251 = vld [vmem:[%s1213 + $0x90] sm:$0xff]
                  %1252 = vst [vmem:[%s1214 + $0x90] sm:$0xff] %v1251
                  %v1253 = vld [vmem:[%s1213 + $0x98] sm:$0xff]
                  %1254 = vst [vmem:[%s1214 + $0x98] sm:$0xff] %v1253
                  %v1255 = vld [vmem:[%s1213 + $0xa0] sm:$0xff]
                  %1256 = vst [vmem:[%s1214 + $0xa0] sm:$0xff] %v1255
                  %v1257 = vld [vmem:[%s1213 + $0xa8] sm:$0xff]
                  %1258 = vst [vmem:[%s1214 + $0xa8] sm:$0xff] %v1257
                  %v1259 = vld [vmem:[%s1213 + $0xb0] sm:$0xff]
                  %1260 = vst [vmem:[%s1214 + $0xb0] sm:$0xff] %v1259
                  %v1261 = vld [vmem:[%s1213 + $0xb8] sm:$0xff]
                  %1262 = vst [vmem:[%s1214 + $0xb8] sm:$0xff] %v1261
                  %v1263 = vld [vmem:[%s1213 + $0xc0] sm:$0xff]
                  %1264 = vst [vmem:[%s1214 + $0xc0] sm:$0xff] %v1263
                  %v1265 = vld [vmem:[%s1213 + $0xc8] sm:$0xff]
                  %1266 = vst [vmem:[%s1214 + $0xc8] sm:$0xff] %v1265
                  %v1267 = vld [vmem:[%s1213 + $0xd0] sm:$0xff]
                  %1268 = vst [vmem:[%s1214 + $0xd0] sm:$0xff] %v1267
                  %v1269 = vld [vmem:[%s1213 + $0xd8] sm:$0xff]
                  %1270 = vst [vmem:[%s1214 + $0xd8] sm:$0xff] %v1269
                  %v1271 = vld [vmem:[%s1213 + $0xe0] sm:$0xff]
                  %1272 = vst [vmem:[%s1214 + $0xe0] sm:$0xff] %v1271
                  %v1273 = vld [vmem:[%s1213 + $0xe8] sm:$0xff]
                  %1274 = vst [vmem:[%s1214 + $0xe8] sm:$0xff] %v1273
                  %v1275 = vld [vmem:[%s1213 + $0xf0] sm:$0xff]
                  %1276 = vst [vmem:[%s1214 + $0xf0] sm:$0xff] %v1275
                  %v1277 = vld [vmem:[%s1213 + $0xf8] sm:$0xff]
                  %1278 = vst [vmem:[%s1214 + $0xf8] sm:$0xff] %v1277
                  %v1279 = vld [vmem:[%s1213 + $0x100] sm:$0xff]
                  %1280 = vst [vmem:[%s1214 + $0x100] sm:$0xff] %v1279
                  %v1281 = vld [vmem:[%s1213 + $0x108] sm:$0xff]
                  %1282 = vst [vmem:[%s1214 + $0x108] sm:$0xff] %v1281
                  %v1283 = vld [vmem:[%s1213 + $0x110] sm:$0xff]
                  %1284 = vst [vmem:[%s1214 + $0x110] sm:$0xff] %v1283
                  %v1285 = vld [vmem:[%s1213 + $0x118] sm:$0xff]
                  %1286 = vst [vmem:[%s1214 + $0x118] sm:$0xff] %v1285
                  %v1287 = vld [vmem:[%s1213 + $0x120] sm:$0xff]
                  %1288 = vst [vmem:[%s1214 + $0x120] sm:$0xff] %v1287
                  %v1289 = vld [vmem:[%s1213 + $0x128] sm:$0xff]
                  %1290 = vst [vmem:[%s1214 + $0x128] sm:$0xff] %v1289
                  %s1291 = sadd.s32 1, %s1212
                  %p1292 = scmp.ge.s32.totalorder %s1291, %s1204
                  %s1293 = scalar_select %p1292, 0, %s1291
                  %s1294 = smul.u32 %s1293, 304
                  %s1295 = smul.u32 %s1293, 304
                  %s1296 = scalar_lea.vmem %s1062, %s1294 [#allocation2]
                  %s1297 = scalar_lea.vmem %s1073, %s1295
                $region71: #{dqn_forward.5} parent=65 // loop_footer
                  %s1209 = sadd.s32 %s1207, 1
                $region72: #{dqn_forward.5} parent=65 // loop_footer_branch
                  %1206 = sbr.rel target = $region68
                $region73: #{dqn_forward.5} parent=65 // loop_exit
                  _
                %s1298 = sdiv.u32.pop %s1069, 38
                %s1299 = srem.u32.pop %s1069, 38
                %s1300 = smul.u32 %s1298, 38
                %s1301 = smul.u32 8, %s1300
                %s1302 = scalar_lea.vmem %s1062, %s1301 [#allocation2]
                %s1303 = smul.u32 8, %s1300
                %s1304 = scalar_lea.vmem %s1073, %s1303
                // While loop
                $region74: #{dqn_forward.5} parent=65 // loop_pre_header
                  _
                $region75: #{dqn_forward.5} parent=65 // loop_header
                  %s1306 = sphi 0, %s1308
                  %p1307 = scmp.ge.s32.totalorder %s1306, %s1299
                  %s1311 = sphi 0, %s1318
                  %s1312 = sphi %s1302, %s1321
                  %s1313 = sphi %s1304, %s1322
                $region76: #{dqn_forward.5} parent=65 // loop_header_branch
                  %1310 = sbr.rel (%p1307) target = $region80
                $region77: #{dqn_forward.5} parent=65 // loop_body
                  %v1314 = vld [vmem:[%s1312] sm:$0xff]
                  %1315 = vst [vmem:[%s1313] sm:$0xff] %v1314
                  %s1316 = sadd.s32 1, %s1311
                  %p1317 = scmp.ge.s32.totalorder %s1316, %s1299
                  %s1318 = scalar_select %p1317, 0, %s1316
                  %s1319 = smul.u32 %s1318, 8
                  %s1320 = smul.u32 %s1318, 8
                  %s1321 = scalar_lea.vmem %s1302, %s1319 [#allocation2]
                  %s1322 = scalar_lea.vmem %s1304, %s1320
                $region78: #{dqn_forward.5} parent=65 // loop_footer
                  %s1308 = sadd.s32 %s1306, 1
                $region79: #{dqn_forward.5} parent=65 // loop_footer_branch
                  %1305 = sbr.rel target = $region75
                $region80: #{dqn_forward.5} parent=65 // loop_exit
                  _
              $region66: #{dqn_forward.5} parent=43 // pred_fallthru
                _
              // Predicated region
              $region81: #{dqn_forward.5} parent=43 // pred_check
                _
              $region82: #{dqn_forward.5} parent=43 // pred_check_branch
                %1324 = sbr.rel target = $region84
              $region83: #{dqn_forward.5} parent=43 // pred_region
                _
              $region84: #{dqn_forward.5} parent=43 // pred_fallthru
                _
            $region44: #{dqn_forward.5} parent=39 // pred_fallthru
              _
            // Predicated region
            $region45: #{dqn_forward.5} parent=39 // pred_check
              _
            $region46: #{dqn_forward.5} parent=39 // pred_check_branch
              %1080 = sbr.rel target = $region48
            $region47: #{dqn_forward.5} parent=39 // pred_region
              %s1082 = ssub.s32 256, 1
              %s1083 = sdiv.u32.pop %s1069, 38
              %s1084 = srem.u32.pop %s1069, 38
              // While loop
              $region49: #{dqn_forward.5} parent=47 // loop_pre_header
                _
              $region50: #{dqn_forward.5} parent=47 // loop_header
                %s1086 = sphi 0, %s1088
                %p1087 = scmp.ge.s32.totalorder %s1086, %s1083
                %s1091 = sphi 0, %s1172
                %s1092 = sphi %s1062, %s1175
                %s1093 = sphi %s1073, %s1176
              $region51: #{dqn_forward.5} parent=47 // loop_header_branch
                %1090 = sbr.rel (%p1087) target = $region55
              $region52: #{dqn_forward.5} parent=47 // loop_body
                %v1094 = vld [vmem:[%s1092] sm:%s1082]
                %1095 = vst [vmem:[%s1093] sm:%s1082] %v1094
                %v1096 = vld [vmem:[%s1092 + $0x8] sm:%s1082]
                %1097 = vst [vmem:[%s1093 + $0x8] sm:%s1082] %v1096
                %v1098 = vld [vmem:[%s1092 + $0x10] sm:%s1082]
                %1099 = vst [vmem:[%s1093 + $0x10] sm:%s1082] %v1098
                %v1100 = vld [vmem:[%s1092 + $0x18] sm:%s1082]
                %1101 = vst [vmem:[%s1093 + $0x18] sm:%s1082] %v1100
                %v1102 = vld [vmem:[%s1092 + $0x20] sm:%s1082]
                %1103 = vst [vmem:[%s1093 + $0x20] sm:%s1082] %v1102
                %v1104 = vld [vmem:[%s1092 + $0x28] sm:%s1082]
                %1105 = vst [vmem:[%s1093 + $0x28] sm:%s1082] %v1104
                %v1106 = vld [vmem:[%s1092 + $0x30] sm:%s1082]
                %1107 = vst [vmem:[%s1093 + $0x30] sm:%s1082] %v1106
                %v1108 = vld [vmem:[%s1092 + $0x38] sm:%s1082]
                %1109 = vst [vmem:[%s1093 + $0x38] sm:%s1082] %v1108
                %v1110 = vld [vmem:[%s1092 + $0x40] sm:%s1082]
                %1111 = vst [vmem:[%s1093 + $0x40] sm:%s1082] %v1110
                %v1112 = vld [vmem:[%s1092 + $0x48] sm:%s1082]
                %1113 = vst [vmem:[%s1093 + $0x48] sm:%s1082] %v1112
                %v1114 = vld [vmem:[%s1092 + $0x50] sm:%s1082]
                %1115 = vst [vmem:[%s1093 + $0x50] sm:%s1082] %v1114
                %v1116 = vld [vmem:[%s1092 + $0x58] sm:%s1082]
                %1117 = vst [vmem:[%s1093 + $0x58] sm:%s1082] %v1116
                %v1118 = vld [vmem:[%s1092 + $0x60] sm:%s1082]
                %1119 = vst [vmem:[%s1093 + $0x60] sm:%s1082] %v1118
                %v1120 = vld [vmem:[%s1092 + $0x68] sm:%s1082]
                %1121 = vst [vmem:[%s1093 + $0x68] sm:%s1082] %v1120
                %v1122 = vld [vmem:[%s1092 + $0x70] sm:%s1082]
                %1123 = vst [vmem:[%s1093 + $0x70] sm:%s1082] %v1122
                %v1124 = vld [vmem:[%s1092 + $0x78] sm:%s1082]
                %1125 = vst [vmem:[%s1093 + $0x78] sm:%s1082] %v1124
                %v1126 = vld [vmem:[%s1092 + $0x80] sm:%s1082]
                %1127 = vst [vmem:[%s1093 + $0x80] sm:%s1082] %v1126
                %v1128 = vld [vmem:[%s1092 + $0x88] sm:%s1082]
                %1129 = vst [vmem:[%s1093 + $0x88] sm:%s1082] %v1128
                %v1130 = vld [vmem:[%s1092 + $0x90] sm:%s1082]
                %1131 = vst [vmem:[%s1093 + $0x90] sm:%s1082] %v1130
                %v1132 = vld [vmem:[%s1092 + $0x98] sm:%s1082]
                %1133 = vst [vmem:[%s1093 + $0x98] sm:%s1082] %v1132
                %v1134 = vld [vmem:[%s1092 + $0xa0] sm:%s1082]
                %1135 = vst [vmem:[%s1093 + $0xa0] sm:%s1082] %v1134
                %v1136 = vld [vmem:[%s1092 + $0xa8] sm:%s1082]
                %1137 = vst [vmem:[%s1093 + $0xa8] sm:%s1082] %v1136
                %v1138 = vld [vmem:[%s1092 + $0xb0] sm:%s1082]
                %1139 = vst [vmem:[%s1093 + $0xb0] sm:%s1082] %v1138
                %v1140 = vld [vmem:[%s1092 + $0xb8] sm:%s1082]
                %1141 = vst [vmem:[%s1093 + $0xb8] sm:%s1082] %v1140
                %v1142 = vld [vmem:[%s1092 + $0xc0] sm:%s1082]
                %1143 = vst [vmem:[%s1093 + $0xc0] sm:%s1082] %v1142
                %v1144 = vld [vmem:[%s1092 + $0xc8] sm:%s1082]
                %1145 = vst [vmem:[%s1093 + $0xc8] sm:%s1082] %v1144
                %v1146 = vld [vmem:[%s1092 + $0xd0] sm:%s1082]
                %1147 = vst [vmem:[%s1093 + $0xd0] sm:%s1082] %v1146
                %v1148 = vld [vmem:[%s1092 + $0xd8] sm:%s1082]
                %1149 = vst [vmem:[%s1093 + $0xd8] sm:%s1082] %v1148
                %v1150 = vld [vmem:[%s1092 + $0xe0] sm:%s1082]
                %1151 = vst [vmem:[%s1093 + $0xe0] sm:%s1082] %v1150
                %v1152 = vld [vmem:[%s1092 + $0xe8] sm:%s1082]
                %1153 = vst [vmem:[%s1093 + $0xe8] sm:%s1082] %v1152
                %v1154 = vld [vmem:[%s1092 + $0xf0] sm:%s1082]
                %1155 = vst [vmem:[%s1093 + $0xf0] sm:%s1082] %v1154
                %v1156 = vld [vmem:[%s1092 + $0xf8] sm:%s1082]
                %1157 = vst [vmem:[%s1093 + $0xf8] sm:%s1082] %v1156
                %v1158 = vld [vmem:[%s1092 + $0x100] sm:%s1082]
                %1159 = vst [vmem:[%s1093 + $0x100] sm:%s1082] %v1158
                %v1160 = vld [vmem:[%s1092 + $0x108] sm:%s1082]
                %1161 = vst [vmem:[%s1093 + $0x108] sm:%s1082] %v1160
                %v1162 = vld [vmem:[%s1092 + $0x110] sm:%s1082]
                %1163 = vst [vmem:[%s1093 + $0x110] sm:%s1082] %v1162
                %v1164 = vld [vmem:[%s1092 + $0x118] sm:%s1082]
                %1165 = vst [vmem:[%s1093 + $0x118] sm:%s1082] %v1164
                %v1166 = vld [vmem:[%s1092 + $0x120] sm:%s1082]
                %1167 = vst [vmem:[%s1093 + $0x120] sm:%s1082] %v1166
                %v1168 = vld [vmem:[%s1092 + $0x128] sm:%s1082]
                %1169 = vst [vmem:[%s1093 + $0x128] sm:%s1082] %v1168
                %s1170 = sadd.s32 1, %s1091
                %p1171 = scmp.ge.s32.totalorder %s1170, %s1083
                %s1172 = scalar_select %p1171, 0, %s1170
                %s1173 = smul.u32 %s1172, 304
                %s1174 = smul.u32 %s1172, 304
                %s1175 = scalar_lea.vmem %s1062, %s1173 [#allocation2]
                %s1176 = scalar_lea.vmem %s1073, %s1174
              $region53: #{dqn_forward.5} parent=47 // loop_footer
                %s1088 = sadd.s32 %s1086, 1
              $region54: #{dqn_forward.5} parent=47 // loop_footer_branch
                %1085 = sbr.rel target = $region50
              $region55: #{dqn_forward.5} parent=47 // loop_exit
                _
              %s1177 = sdiv.u32.pop %s1069, 38
              %s1178 = srem.u32.pop %s1069, 38
              %s1179 = smul.u32 %s1177, 38
              %s1180 = smul.u32 8, %s1179
              %s1181 = scalar_lea.vmem %s1062, %s1180 [#allocation2]
              %s1182 = smul.u32 8, %s1179
              %s1183 = scalar_lea.vmem %s1073, %s1182
              // While loop
              $region56: #{dqn_forward.5} parent=47 // loop_pre_header
                _
              $region57: #{dqn_forward.5} parent=47 // loop_header
                %s1185 = sphi 0, %s1187
                %p1186 = scmp.ge.s32.totalorder %s1185, %s1178
                %s1190 = sphi 0, %s1197
                %s1191 = sphi %s1181, %s1200
                %s1192 = sphi %s1183, %s1201
              $region58: #{dqn_forward.5} parent=47 // loop_header_branch
                %1189 = sbr.rel (%p1186) target = $region62
              $region59: #{dqn_forward.5} parent=47 // loop_body
                %v1193 = vld [vmem:[%s1191] sm:%s1082]
                %1194 = vst [vmem:[%s1192] sm:%s1082] %v1193
                %s1195 = sadd.s32 1, %s1190
                %p1196 = scmp.ge.s32.totalorder %s1195, %s1178
                %s1197 = scalar_select %p1196, 0, %s1195
                %s1198 = smul.u32 %s1197, 8
                %s1199 = smul.u32 %s1197, 8
                %s1200 = scalar_lea.vmem %s1181, %s1198 [#allocation2]
                %s1201 = scalar_lea.vmem %s1183, %s1199
              $region60: #{dqn_forward.5} parent=47 // loop_footer
                %s1187 = sadd.s32 %s1185, 1
              $region61: #{dqn_forward.5} parent=47 // loop_footer_branch
                %1184 = sbr.rel target = $region57
              $region62: #{dqn_forward.5} parent=47 // loop_exit
                _
            $region48: #{dqn_forward.5} parent=39 // pred_fallthru
              _
          $region40: #{dqn_forward.5} parent=35 // pred_fallthru
            _
          %1325 = vnop
        $region36: #{dqn_forward.5} parent=31 // pred_fallthru
          _
      $region32: #{dqn_forward.5} parent=5 // pred_fallthru
        _
      %p1326 = scmp.le.s32.totalorder 2, %s9
      // Predicated region
      $region85: #{dqn_forward.5} parent=5 // pred_check
        %p1327 = pneg %p1326
      $region86: #{dqn_forward.5} parent=5 // pred_check_branch
        %1329 = sbr.rel (%p1327) target = $region88
      $region87: #{dqn_forward.5} parent=5 // pred_region
        %s1330 = ssub.s32 %s9, 2
        // Predicated region
        $region89: #{dqn_forward.5} parent=87 // pred_check
          %p1331 = pneg %p106
        $region90: #{dqn_forward.5} parent=87 // pred_check_branch
          %1333 = sbr.rel (%p1331) target = $region92
        $region91: #{dqn_forward.5} parent=87 // pred_region
          %s1334 = sand.u32 %s91, 1
          %s1335 = sand.u32 %s91, 1
          %s1336 = smul.addr %s1335, 304
          %s1337 = scalar_lea.vmem [#allocation2], %s1336
        $region92: #{dqn_forward.5} parent=87 // pred_fallthru
          _
      $region88: #{dqn_forward.5} parent=5 // pred_fallthru
        _
    $region6: #{dqn_forward.5} parent=1 // loop_footer
      %s13 = sadd.s32 1, %s9
    $region7: #{dqn_forward.5} parent=1 // loop_footer_branch
      %8 = sbr.rel target = $region3
    $region8: #{dqn_forward.5} parent=1 // loop_exit
      _

// kernel: dqn_forward.6
$region0: #{dqn_forward.6}
  #allocation0 [shape = 'u32[]', space=smem, size = 0x4, offset = 0x4, fixed_abs, tag = 'smem constant byte address 0x4 - core index']
  #allocation1 [shape = 'u32[144,128]{1,0:T(1,128)}', space=vmem, size = 0x12000, scoped, tag = 'internal scratch']
  %s0 = inlined_call_operand.vmem [shape: f32[24,1600], index: 0, kind: input, shape index: {}]
  %s1 = inlined_call_operand.vmem [shape: f32[1600,64], index: 1, kind: input, shape index: {}]
  %s2 = inlined_call_operand.vmem [shape: f32[1,64], index: 2, kind: input, shape index: {}]
  %s3 = inlined_call_operand.vmem [shape: f32[24,64], index: 3, kind: output, shape index: {}]
  %s4 = sld [smem:[#allocation0]]
  $region22: #{dqn_forward.6} parent=0
    _
  %s6 = ssub.s32 1, %s4
  %s7 = scalar_select 0, %s6, %s4
  // Predicated region
  $region2: #{dqn_forward.6} parent=0 // pred_check
    _
  $region3: #{dqn_forward.6} parent=0 // pred_check_branch
    %9 = sbr.rel (0) target = $region5
  $region4: #{dqn_forward.6} parent=0 // pred_region
    _
  $region5: #{dqn_forward.6} parent=0 // pred_fallthru
    _
  // Predicated region
  $region6: #{dqn_forward.6} parent=0 // pred_check
    _
  $region7: #{dqn_forward.6} parent=0 // pred_check_branch
    %11 = sbr.rel (0) target = $region9
  $region8: #{dqn_forward.6} parent=0 // pred_region
    _
  $region9: #{dqn_forward.6} parent=0 // pred_fallthru
    _
  // Predicated region
  $region10: #{dqn_forward.6} parent=0 // pred_check
    _
  $region11: #{dqn_forward.6} parent=0 // pred_check_branch
    %13 = sbr.rel (0) target = $region13
  $region12: #{dqn_forward.6} parent=0 // pred_region
    _
  $region13: #{dqn_forward.6} parent=0 // pred_fallthru
    _
  %v14 = vld [vmem:[%s0] sm:$0xff]
  %v15 = vld [vmem:[%s0 + $0x8] sm:$0xff]
  %v16 = vld [vmem:[%s0 + $0x10] sm:$0xff]
  %v17 = vld [vmem:[%s0 + $0x18] sm:$0xff]
  %v18 = vld [vmem:[%s0 + $0x20] sm:$0xff]
  %v19 = vld [vmem:[%s0 + $0x28] sm:$0xff]
  %v20 = vld [vmem:[%s0 + $0x30] sm:$0xff]
  %v21 = vld [vmem:[%s0 + $0x38] sm:$0xff]
  %v22 = vld [vmem:[%s0 + $0x40] sm:$0xff]
  %v23 = vld [vmem:[%s0 + $0x48] sm:$0xff]
  %v24 = vld [vmem:[%s0 + $0x50] sm:$0xff]
  %v25 = vld [vmem:[%s0 + $0x58] sm:$0xff]
  %v26 = vld [vmem:[%s0 + $0x60] sm:$0xff]
  %v27 = vld [vmem:[%s0 + $0x68] sm:$0xff]
  %v28 = vld [vmem:[%s0 + $0x70] sm:$0xff]
  %v29 = vld [vmem:[%s0 + $0x78] sm:$0xff]
  %v30 = vld [vmem:[%s0 + $0x80] sm:$0xff]
  %v31 = vld [vmem:[%s0 + $0x88] sm:$0xff]
  %v32 = vld [vmem:[%s0 + $0x90] sm:$0xff]
  %v33 = vld [vmem:[%s0 + $0x98] sm:$0xff]
  %v34 = vld [vmem:[%s0 + $0xa0] sm:$0xff]
  %v35 = vld [vmem:[%s0 + $0xa8] sm:$0xff]
  %v36 = vld [vmem:[%s0 + $0xb0] sm:$0xff]
  %v37 = vld [vmem:[%s0 + $0xb8] sm:$0xff]
  %v38 = vld [vmem:[%s0 + $0xc0] sm:$0xff]
  %v39 = vld [vmem:[%s0 + $0xc8] sm:$0xff]
  %v40 = vld [vmem:[%s0 + $0xd0] sm:$0xff]
  %v41 = vld [vmem:[%s0 + $0xd8] sm:$0xff]
  %v42 = vld [vmem:[%s0 + $0xe0] sm:$0xff]
  %v43 = vld [vmem:[%s0 + $0xe8] sm:$0xff]
  %v44 = vld [vmem:[%s0 + $0xf0] sm:$0xff]
  %v45 = vld [vmem:[%s0 + $0xf8] sm:$0xff]
  %v46 = vld [vmem:[%s0 + $0x100] sm:$0xff]
  %v47 = vld [vmem:[%s0 + $0x108] sm:$0xff]
  %v48 = vld [vmem:[%s0 + $0x110] sm:$0xff]
  %v49 = vld [vmem:[%s0 + $0x118] sm:$0xff]
  %v50 = vld [vmem:[%s0 + $0x120] sm:$0xff]
  %v51 = vld [vmem:[%s0 + $0x128] sm:$0xff]
  %v52 = vld [vmem:[%s0 + $0x130] sm:$0xff]
  %v53 = vld [vmem:[%s1] sm:$0xff]
  %v54 = vld [vmem:[%s1 + $0x8] sm:$0xff]
  %v55 = vld [vmem:[%s1 + $0x10] sm:$0xff]
  %v56 = vld [vmem:[%s1 + $0x18] sm:$0xff]
  %v57 = vld [vmem:[%s1 + $0x20] sm:$0xff]
  %v58 = vld [vmem:[%s1 + $0x28] sm:$0xff]
  %v59 = vld [vmem:[%s1 + $0x30] sm:$0xff]
  %v60 = vld [vmem:[%s1 + $0x38] sm:$0xff]
  %v61 = vld [vmem:[%s1 + $0x40] sm:$0xff]
  %v62 = vld [vmem:[%s1 + $0x48] sm:$0xff]
  %v63 = vld [vmem:[%s1 + $0x50] sm:$0xff]
  %v64 = vld [vmem:[%s1 + $0x58] sm:$0xff]
  %v65 = vld [vmem:[%s1 + $0x60] sm:$0xff]
  %v66 = vld [vmem:[%s1 + $0x68] sm:$0xff]
  %v67 = vld [vmem:[%s1 + $0x70] sm:$0xff]
  %v68 = vld [vmem:[%s1 + $0x78] sm:$0xff]
  %v69 = vld [vmem:[%s1 + $0x80] sm:$0xff]
  %v70 = vld [vmem:[%s1 + $0x88] sm:$0xff]
  %v71 = vld [vmem:[%s1 + $0x90] sm:$0xff]
  %v72 = vld [vmem:[%s1 + $0x98] sm:$0xff]
  %v73 = vld [vmem:[%s1 + $0xa0] sm:$0xff]
  %v74 = vld [vmem:[%s1 + $0xa8] sm:$0xff]
  %v75 = vld [vmem:[%s1 + $0xb0] sm:$0xff]
  %v76 = vld [vmem:[%s1 + $0xb8] sm:$0xff]
  %v77 = vld [vmem:[%s1 + $0xc0] sm:$0xff]
  %v78 = vld [vmem:[%s1 + $0xc8] sm:$0xff]
  %v79 = vld [vmem:[%s1 + $0xd0] sm:$0xff]
  %v80 = vld [vmem:[%s1 + $0xd8] sm:$0xff]
  %v81 = vld [vmem:[%s1 + $0xe0] sm:$0xff]
  %v82 = vld [vmem:[%s1 + $0xe8] sm:$0xff]
  %v83 = vld [vmem:[%s1 + $0xf0] sm:$0xff]
  %v84 = vld [vmem:[%s1 + $0xf8] sm:$0xff]
  %v85 = vld [vmem:[%s1 + $0x100] sm:$0xff]
  %v86 = vld [vmem:[%s1 + $0x108] sm:$0xff]
  %v87 = vld [vmem:[%s1 + $0x110] sm:$0xff]
  %v88 = vld [vmem:[%s1 + $0x118] sm:$0xff]
  %v89 = vld [vmem:[%s1 + $0x120] sm:$0xff]
  %v90 = vld [vmem:[%s1 + $0x128] sm:$0xff]
  %v91 = vld [vmem:[%s1 + $0x130] sm:$0xff]
  %v92 = vld [vmem:[%s1 + $0x138] sm:$0xff]
  %v93 = vld [vmem:[%s1 + $0x140] sm:$0xff]
  %v94 = vld [vmem:[%s1 + $0x148] sm:$0xff]
  %v95 = vld [vmem:[%s1 + $0x150] sm:$0xff]
  %v96 = vld [vmem:[%s1 + $0x158] sm:$0xff]
  %v97 = vld [vmem:[%s1 + $0x160] sm:$0xff]
  %v98 = vld [vmem:[%s1 + $0x168] sm:$0xff]
  %v99 = vld [vmem:[%s1 + $0x170] sm:$0xff]
  %v100 = vld [vmem:[%s1 + $0x178] sm:$0xff]
  %v101 = vld [vmem:[%s1 + $0x180] sm:$0xff]
  %v102 = vld [vmem:[%s1 + $0x188] sm:$0xff]
  %v103 = vld [vmem:[%s1 + $0x190] sm:$0xff]
  %v104 = vld [vmem:[%s1 + $0x198] sm:$0xff]
  %v105 = vld [vmem:[%s1 + $0x1a0] sm:$0xff]
  %v106 = vld [vmem:[%s1 + $0x1a8] sm:$0xff]
  %v107 = vld [vmem:[%s1 + $0x1b0] sm:$0xff]
  %v108 = vld [vmem:[%s1 + $0x1b8] sm:$0xff]
  %v109 = vld [vmem:[%s1 + $0x1c0] sm:$0xff]
  %v110 = vld [vmem:[%s1 + $0x1c8] sm:$0xff]
  %v111 = vld [vmem:[%s1 + $0x1d0] sm:$0xff]
  %v112 = vld [vmem:[%s1 + $0x1d8] sm:$0xff]
  %v113 = vld [vmem:[%s1 + $0x1e0] sm:$0xff]
  %v114 = vld [vmem:[%s1 + $0x1e8] sm:$0xff]
  %v115 = vld [vmem:[%s1 + $0x1f0] sm:$0xff]
  %v116 = vld [vmem:[%s1 + $0x1f8] sm:$0xff]
  %v117 = vld [vmem:[%s1 + $0x200] sm:$0xff]
  %v118 = vld [vmem:[%s1 + $0x208] sm:$0xff]
  %v119 = vld [vmem:[%s1 + $0x210] sm:$0xff]
  %v120 = vld [vmem:[%s1 + $0x218] sm:$0xff]
  %v121 = vld [vmem:[%s1 + $0x220] sm:$0xff]
  %v122 = vld [vmem:[%s1 + $0x228] sm:$0xff]
  %v123 = vld [vmem:[%s1 + $0x230] sm:$0xff]
  %v124 = vld [vmem:[%s1 + $0x238] sm:$0xff]
  %v125 = vld [vmem:[%s1 + $0x240] sm:$0xff]
  %v126 = vld [vmem:[%s1 + $0x248] sm:$0xff]
  %v127 = vld [vmem:[%s1 + $0x250] sm:$0xff]
  %v128 = vld [vmem:[%s1 + $0x258] sm:$0xff]
  %v129 = vld [vmem:[%s1 + $0x260] sm:$0xff]
  %v130 = vld [vmem:[%s1 + $0x268] sm:$0xff]
  %v131 = vld [vmem:[%s1 + $0x270] sm:$0xff]
  %v132 = vld [vmem:[%s1 + $0x278] sm:$0xff]
  %v133 = vld [vmem:[%s1 + $0x280] sm:$0xff]
  %v134 = vld [vmem:[%s1 + $0x288] sm:$0xff]
  %v135 = vld [vmem:[%s1 + $0x290] sm:$0xff]
  %v136 = vld [vmem:[%s1 + $0x298] sm:$0xff]
  %v137 = vld [vmem:[%s1 + $0x2a0] sm:$0xff]
  %v138 = vld [vmem:[%s1 + $0x2a8] sm:$0xff]
  %v139 = vld [vmem:[%s1 + $0x2b0] sm:$0xff]
  %v140 = vld [vmem:[%s1 + $0x2b8] sm:$0xff]
  %v141 = vld [vmem:[%s1 + $0x2c0] sm:$0xff]
  %v142 = vld [vmem:[%s1 + $0x2c8] sm:$0xff]
  %v143 = vld [vmem:[%s1 + $0x2d0] sm:$0xff]
  %v144 = vld [vmem:[%s1 + $0x2d8] sm:$0xff]
  %v145 = vld [vmem:[%s1 + $0x2e0] sm:$0xff]
  %v146 = vld [vmem:[%s1 + $0x2e8] sm:$0xff]
  %v147 = vld [vmem:[%s1 + $0x2f0] sm:$0xff]
  %v148 = vld [vmem:[%s1 + $0x2f8] sm:$0xff]
  %v149 = vld [vmem:[%s1 + $0x300] sm:$0xff]
  %v150 = vld [vmem:[%s1 + $0x308] sm:$0xff]
  %v151 = vld [vmem:[%s1 + $0x310] sm:$0xff]
  %v152 = vld [vmem:[%s1 + $0x318] sm:$0xff]
  %v153 = vld [vmem:[%s1 + $0x320] sm:$0xff]
  %v154 = vld [vmem:[%s1 + $0x328] sm:$0xff]
  %v155 = vld [vmem:[%s1 + $0x330] sm:$0xff]
  %v156 = vld [vmem:[%s1 + $0x338] sm:$0xff]
  %v157 = vld [vmem:[%s1 + $0x340] sm:$0xff]
  %v158 = vld [vmem:[%s1 + $0x348] sm:$0xff]
  %v159 = vld [vmem:[%s1 + $0x350] sm:$0xff]
  %v160 = vld [vmem:[%s1 + $0x358] sm:$0xff]
  %v161 = vld [vmem:[%s1 + $0x360] sm:$0xff]
  %v162 = vld [vmem:[%s1 + $0x368] sm:$0xff]
  %v163 = vld [vmem:[%s1 + $0x370] sm:$0xff]
  %v164 = vld [vmem:[%s1 + $0x378] sm:$0xff]
  %v165 = vld [vmem:[%s1 + $0x380] sm:$0xff]
  %v166 = vld [vmem:[%s1 + $0x388] sm:$0xff]
  %v167 = vld [vmem:[%s1 + $0x390] sm:$0xff]
  %v168 = vld [vmem:[%s1 + $0x398] sm:$0xff]
  %v169 = vld [vmem:[%s1 + $0x3a0] sm:$0xff]
  %v170 = vld [vmem:[%s1 + $0x3a8] sm:$0xff]
  %v171 = vld [vmem:[%s1 + $0x3b0] sm:$0xff]
  %v172 = vld [vmem:[%s1 + $0x3b8] sm:$0xff]
  %v173 = vld [vmem:[%s1 + $0x3c0] sm:$0xff]
  %v174 = vld [vmem:[%s1 + $0x3c8] sm:$0xff]
  %v175 = vld [vmem:[%s1 + $0x3d0] sm:$0xff]
  %v176 = vld [vmem:[%s1 + $0x3d8] sm:$0xff]
  %v177 = vld [vmem:[%s1 + $0x3e0] sm:$0xff]
  %v178 = vld [vmem:[%s1 + $0x3e8] sm:$0xff]
  %v179 = vld [vmem:[%s1 + $0x3f0] sm:$0xff]
  %v180 = vld [vmem:[%s1 + $0x3f8] sm:$0xff]
  %v181 = vld [vmem:[%s1 + $0x400] sm:$0xff]
  %v182 = vld [vmem:[%s1 + $0x408] sm:$0xff]
  %v183 = vld [vmem:[%s1 + $0x410] sm:$0xff]
  %v184 = vld [vmem:[%s1 + $0x418] sm:$0xff]
  %v185 = vld [vmem:[%s1 + $0x420] sm:$0xff]
  %v186 = vld [vmem:[%s1 + $0x428] sm:$0xff]
  %v187 = vld [vmem:[%s1 + $0x430] sm:$0xff]
  %v188 = vld [vmem:[%s1 + $0x438] sm:$0xff]
  %v189 = vld [vmem:[%s1 + $0x440] sm:$0xff]
  %v190 = vld [vmem:[%s1 + $0x448] sm:$0xff]
  %v191 = vld [vmem:[%s1 + $0x450] sm:$0xff]
  %v192 = vld [vmem:[%s1 + $0x458] sm:$0xff]
  %v193 = vld [vmem:[%s1 + $0x460] sm:$0xff]
  %v194 = vld [vmem:[%s1 + $0x468] sm:$0xff]
  %v195 = vld [vmem:[%s1 + $0x470] sm:$0xff]
  %v196 = vld [vmem:[%s1 + $0x478] sm:$0xff]
  %v197 = vld [vmem:[%s1 + $0x480] sm:$0xff]
  %v198 = vld [vmem:[%s1 + $0x488] sm:$0xff]
  %v199 = vld [vmem:[%s1 + $0x490] sm:$0xff]
  %v200 = vld [vmem:[%s1 + $0x498] sm:$0xff]
  %v201 = vld [vmem:[%s1 + $0x4a0] sm:$0xff]
  %v202 = vld [vmem:[%s1 + $0x4a8] sm:$0xff]
  %v203 = vld [vmem:[%s1 + $0x4b0] sm:$0xff]
  %v204 = vld [vmem:[%s1 + $0x4b8] sm:$0xff]
  %v205 = vld [vmem:[%s1 + $0x4c0] sm:$0xff]
  %v206 = vld [vmem:[%s1 + $0x4c8] sm:$0xff]
  %v207 = vld [vmem:[%s1 + $0x4d0] sm:$0xff]
  %v208 = vld [vmem:[%s1 + $0x4d8] sm:$0xff]
  %v209 = vld [vmem:[%s1 + $0x4e0] sm:$0xff]
  %v210 = vld [vmem:[%s1 + $0x4e8] sm:$0xff]
  %v211 = vld [vmem:[%s1 + $0x4f0] sm:$0xff]
  %v212 = vld [vmem:[%s1 + $0x4f8] sm:$0xff]
  %v213 = vld [vmem:[%s1 + $0x500] sm:$0xff]
  %v214 = vld [vmem:[%s1 + $0x508] sm:$0xff]
  %v215 = vld [vmem:[%s1 + $0x510] sm:$0xff]
  %v216 = vld [vmem:[%s1 + $0x518] sm:$0xff]
  %v217 = vld [vmem:[%s1 + $0x520] sm:$0xff]
  %v218 = vld [vmem:[%s1 + $0x528] sm:$0xff]
  %v219 = vld [vmem:[%s1 + $0x530] sm:$0xff]
  %v220 = vld [vmem:[%s1 + $0x538] sm:$0xff]
  %v221 = vld [vmem:[%s1 + $0x540] sm:$0xff]
  %v222 = vld [vmem:[%s1 + $0x548] sm:$0xff]
  %v223 = vld [vmem:[%s1 + $0x550] sm:$0xff]
  %v224 = vld [vmem:[%s1 + $0x558] sm:$0xff]
  %v225 = vld [vmem:[%s1 + $0x560] sm:$0xff]
  %v226 = vld [vmem:[%s1 + $0x568] sm:$0xff]
  %v227 = vld [vmem:[%s1 + $0x570] sm:$0xff]
  %v228 = vld [vmem:[%s1 + $0x578] sm:$0xff]
  %v229 = vld [vmem:[%s1 + $0x580] sm:$0xff]
  %v230 = vld [vmem:[%s1 + $0x588] sm:$0xff]
  %v231 = vld [vmem:[%s1 + $0x590] sm:$0xff]
  %v232 = vld [vmem:[%s1 + $0x598] sm:$0xff]
  %v233 = vld [vmem:[%s1 + $0x5a0] sm:$0xff]
  %v234 = vld [vmem:[%s1 + $0x5a8] sm:$0xff]
  %v235 = vld [vmem:[%s1 + $0x5b0] sm:$0xff]
  %v236 = vld [vmem:[%s1 + $0x5b8] sm:$0xff]
  %v237 = vld [vmem:[%s1 + $0x5c0] sm:$0xff]
  %v238 = vld [vmem:[%s1 + $0x5c8] sm:$0xff]
  %v239 = vld [vmem:[%s1 + $0x5d0] sm:$0xff]
  %v240 = vld [vmem:[%s1 + $0x5d8] sm:$0xff]
  %v241 = vld [vmem:[%s1 + $0x5e0] sm:$0xff]
  %v242 = vld [vmem:[%s1 + $0x5e8] sm:$0xff]
  %v243 = vld [vmem:[%s1 + $0x5f0] sm:$0xff]
  %v244 = vld [vmem:[%s1 + $0x5f8] sm:$0xff]
  %v245 = vld [vmem:[%s1 + $0x600] sm:$0xff]
  %v246 = vld [vmem:[%s1 + $0x608] sm:$0xff]
  %v247 = vld [vmem:[%s1 + $0x610] sm:$0xff]
  %v248 = vld [vmem:[%s1 + $0x618] sm:$0xff]
  %v249 = vld [vmem:[%s1 + $0x620] sm:$0xff]
  %v250 = vld [vmem:[%s1 + $0x628] sm:$0xff]
  %v251 = vld [vmem:[%s1 + $0x630] sm:$0xff]
  %v252 = vld [vmem:[%s1 + $0x638] sm:$0xff]
  %v253 = vld [vmem:[%s2] sm:$0x1]
  %v255 = vlaneseq
  %v256 = vshrl.u32 %v255, 7
  %v257 = vsub.s32 0, %v256
  %v258 = vrot.slane %v253, %v257
  %vm260 = vcmask 523264
  %v262 = vsel %vm260, %v26, 0
  %v265 = vsel %vm260, %v39, 0
  %v268 = vsel %vm260, %v52, 0
  %270 = vmatprep.subr.mxu0 0.0
  %271 = vmatpush1.msra.mxu0 %v68
  %272 = vmatprep.subr.mxu0 0.0
  %273 = vmatpush1.msra.mxu0 %v67
  %274 = vmatprep.subr.mxu0 0.0
  %275 = vmatpush1.msra.mxu0 %v66
  %276 = vmatprep.subr.mxu0 0.0
  %277 = vmatpush1.msra.mxu0 %v65
  %278 = vmatprep.subr.mxu0 0.0
  %279 = vmatpush1.msra.mxu0 %v64
  %280 = vmatprep.subr.mxu0 0.0
  %281 = vmatpush1.msra.mxu0 %v63
  %282 = vmatprep.subr.mxu0 0.0
  %283 = vmatpush1.msra.mxu0 %v62
  %284 = vmatprep.subr.mxu0 0.0
  %285 = vmatpush1.msra.mxu0 %v61
  %286 = vmatprep.subr.mxu0 0.0
  %287 = vmatpush1.msra.mxu0 %v60
  %288 = vmatprep.subr.mxu0 0.0
  %289 = vmatpush1.msra.mxu0 %v59
  %290 = vmatprep.subr.mxu0 0.0
  %291 = vmatpush1.msra.mxu0 %v58
  %292 = vmatprep.subr.mxu0 0.0
  %293 = vmatpush1.msra.mxu0 %v57
  %294 = vmatprep.subr.mxu0 0.0
  %295 = vmatpush1.msra.mxu0 %v56
  %296 = vmatprep.subr.mxu0 0.0
  %297 = vmatpush1.msra.mxu0 %v55
  %298 = vmatprep.subr.mxu0 0.0
  %299 = vmatpush1.msra.mxu0 %v54
  %300 = vmatprep.subr.mxu0 0.0
  %301 = vmatpush1.msra.mxu0 %v53
  %302 = vmatprep.subr.mxu0 0.0
  %303 = vmatpush2.msra.mxu0 %v84
  %304 = vmatprep.subr.mxu0 0.0
  %305 = vmatpush2.msra.mxu0 %v83
  %306 = vmatprep.subr.mxu0 0.0
  %307 = vmatpush2.msra.mxu0 %v82
  %308 = vmatprep.subr.mxu0 0.0
  %309 = vmatpush2.msra.mxu0 %v81
  %310 = vmatprep.subr.mxu0 0.0
  %311 = vmatpush2.msra.mxu0 %v80
  %312 = vmatprep.subr.mxu0 0.0
  %313 = vmatpush2.msra.mxu0 %v79
  %314 = vmatprep.subr.mxu0 0.0
  %315 = vmatpush2.msra.mxu0 %v78
  %316 = vmatprep.subr.mxu0 0.0
  %317 = vmatpush2.msra.mxu0 %v77
  %318 = vmatprep.subr.mxu0 0.0
  %319 = vmatpush2.msra.mxu0 %v76
  %320 = vmatprep.subr.mxu0 0.0
  %321 = vmatpush2.msra.mxu0 %v75
  %322 = vmatprep.subr.mxu0 0.0
  %323 = vmatpush2.msra.mxu0 %v74
  %324 = vmatprep.subr.mxu0 0.0
  %325 = vmatpush2.msra.mxu0 %v73
  %326 = vmatprep.subr.mxu0 0.0
  %327 = vmatpush2.msra.mxu0 %v72
  %328 = vmatprep.subr.mxu0 0.0
  %329 = vmatpush2.msra.mxu0 %v71
  %330 = vmatprep.subr.mxu0 0.0
  %331 = vmatpush2.msra.mxu0 %v70
  %332 = vmatprep.subr.mxu0 0.0
  %333 = vmatpush2.msra.mxu0 %v69
  %334 = vmatprep.mubr.f32.mxu0 %v15
  %335 = vmatmul.mubr.f32.gmra.mxu0 %v14
  %v336 = vpop.f32.mrf.mxu0
  %v337 = vadd.f32 %v258, %v336
  %v338 = vpop.f32.mrf.mxu0
  %339 = vmatprep.mubr.f32.mxu0 %v28
  %340 = vmatmul.mubr.f32.gmra.mxu0 %v27
  %v341 = vpop.f32.mrf.mxu0
  %v342 = vadd.f32 %v258, %v341
  %v343 = vpop.f32.mrf.mxu0
  %344 = vmatprep.mubr.f32.mxu0 %v41
  %345 = vmatmul.mubr.f32.gmra.mxu0 %v40
  %v346 = vpop.f32.mrf.mxu0
  %v347 = vadd.f32 %v258, %v346
  %v348 = vpop.f32.mrf.mxu0
  %349 = vdwg.mxu0
  %350 = vmatprep.subr.mxu0 0.0
  %351 = vmatpush1.msra.mxu0 %v100
  %352 = vmatprep.subr.mxu0 0.0
  %353 = vmatpush1.msra.mxu0 %v99
  %354 = vmatprep.subr.mxu0 0.0
  %355 = vmatpush1.msra.mxu0 %v98
  %356 = vmatprep.subr.mxu0 0.0
  %357 = vmatpush1.msra.mxu0 %v97
  %358 = vmatprep.subr.mxu0 0.0
  %359 = vmatpush1.msra.mxu0 %v96
  %360 = vmatprep.subr.mxu0 0.0
  %361 = vmatpush1.msra.mxu0 %v95
  %362 = vmatprep.subr.mxu0 0.0
  %363 = vmatpush1.msra.mxu0 %v94
  %364 = vmatprep.subr.mxu0 0.0
  %365 = vmatpush1.msra.mxu0 %v93
  %366 = vmatprep.subr.mxu0 0.0
  %367 = vmatpush1.msra.mxu0 %v92
  %368 = vmatprep.subr.mxu0 0.0
  %369 = vmatpush1.msra.mxu0 %v91
  %370 = vmatprep.subr.mxu0 0.0
  %371 = vmatpush1.msra.mxu0 %v90
  %372 = vmatprep.subr.mxu0 0.0
  %373 = vmatpush1.msra.mxu0 %v89
  %374 = vmatprep.subr.mxu0 0.0
  %375 = vmatpush1.msra.mxu0 %v88
  %376 = vmatprep.subr.mxu0 0.0
  %377 = vmatpush1.msra.mxu0 %v87
  %378 = vmatprep.subr.mxu0 0.0
  %379 = vmatpush1.msra.mxu0 %v86
  %380 = vmatprep.subr.mxu0 0.0
  %381 = vmatpush1.msra.mxu0 %v85
  %382 = vmatprep.subr.mxu0 0.0
  %383 = vmatpush2.msra.mxu0 %v116
  %384 = vmatprep.subr.mxu0 0.0
  %385 = vmatpush2.msra.mxu0 %v115
  %386 = vmatprep.subr.mxu0 0.0
  %387 = vmatpush2.msra.mxu0 %v114
  %388 = vmatprep.subr.mxu0 0.0
  %389 = vmatpush2.msra.mxu0 %v113
  %390 = vmatprep.subr.mxu0 0.0
  %391 = vmatpush2.msra.mxu0 %v112
  %392 = vmatprep.subr.mxu0 0.0
  %393 = vmatpush2.msra.mxu0 %v111
  %394 = vmatprep.subr.mxu0 0.0
  %395 = vmatpush2.msra.mxu0 %v110
  %396 = vmatprep.subr.mxu0 0.0
  %397 = vmatpush2.msra.mxu0 %v109
  %398 = vmatprep.subr.mxu0 0.0
  %399 = vmatpush2.msra.mxu0 %v108
  %400 = vmatprep.subr.mxu0 0.0
  %401 = vmatpush2.msra.mxu0 %v107
  %402 = vmatprep.subr.mxu0 0.0
  %403 = vmatpush2.msra.mxu0 %v106
  %404 = vmatprep.subr.mxu0 0.0
  %405 = vmatpush2.msra.mxu0 %v105
  %406 = vmatprep.subr.mxu0 0.0
  %407 = vmatpush2.msra.mxu0 %v104
  %408 = vmatprep.subr.mxu0 0.0
  %409 = vmatpush2.msra.mxu0 %v103
  %410 = vmatprep.subr.mxu0 0.0
  %411 = vmatpush2.msra.mxu0 %v102
  %412 = vmatprep.subr.mxu0 0.0
  %413 = vmatpush2.msra.mxu0 %v101
  %414 = vmatprep.mubr.f32.mxu0 %v17
  %415 = vmatmul.mubr.f32.gmra.mxu0 %v16
  %v416 = vpop.f32.mrf.mxu0
  %v417 = vadd.f32 %v337, %v416
  %v418 = vpop.f32.mrf.mxu0
  %419 = vmatprep.mubr.f32.mxu0 %v30
  %420 = vmatmul.mubr.f32.gmra.mxu0 %v29
  %v421 = vpop.f32.mrf.mxu0
  %v422 = vadd.f32 %v342, %v421
  %v423 = vpop.f32.mrf.mxu0
  %424 = vmatprep.mubr.f32.mxu0 %v43
  %425 = vmatmul.mubr.f32.gmra.mxu0 %v42
  %v426 = vpop.f32.mrf.mxu0
  %v427 = vadd.f32 %v347, %v426
  %v428 = vpop.f32.mrf.mxu0
  %429 = vdwg.mxu0
  %430 = vmatprep.subr.mxu0 0.0
  %431 = vmatpush1.msra.mxu0 %v132
  %432 = vmatprep.subr.mxu0 0.0
  %433 = vmatpush1.msra.mxu0 %v131
  %434 = vmatprep.subr.mxu0 0.0
  %435 = vmatpush1.msra.mxu0 %v130
  %436 = vmatprep.subr.mxu0 0.0
  %437 = vmatpush1.msra.mxu0 %v129
  %438 = vmatprep.subr.mxu0 0.0
  %439 = vmatpush1.msra.mxu0 %v128
  %440 = vmatprep.subr.mxu0 0.0
  %441 = vmatpush1.msra.mxu0 %v127
  %442 = vmatprep.subr.mxu0 0.0
  %443 = vmatpush1.msra.mxu0 %v126
  %444 = vmatprep.subr.mxu0 0.0
  %445 = vmatpush1.msra.mxu0 %v125
  %446 = vmatprep.subr.mxu0 0.0
  %447 = vmatpush1.msra.mxu0 %v124
  %448 = vmatprep.subr.mxu0 0.0
  %449 = vmatpush1.msra.mxu0 %v123
  %450 = vmatprep.subr.mxu0 0.0
  %451 = vmatpush1.msra.mxu0 %v122
  %452 = vmatprep.subr.mxu0 0.0
  %453 = vmatpush1.msra.mxu0 %v121
  %454 = vmatprep.subr.mxu0 0.0
  %455 = vmatpush1.msra.mxu0 %v120
  %456 = vmatprep.subr.mxu0 0.0
  %457 = vmatpush1.msra.mxu0 %v119
  %458 = vmatprep.subr.mxu0 0.0
  %459 = vmatpush1.msra.mxu0 %v118
  %460 = vmatprep.subr.mxu0 0.0
  %461 = vmatpush1.msra.mxu0 %v117
  %462 = vmatprep.subr.mxu0 0.0
  %463 = vmatpush2.msra.mxu0 %v148
  %464 = vmatprep.subr.mxu0 0.0
  %465 = vmatpush2.msra.mxu0 %v147
  %466 = vmatprep.subr.mxu0 0.0
  %467 = vmatpush2.msra.mxu0 %v146
  %468 = vmatprep.subr.mxu0 0.0
  %469 = vmatpush2.msra.mxu0 %v145
  %470 = vmatprep.subr.mxu0 0.0
  %471 = vmatpush2.msra.mxu0 %v144
  %472 = vmatprep.subr.mxu0 0.0
  %473 = vmatpush2.msra.mxu0 %v143
  %474 = vmatprep.subr.mxu0 0.0
  %475 = vmatpush2.msra.mxu0 %v142
  %476 = vmatprep.subr.mxu0 0.0
  %477 = vmatpush2.msra.mxu0 %v141
  %478 = vmatprep.subr.mxu0 0.0
  %479 = vmatpush2.msra.mxu0 %v140
  %480 = vmatprep.subr.mxu0 0.0
  %481 = vmatpush2.msra.mxu0 %v139
  %482 = vmatprep.subr.mxu0 0.0
  %483 = vmatpush2.msra.mxu0 %v138
  %484 = vmatprep.subr.mxu0 0.0
  %485 = vmatpush2.msra.mxu0 %v137
  %486 = vmatprep.subr.mxu0 0.0
  %487 = vmatpush2.msra.mxu0 %v136
  %488 = vmatprep.subr.mxu0 0.0
  %489 = vmatpush2.msra.mxu0 %v135
  %490 = vmatprep.subr.mxu0 0.0
  %491 = vmatpush2.msra.mxu0 %v134
  %492 = vmatprep.subr.mxu0 0.0
  %493 = vmatpush2.msra.mxu0 %v133
  %494 = vmatprep.mubr.f32.mxu0 %v19
  %495 = vmatmul.mubr.f32.gmra.mxu0 %v18
  %v496 = vpop.f32.mrf.mxu0
  %v497 = vadd.f32 %v417, %v496
  %v498 = vpop.f32.mrf.mxu0
  %499 = vmatprep.mubr.f32.mxu0 %v32
  %500 = vmatmul.mubr.f32.gmra.mxu0 %v31
  %v501 = vpop.f32.mrf.mxu0
  %v502 = vadd.f32 %v422, %v501
  %v503 = vpop.f32.mrf.mxu0
  %504 = vmatprep.mubr.f32.mxu0 %v45
  %505 = vmatmul.mubr.f32.gmra.mxu0 %v44
  %v506 = vpop.f32.mrf.mxu0
  %v507 = vadd.f32 %v427, %v506
  %v508 = vpop.f32.mrf.mxu0
  %509 = vdwg.mxu0
  %510 = vmatprep.subr.mxu0 0.0
  %511 = vmatpush1.msra.mxu0 %v164
  %512 = vmatprep.subr.mxu0 0.0
  %513 = vmatpush1.msra.mxu0 %v163
  %514 = vmatprep.subr.mxu0 0.0
  %515 = vmatpush1.msra.mxu0 %v162
  %516 = vmatprep.subr.mxu0 0.0
  %517 = vmatpush1.msra.mxu0 %v161
  %518 = vmatprep.subr.mxu0 0.0
  %519 = vmatpush1.msra.mxu0 %v160
  %520 = vmatprep.subr.mxu0 0.0
  %521 = vmatpush1.msra.mxu0 %v159
  %522 = vmatprep.subr.mxu0 0.0
  %523 = vmatpush1.msra.mxu0 %v158
  %524 = vmatprep.subr.mxu0 0.0
  %525 = vmatpush1.msra.mxu0 %v157
  %526 = vmatprep.subr.mxu0 0.0
  %527 = vmatpush1.msra.mxu0 %v156
  %528 = vmatprep.subr.mxu0 0.0
  %529 = vmatpush1.msra.mxu0 %v155
  %530 = vmatprep.subr.mxu0 0.0
  %531 = vmatpush1.msra.mxu0 %v154
  %532 = vmatprep.subr.mxu0 0.0
  %533 = vmatpush1.msra.mxu0 %v153
  %534 = vmatprep.subr.mxu0 0.0
  %535 = vmatpush1.msra.mxu0 %v152
  %536 = vmatprep.subr.mxu0 0.0
  %537 = vmatpush1.msra.mxu0 %v151
  %538 = vmatprep.subr.mxu0 0.0
  %539 = vmatpush1.msra.mxu0 %v150
  %540 = vmatprep.subr.mxu0 0.0
  %541 = vmatpush1.msra.mxu0 %v149
  %542 = vmatprep.subr.mxu0 0.0
  %543 = vmatpush2.msra.mxu0 %v180
  %544 = vmatprep.subr.mxu0 0.0
  %545 = vmatpush2.msra.mxu0 %v179
  %546 = vmatprep.subr.mxu0 0.0
  %547 = vmatpush2.msra.mxu0 %v178
  %548 = vmatprep.subr.mxu0 0.0
  %549 = vmatpush2.msra.mxu0 %v177
  %550 = vmatprep.subr.mxu0 0.0
  %551 = vmatpush2.msra.mxu0 %v176
  %552 = vmatprep.subr.mxu0 0.0
  %553 = vmatpush2.msra.mxu0 %v175
  %554 = vmatprep.subr.mxu0 0.0
  %555 = vmatpush2.msra.mxu0 %v174
  %556 = vmatprep.subr.mxu0 0.0
  %557 = vmatpush2.msra.mxu0 %v173
  %558 = vmatprep.subr.mxu0 0.0
  %559 = vmatpush2.msra.mxu0 %v172
  %560 = vmatprep.subr.mxu0 0.0
  %561 = vmatpush2.msra.mxu0 %v171
  %562 = vmatprep.subr.mxu0 0.0
  %563 = vmatpush2.msra.mxu0 %v170
  %564 = vmatprep.subr.mxu0 0.0
  %565 = vmatpush2.msra.mxu0 %v169
  %566 = vmatprep.subr.mxu0 0.0
  %567 = vmatpush2.msra.mxu0 %v168
  %568 = vmatprep.subr.mxu0 0.0
  %569 = vmatpush2.msra.mxu0 %v167
  %570 = vmatprep.subr.mxu0 0.0
  %571 = vmatpush2.msra.mxu0 %v166
  %572 = vmatprep.subr.mxu0 0.0
  %573 = vmatpush2.msra.mxu0 %v165
  %574 = vmatprep.mubr.f32.mxu0 %v21
  %575 = vmatmul.mubr.f32.gmra.mxu0 %v20
  %v576 = vpop.f32.mrf.mxu0
  %v577 = vadd.f32 %v497, %v576
  %v578 = vpop.f32.mrf.mxu0
  %579 = vmatprep.mubr.f32.mxu0 %v34
  %580 = vmatmul.mubr.f32.gmra.mxu0 %v33
  %v581 = vpop.f32.mrf.mxu0
  %v582 = vadd.f32 %v502, %v581
  %v583 = vpop.f32.mrf.mxu0
  %584 = vmatprep.mubr.f32.mxu0 %v47
  %585 = vmatmul.mubr.f32.gmra.mxu0 %v46
  %v586 = vpop.f32.mrf.mxu0
  %v587 = vadd.f32 %v507, %v586
  %v588 = vpop.f32.mrf.mxu0
  %589 = vdwg.mxu0
  %590 = vmatprep.subr.mxu0 0.0
  %591 = vmatpush1.msra.mxu0 %v196
  %592 = vmatprep.subr.mxu0 0.0
  %593 = vmatpush1.msra.mxu0 %v195
  %594 = vmatprep.subr.mxu0 0.0
  %595 = vmatpush1.msra.mxu0 %v194
  %596 = vmatprep.subr.mxu0 0.0
  %597 = vmatpush1.msra.mxu0 %v193
  %598 = vmatprep.subr.mxu0 0.0
  %599 = vmatpush1.msra.mxu0 %v192
  %600 = vmatprep.subr.mxu0 0.0
  %601 = vmatpush1.msra.mxu0 %v191
  %602 = vmatprep.subr.mxu0 0.0
  %603 = vmatpush1.msra.mxu0 %v190
  %604 = vmatprep.subr.mxu0 0.0
  %605 = vmatpush1.msra.mxu0 %v189
  %606 = vmatprep.subr.mxu0 0.0
  %607 = vmatpush1.msra.mxu0 %v188
  %608 = vmatprep.subr.mxu0 0.0
  %609 = vmatpush1.msra.mxu0 %v187
  %610 = vmatprep.subr.mxu0 0.0
  %611 = vmatpush1.msra.mxu0 %v186
  %612 = vmatprep.subr.mxu0 0.0
  %613 = vmatpush1.msra.mxu0 %v185
  %614 = vmatprep.subr.mxu0 0.0
  %615 = vmatpush1.msra.mxu0 %v184
  %616 = vmatprep.subr.mxu0 0.0
  %617 = vmatpush1.msra.mxu0 %v183
  %618 = vmatprep.subr.mxu0 0.0
  %619 = vmatpush1.msra.mxu0 %v182
  %620 = vmatprep.subr.mxu0 0.0
  %621 = vmatpush1.msra.mxu0 %v181
  %622 = vmatprep.subr.mxu0 0.0
  %623 = vmatpush2.msra.mxu0 %v212
  %624 = vmatprep.subr.mxu0 0.0
  %625 = vmatpush2.msra.mxu0 %v211
  %626 = vmatprep.subr.mxu0 0.0
  %627 = vmatpush2.msra.mxu0 %v210
  %628 = vmatprep.subr.mxu0 0.0
  %629 = vmatpush2.msra.mxu0 %v209
  %630 = vmatprep.subr.mxu0 0.0
  %631 = vmatpush2.msra.mxu0 %v208
  %632 = vmatprep.subr.mxu0 0.0
  %633 = vmatpush2.msra.mxu0 %v207
  %634 = vmatprep.subr.mxu0 0.0
  %635 = vmatpush2.msra.mxu0 %v206
  %636 = vmatprep.subr.mxu0 0.0
  %637 = vmatpush2.msra.mxu0 %v205
  %638 = vmatprep.subr.mxu0 0.0
  %639 = vmatpush2.msra.mxu0 %v204
  %640 = vmatprep.subr.mxu0 0.0
  %641 = vmatpush2.msra.mxu0 %v203
  %642 = vmatprep.subr.mxu0 0.0
  %643 = vmatpush2.msra.mxu0 %v202
  %644 = vmatprep.subr.mxu0 0.0
  %645 = vmatpush2.msra.mxu0 %v201
  %646 = vmatprep.subr.mxu0 0.0
  %647 = vmatpush2.msra.mxu0 %v200
  %648 = vmatprep.subr.mxu0 0.0
  %649 = vmatpush2.msra.mxu0 %v199
  %650 = vmatprep.subr.mxu0 0.0
  %651 = vmatpush2.msra.mxu0 %v198
  %652 = vmatprep.subr.mxu0 0.0
  %653 = vmatpush2.msra.mxu0 %v197
  %654 = vmatprep.mubr.f32.mxu0 %v23
  %655 = vmatmul.mubr.f32.gmra.mxu0 %v22
  %v656 = vpop.f32.mrf.mxu0
  %v657 = vadd.f32 %v577, %v656
  %v658 = vpop.f32.mrf.mxu0
  %659 = vmatprep.mubr.f32.mxu0 %v36
  %660 = vmatmul.mubr.f32.gmra.mxu0 %v35
  %v661 = vpop.f32.mrf.mxu0
  %v662 = vadd.f32 %v582, %v661
  %v663 = vpop.f32.mrf.mxu0
  %664 = vmatprep.mubr.f32.mxu0 %v49
  %665 = vmatmul.mubr.f32.gmra.mxu0 %v48
  %v666 = vpop.f32.mrf.mxu0
  %v667 = vadd.f32 %v587, %v666
  %v668 = vpop.f32.mrf.mxu0
  %669 = vdwg.mxu0
  %670 = vmatprep.subr.mxu0 0.0
  %671 = vmatpush1.msra.mxu0 %v228
  %672 = vmatprep.subr.mxu0 0.0
  %673 = vmatpush1.msra.mxu0 %v227
  %674 = vmatprep.subr.mxu0 0.0
  %675 = vmatpush1.msra.mxu0 %v226
  %676 = vmatprep.subr.mxu0 0.0
  %677 = vmatpush1.msra.mxu0 %v225
  %678 = vmatprep.subr.mxu0 0.0
  %679 = vmatpush1.msra.mxu0 %v224
  %680 = vmatprep.subr.mxu0 0.0
  %681 = vmatpush1.msra.mxu0 %v223
  %682 = vmatprep.subr.mxu0 0.0
  %683 = vmatpush1.msra.mxu0 %v222
  %684 = vmatprep.subr.mxu0 0.0
  %685 = vmatpush1.msra.mxu0 %v221
  %686 = vmatprep.subr.mxu0 0.0
  %687 = vmatpush1.msra.mxu0 %v220
  %688 = vmatprep.subr.mxu0 0.0
  %689 = vmatpush1.msra.mxu0 %v219
  %690 = vmatprep.subr.mxu0 0.0
  %691 = vmatpush1.msra.mxu0 %v218
  %692 = vmatprep.subr.mxu0 0.0
  %693 = vmatpush1.msra.mxu0 %v217
  %694 = vmatprep.subr.mxu0 0.0
  %695 = vmatpush1.msra.mxu0 %v216
  %696 = vmatprep.subr.mxu0 0.0
  %697 = vmatpush1.msra.mxu0 %v215
  %698 = vmatprep.subr.mxu0 0.0
  %699 = vmatpush1.msra.mxu0 %v214
  %700 = vmatprep.subr.mxu0 0.0
  %701 = vmatpush1.msra.mxu0 %v213
  %702 = vmatprep.subr.mxu0 0.0
  %703 = vmatpush2.msra.mxu0 %v244
  %704 = vmatprep.subr.mxu0 0.0
  %705 = vmatpush2.msra.mxu0 %v243
  %706 = vmatprep.subr.mxu0 0.0
  %707 = vmatpush2.msra.mxu0 %v242
  %708 = vmatprep.subr.mxu0 0.0
  %709 = vmatpush2.msra.mxu0 %v241
  %710 = vmatprep.subr.mxu0 0.0
  %711 = vmatpush2.msra.mxu0 %v240
  %712 = vmatprep.subr.mxu0 0.0
  %713 = vmatpush2.msra.mxu0 %v239
  %714 = vmatprep.subr.mxu0 0.0
  %715 = vmatpush2.msra.mxu0 %v238
  %716 = vmatprep.subr.mxu0 0.0
  %717 = vmatpush2.msra.mxu0 %v237
  %718 = vmatprep.subr.mxu0 0.0
  %719 = vmatpush2.msra.mxu0 %v236
  %720 = vmatprep.subr.mxu0 0.0
  %721 = vmatpush2.msra.mxu0 %v235
  %722 = vmatprep.subr.mxu0 0.0
  %723 = vmatpush2.msra.mxu0 %v234
  %724 = vmatprep.subr.mxu0 0.0
  %725 = vmatpush2.msra.mxu0 %v233
  %726 = vmatprep.subr.mxu0 0.0
  %727 = vmatpush2.msra.mxu0 %v232
  %728 = vmatprep.subr.mxu0 0.0
  %729 = vmatpush2.msra.mxu0 %v231
  %730 = vmatprep.subr.mxu0 0.0
  %731 = vmatpush2.msra.mxu0 %v230
  %732 = vmatprep.subr.mxu0 0.0
  %733 = vmatpush2.msra.mxu0 %v229
  %734 = vmatprep.mubr.f32.mxu0 %v25
  %735 = vmatmul.mubr.f32.gmra.mxu0 %v24
  %v736 = vpop.f32.mrf.mxu0
  %v737 = vadd.f32 %v657, %v736
  %v738 = vpop.f32.mrf.mxu0
  %739 = vmatprep.mubr.f32.mxu0 %v38
  %740 = vmatmul.mubr.f32.gmra.mxu0 %v37
  %v741 = vpop.f32.mrf.mxu0
  %v742 = vadd.f32 %v662, %v741
  %v743 = vpop.f32.mrf.mxu0
  %744 = vmatprep.mubr.f32.mxu0 %v51
  %745 = vmatmul.mubr.f32.gmra.mxu0 %v50
  %v746 = vpop.f32.mrf.mxu0
  %v747 = vadd.f32 %v667, %v746
  %v748 = vpop.f32.mrf.mxu0
  %749 = vdwg.mxu0
  %750 = vmatprep.subr.mxu0 0.0
  %751 = vmatpush1.msra.mxu0 0.0
  %752 = vmatprep.subr.mxu0 0.0
  %753 = vmatpush1.msra.mxu0 0.0
  %754 = vmatprep.subr.mxu0 0.0
  %755 = vmatpush1.msra.mxu0 0.0
  %756 = vmatprep.subr.mxu0 0.0
  %757 = vmatpush1.msra.mxu0 0.0
  %758 = vmatprep.subr.mxu0 0.0
  %759 = vmatpush1.msra.mxu0 0.0
  %760 = vmatprep.subr.mxu0 0.0
  %761 = vmatpush1.msra.mxu0 0.0
  %762 = vmatprep.subr.mxu0 0.0
  %763 = vmatpush1.msra.mxu0 0.0
  %764 = vmatprep.subr.mxu0 0.0
  %765 = vmatpush1.msra.mxu0 0.0
  %766 = vmatprep.subr.mxu0 0.0
  %767 = vmatpush1.msra.mxu0 %v252
  %768 = vmatprep.subr.mxu0 0.0
  %769 = vmatpush1.msra.mxu0 %v251
  %770 = vmatprep.subr.mxu0 0.0
  %771 = vmatpush1.msra.mxu0 %v250
  %772 = vmatprep.subr.mxu0 0.0
  %773 = vmatpush1.msra.mxu0 %v249
  %774 = vmatprep.subr.mxu0 0.0
  %775 = vmatpush1.msra.mxu0 %v248
  %776 = vmatprep.subr.mxu0 0.0
  %777 = vmatpush1.msra.mxu0 %v247
  %778 = vmatprep.subr.mxu0 0.0
  %779 = vmatpush1.msra.mxu0 %v246
  %780 = vmatprep.subr.mxu0 0.0
  %781 = vmatpush1.msra.mxu0 %v245
  %782 = vmatprep.subr.mxu0 0.0
  %783 = vmatpush2.msra.mxu0 0.0
  %784 = vmatprep.subr.mxu0 0.0
  %785 = vmatpush2.msra.mxu0 0.0
  %786 = vmatprep.subr.mxu0 0.0
  %787 = vmatpush2.msra.mxu0 0.0
  %788 = vmatprep.subr.mxu0 0.0
  %789 = vmatpush2.msra.mxu0 0.0
  %790 = vmatprep.subr.mxu0 0.0
  %791 = vmatpush2.msra.mxu0 0.0
  %792 = vmatprep.subr.mxu0 0.0
  %793 = vmatpush2.msra.mxu0 0.0
  %794 = vmatprep.subr.mxu0 0.0
  %795 = vmatpush2.msra.mxu0 0.0
  %796 = vmatprep.subr.mxu0 0.0
  %797 = vmatpush2.msra.mxu0 0.0
  %798 = vmatprep.subr.mxu0 0.0
  %799 = vmatpush2.msra.mxu0 0.0
  %800 = vmatprep.subr.mxu0 0.0
  %801 = vmatpush2.msra.mxu0 0.0
  %802 = vmatprep.subr.mxu0 0.0
  %803 = vmatpush2.msra.mxu0 0.0
  %804 = vmatprep.subr.mxu0 0.0
  %805 = vmatpush2.msra.mxu0 0.0
  %806 = vmatprep.subr.mxu0 0.0
  %807 = vmatpush2.msra.mxu0 0.0
  %808 = vmatprep.subr.mxu0 0.0
  %809 = vmatpush2.msra.mxu0 0.0
  %810 = vmatprep.subr.mxu0 0.0
  %811 = vmatpush2.msra.mxu0 0.0
  %812 = vmatprep.subr.mxu0 0.0
  %813 = vmatpush2.msra.mxu0 0.0
  %814 = vmatprep.mubr.f32.mxu0 0.0
  %815 = vmatmul.mubr.f32.gmra.mxu0 %v262
  %v816 = vpop.f32.mrf.mxu0
  %v817 = vadd.f32 %v737, %v816
  %v818 = vpop.f32.mrf.mxu0
  %819 = vmatprep.mubr.f32.mxu0 0.0
  %820 = vmatmul.mubr.f32.gmra.mxu0 %v265
  %v821 = vpop.f32.mrf.mxu0
  %v822 = vadd.f32 %v742, %v821
  %v823 = vpop.f32.mrf.mxu0
  %824 = vmatprep.mubr.f32.mxu0 0.0
  %825 = vmatmul.mubr.f32.gmra.mxu0 %v268
  %v826 = vpop.f32.mrf.mxu0
  %v827 = vadd.f32 %v747, %v826
  %v828 = vpop.f32.mrf.mxu0
  %829 = vdwg.mxu0
  %v830 = vmax.f32 %v817, 0.0
  %v831 = vmax.f32 %v822, 0.0
  %v832 = vmax.f32 %v827, 0.0
  %833 = vst.msk [vmem:[%s3] sm:$0xff] %vm260, %v830
  %834 = vst.msk [vmem:[%s3 + $0x8] sm:$0xff] %vm260, %v831
  %835 = vst.msk [vmem:[%s3 + $0x10] sm:$0xff] %vm260, %v832
  // Predicated region
  $region14: #{dqn_forward.6} parent=0 // pred_check
    _
  $region15: #{dqn_forward.6} parent=0 // pred_check_branch
    %837 = sbr.rel (0) target = $region17
  $region16: #{dqn_forward.6} parent=0 // pred_region
    _
  $region17: #{dqn_forward.6} parent=0 // pred_fallthru
    _
  // Predicated region
  $region18: #{dqn_forward.6} parent=0 // pred_check
    _
  $region19: #{dqn_forward.6} parent=0 // pred_check_branch
    %839 = sbr.rel (0) target = $region21
  $region20: #{dqn_forward.6} parent=0 // pred_region
    _
  $region21: #{dqn_forward.6} parent=0 // pred_fallthru
    _

// kernel: dqn_forward.7
$region0: #{dqn_forward.7}
  #allocation0 [shape = 'u32[]', space=smem, size = 0x4, offset = 0x4, fixed_abs, tag = 'smem constant byte address 0x4 - core index']
  #allocation1 [shape = 'u32[144,128]{1,0:T(1,128)}', space=vmem, size = 0x12000, scoped, tag = 'internal scratch']
  %s0 = inlined_call_operand.vmem [shape: f32[2,768], index: 0, kind: input, shape index: {}]
  %s1 = inlined_call_operand.vmem [shape: f32[2,32], index: 1, kind: input, shape index: {}]
  %s2 = inlined_call_operand.vmem [shape: f32[768,512], index: 2, kind: input, shape index: {}]
  %s3 = inlined_call_operand.vmem [shape: f32[1,512], index: 3, kind: input, shape index: {}]
  %s4 = inlined_call_operand.vmem [shape: f32[32,256], index: 4, kind: input, shape index: {}]
  %s5 = inlined_call_operand.vmem [shape: f32[1,256], index: 5, kind: input, shape index: {}]
  %s6 = inlined_call_operand.vmem [shape: f32[256,512], index: 6, kind: input, shape index: {}]
  %s7 = inlined_call_operand.vmem [shape: f32[1,512], index: 7, kind: input, shape index: {}]
  %s8 = inlined_call_operand.vmem [shape: f32[512,6], index: 8, kind: input, shape index: {}]
  %s9 = inlined_call_operand.vmem [shape: f32[1,6], index: 9, kind: input, shape index: {}]
  %s10 = inlined_call_operand.hbm [shape: f32[2,6], index: 10, kind: output, shape index: {}]
  %s11 = sld [smem:[#allocation0]]
  $region50: #{dqn_forward.7} parent=0
    _
  %s13 = ssub.s32 1, %s11
  %s14 = scalar_select 0, %s13, %s11
  $region1: #{dqn_forward.7} parent=0
    #allocation2 [shape = 'u8[1024]{0}', space=vmem, size = 0x400, scoped, tag = 'output window, operand 0, single buffered']
    #allocation3 [shape = 's32[1]{0}', space=sflag, size = 0x4, scoped, tag = 'scoped memory for dqn_forward.7']
    %15 = vsyncpa [#allocation3], 0
    // Predicated region
    $region2: #{dqn_forward.7} parent=1 // pred_check
      _
    $region3: #{dqn_forward.7} parent=1 // pred_check_branch
      %17 = sbr.rel (0) target = $region5
    $region4: #{dqn_forward.7} parent=1 // pred_region
      _
    $region5: #{dqn_forward.7} parent=1 // pred_fallthru
      _
    // Predicated region
    $region6: #{dqn_forward.7} parent=1 // pred_check
      _
    $region7: #{dqn_forward.7} parent=1 // pred_check_branch
      %19 = sbr.rel (0) target = $region9
    $region8: #{dqn_forward.7} parent=1 // pred_region
      _
    $region9: #{dqn_forward.7} parent=1 // pred_fallthru
      _
    // Predicated region
    $region10: #{dqn_forward.7} parent=1 // pred_check
      _
    $region11: #{dqn_forward.7} parent=1 // pred_check_branch
      %21 = sbr.rel (0) target = $region13
    $region12: #{dqn_forward.7} parent=1 // pred_region
      _
    $region13: #{dqn_forward.7} parent=1 // pred_fallthru
      _
    // Predicated region
    $region14: #{dqn_forward.7} parent=1 // pred_check
      _
    $region15: #{dqn_forward.7} parent=1 // pred_check_branch
      %23 = sbr.rel (0) target = $region17
    $region16: #{dqn_forward.7} parent=1 // pred_region
      _
    $region17: #{dqn_forward.7} parent=1 // pred_fallthru
      _
    // Predicated region
    $region18: #{dqn_forward.7} parent=1 // pred_check
      _
    $region19: #{dqn_forward.7} parent=1 // pred_check_branch
      %25 = sbr.rel (0) target = $region21
    $region20: #{dqn_forward.7} parent=1 // pred_region
      _
    $region21: #{dqn_forward.7} parent=1 // pred_fallthru
      _
    // Predicated region
    $region22: #{dqn_forward.7} parent=1 // pred_check
      _
    $region23: #{dqn_forward.7} parent=1 // pred_check_branch
      %27 = sbr.rel (0) target = $region25
    $region24: #{dqn_forward.7} parent=1 // pred_region
      _
    $region25: #{dqn_forward.7} parent=1 // pred_fallthru
      _
    // Predicated region
    $region26: #{dqn_forward.7} parent=1 // pred_check
      _
    $region27: #{dqn_forward.7} parent=1 // pred_check_branch
      %29 = sbr.rel (0) target = $region29
    $region28: #{dqn_forward.7} parent=1 // pred_region
      _
    $region29: #{dqn_forward.7} parent=1 // pred_fallthru
      _
    // Predicated region
    $region30: #{dqn_forward.7} parent=1 // pred_check
      _
    $region31: #{dqn_forward.7} parent=1 // pred_check_branch
      %31 = sbr.rel (0) target = $region33
    $region32: #{dqn_forward.7} parent=1 // pred_region
      _
    $region33: #{dqn_forward.7} parent=1 // pred_fallthru
      _
    // Predicated region
    $region34: #{dqn_forward.7} parent=1 // pred_check
      _
    $region35: #{dqn_forward.7} parent=1 // pred_check_branch
      %33 = sbr.rel (0) target = $region37
    $region36: #{dqn_forward.7} parent=1 // pred_region
      _
    $region37: #{dqn_forward.7} parent=1 // pred_fallthru
      _
    // Predicated region
    $region38: #{dqn_forward.7} parent=1 // pred_check
      _
    $region39: #{dqn_forward.7} parent=1 // pred_check_branch
      %35 = sbr.rel (0) target = $region41
    $region40: #{dqn_forward.7} parent=1 // pred_region
      _
    $region41: #{dqn_forward.7} parent=1 // pred_fallthru
      _
    %v36 = vld [vmem:[%s0] sm:$0xff]
    %v37 = vld [vmem:[%s0 + $0x8] sm:$0xf]
    %v38 = vld [vmem:[%s2] sm:$0xff]
    %v39 = vld [vmem:[%s2 + $0x8] sm:$0xff]
    %v40 = vld [vmem:[%s2 + $0x10] sm:$0xff]
    %v41 = vld [vmem:[%s2 + $0x18] sm:$0xff]
    %v42 = vld [vmem:[%s2 + $0x20] sm:$0xff]
    %v43 = vld [vmem:[%s2 + $0x28] sm:$0xff]
    %v44 = vld [vmem:[%s2 + $0x30] sm:$0xff]
    %v45 = vld [vmem:[%s2 + $0x38] sm:$0xff]
    %v46 = vld [vmem:[%s2 + $0x40] sm:$0xff]
    %v47 = vld [vmem:[%s2 + $0x48] sm:$0xff]
    %v48 = vld [vmem:[%s2 + $0x50] sm:$0xff]
    %v49 = vld [vmem:[%s2 + $0x58] sm:$0xff]
    %v50 = vld [vmem:[%s2 + $0x60] sm:$0xff]
    %v51 = vld [vmem:[%s2 + $0x68] sm:$0xff]
    %v52 = vld [vmem:[%s2 + $0x70] sm:$0xff]
    %v53 = vld [vmem:[%s2 + $0x78] sm:$0xff]
    %v54 = vld [vmem:[%s2 + $0x80] sm:$0xff]
    %v55 = vld [vmem:[%s2 + $0x88] sm:$0xff]
    %v56 = vld [vmem:[%s2 + $0x90] sm:$0xff]
    %v57 = vld [vmem:[%s2 + $0x98] sm:$0xff]
    %v58 = vld [vmem:[%s2 + $0xa0] sm:$0xff]
    %v59 = vld [vmem:[%s2 + $0xa8] sm:$0xff]
    %v60 = vld [vmem:[%s2 + $0xb0] sm:$0xff]
    %v61 = vld [vmem:[%s2 + $0xb8] sm:$0xff]
    %v62 = vld [vmem:[%s2 + $0xc0] sm:$0xff]
    %v63 = vld [vmem:[%s2 + $0xc8] sm:$0xff]
    %v64 = vld [vmem:[%s2 + $0xd0] sm:$0xff]
    %v65 = vld [vmem:[%s2 + $0xd8] sm:$0xff]
    %v66 = vld [vmem:[%s2 + $0xe0] sm:$0xff]
    %v67 = vld [vmem:[%s2 + $0xe8] sm:$0xff]
    %v68 = vld [vmem:[%s2 + $0xf0] sm:$0xff]
    %v69 = vld [vmem:[%s2 + $0xf8] sm:$0xff]
    %v70 = vld [vmem:[%s2 + $0x100] sm:$0xff]
    %v71 = vld [vmem:[%s2 + $0x108] sm:$0xff]
    %v72 = vld [vmem:[%s2 + $0x110] sm:$0xff]
    %v73 = vld [vmem:[%s2 + $0x118] sm:$0xff]
    %v74 = vld [vmem:[%s2 + $0x120] sm:$0xff]
    %v75 = vld [vmem:[%s2 + $0x128] sm:$0xff]
    %v76 = vld [vmem:[%s2 + $0x130] sm:$0xff]
    %v77 = vld [vmem:[%s2 + $0x138] sm:$0xff]
    %v78 = vld [vmem:[%s2 + $0x140] sm:$0xff]
    %v79 = vld [vmem:[%s2 + $0x148] sm:$0xff]
    %v80 = vld [vmem:[%s2 + $0x150] sm:$0xff]
    %v81 = vld [vmem:[%s2 + $0x158] sm:$0xff]
    %v82 = vld [vmem:[%s2 + $0x160] sm:$0xff]
    %v83 = vld [vmem:[%s2 + $0x168] sm:$0xff]
    %v84 = vld [vmem:[%s2 + $0x170] sm:$0xff]
    %v85 = vld [vmem:[%s2 + $0x178] sm:$0xff]
    %v86 = vld [vmem:[%s2 + $0x180] sm:$0xff]
    %v87 = vld [vmem:[%s2 + $0x188] sm:$0xff]
    %v88 = vld [vmem:[%s2 + $0x190] sm:$0xff]
    %v89 = vld [vmem:[%s2 + $0x198] sm:$0xff]
    %v90 = vld [vmem:[%s2 + $0x1a0] sm:$0xff]
    %v91 = vld [vmem:[%s2 + $0x1a8] sm:$0xff]
    %v92 = vld [vmem:[%s2 + $0x1b0] sm:$0xff]
    %v93 = vld [vmem:[%s2 + $0x1b8] sm:$0xff]
    %v94 = vld [vmem:[%s2 + $0x1c0] sm:$0xff]
    %v95 = vld [vmem:[%s2 + $0x1c8] sm:$0xff]
    %v96 = vld [vmem:[%s2 + $0x1d0] sm:$0xff]
    %v97 = vld [vmem:[%s2 + $0x1d8] sm:$0xff]
    %v98 = vld [vmem:[%s2 + $0x1e0] sm:$0xff]
    %v99 = vld [vmem:[%s2 + $0x1e8] sm:$0xff]
    %v100 = vld [vmem:[%s2 + $0x1f0] sm:$0xff]
    %v101 = vld [vmem:[%s2 + $0x1f8] sm:$0xff]
    %v102 = vld [vmem:[%s2 + $0x200] sm:$0xff]
    %v103 = vld [vmem:[%s2 + $0x208] sm:$0xff]
    %v104 = vld [vmem:[%s2 + $0x210] sm:$0xff]
    %v105 = vld [vmem:[%s2 + $0x218] sm:$0xff]
    %v106 = vld [vmem:[%s2 + $0x220] sm:$0xff]
    %v107 = vld [vmem:[%s2 + $0x228] sm:$0xff]
    %v108 = vld [vmem:[%s2 + $0x230] sm:$0xff]
    %v109 = vld [vmem:[%s2 + $0x238] sm:$0xff]
    %v110 = vld [vmem:[%s2 + $0x240] sm:$0xff]
    %v111 = vld [vmem:[%s2 + $0x248] sm:$0xff]
    %v112 = vld [vmem:[%s2 + $0x250] sm:$0xff]
    %v113 = vld [vmem:[%s2 + $0x258] sm:$0xff]
    %v114 = vld [vmem:[%s2 + $0x260] sm:$0xff]
    %v115 = vld [vmem:[%s2 + $0x268] sm:$0xff]
    %v116 = vld [vmem:[%s2 + $0x270] sm:$0xff]
    %v117 = vld [vmem:[%s2 + $0x278] sm:$0xff]
    %v118 = vld [vmem:[%s2 + $0x280] sm:$0xff]
    %v119 = vld [vmem:[%s2 + $0x288] sm:$0xff]
    %v120 = vld [vmem:[%s2 + $0x290] sm:$0xff]
    %v121 = vld [vmem:[%s2 + $0x298] sm:$0xff]
    %v122 = vld [vmem:[%s2 + $0x2a0] sm:$0xff]
    %v123 = vld [vmem:[%s2 + $0x2a8] sm:$0xff]
    %v124 = vld [vmem:[%s2 + $0x2b0] sm:$0xff]
    %v125 = vld [vmem:[%s2 + $0x2b8] sm:$0xff]
    %v126 = vld [vmem:[%s2 + $0x2c0] sm:$0xff]
    %v127 = vld [vmem:[%s2 + $0x2c8] sm:$0xff]
    %v128 = vld [vmem:[%s2 + $0x2d0] sm:$0xff]
    %v129 = vld [vmem:[%s2 + $0x2d8] sm:$0xff]
    %v130 = vld [vmem:[%s2 + $0x2e0] sm:$0xff]
    %v131 = vld [vmem:[%s2 + $0x2e8] sm:$0xff]
    %v132 = vld [vmem:[%s2 + $0x2f0] sm:$0xff]
    %v133 = vld [vmem:[%s2 + $0x2f8] sm:$0xff]
    %v134 = vld [vmem:[%s2 + $0x300] sm:$0xff]
    %v135 = vld [vmem:[%s2 + $0x308] sm:$0xff]
    %v136 = vld [vmem:[%s2 + $0x310] sm:$0xff]
    %v137 = vld [vmem:[%s2 + $0x318] sm:$0xff]
    %v138 = vld [vmem:[%s2 + $0x320] sm:$0xff]
    %v139 = vld [vmem:[%s2 + $0x328] sm:$0xff]
    %v140 = vld [vmem:[%s2 + $0x330] sm:$0xff]
    %v141 = vld [vmem:[%s2 + $0x338] sm:$0xff]
    %v142 = vld [vmem:[%s2 + $0x340] sm:$0xff]
    %v143 = vld [vmem:[%s2 + $0x348] sm:$0xff]
    %v144 = vld [vmem:[%s2 + $0x350] sm:$0xff]
    %v145 = vld [vmem:[%s2 + $0x358] sm:$0xff]
    %v146 = vld [vmem:[%s2 + $0x360] sm:$0xff]
    %v147 = vld [vmem:[%s2 + $0x368] sm:$0xff]
    %v148 = vld [vmem:[%s2 + $0x370] sm:$0xff]
    %v149 = vld [vmem:[%s2 + $0x378] sm:$0xff]
    %v150 = vld [vmem:[%s2 + $0x380] sm:$0xff]
    %v151 = vld [vmem:[%s2 + $0x388] sm:$0xff]
    %v152 = vld [vmem:[%s2 + $0x390] sm:$0xff]
    %v153 = vld [vmem:[%s2 + $0x398] sm:$0xff]
    %v154 = vld [vmem:[%s2 + $0x3a0] sm:$0xff]
    %v155 = vld [vmem:[%s2 + $0x3a8] sm:$0xff]
    %v156 = vld [vmem:[%s2 + $0x3b0] sm:$0xff]
    %v157 = vld [vmem:[%s2 + $0x3b8] sm:$0xff]
    %v158 = vld [vmem:[%s2 + $0x3c0] sm:$0xff]
    %v159 = vld [vmem:[%s2 + $0x3c8] sm:$0xff]
    %v160 = vld [vmem:[%s2 + $0x3d0] sm:$0xff]
    %v161 = vld [vmem:[%s2 + $0x3d8] sm:$0xff]
    %v162 = vld [vmem:[%s2 + $0x3e0] sm:$0xff]
    %v163 = vld [vmem:[%s2 + $0x3e8] sm:$0xff]
    %v164 = vld [vmem:[%s2 + $0x3f0] sm:$0xff]
    %v165 = vld [vmem:[%s2 + $0x3f8] sm:$0xff]
    %v166 = vld [vmem:[%s2 + $0x400] sm:$0xff]
    %v167 = vld [vmem:[%s2 + $0x408] sm:$0xff]
    %v168 = vld [vmem:[%s2 + $0x410] sm:$0xff]
    %v169 = vld [vmem:[%s2 + $0x418] sm:$0xff]
    %v170 = vld [vmem:[%s2 + $0x420] sm:$0xff]
    %v171 = vld [vmem:[%s2 + $0x428] sm:$0xff]
    %v172 = vld [vmem:[%s2 + $0x430] sm:$0xff]
    %v173 = vld [vmem:[%s2 + $0x438] sm:$0xff]
    %v174 = vld [vmem:[%s2 + $0x440] sm:$0xff]
    %v175 = vld [vmem:[%s2 + $0x448] sm:$0xff]
    %v176 = vld [vmem:[%s2 + $0x450] sm:$0xff]
    %v177 = vld [vmem:[%s2 + $0x458] sm:$0xff]
    %v178 = vld [vmem:[%s2 + $0x460] sm:$0xff]
    %v179 = vld [vmem:[%s2 + $0x468] sm:$0xff]
    %v180 = vld [vmem:[%s2 + $0x470] sm:$0xff]
    %v181 = vld [vmem:[%s2 + $0x478] sm:$0xff]
    %v182 = vld [vmem:[%s2 + $0x480] sm:$0xff]
    %v183 = vld [vmem:[%s2 + $0x488] sm:$0xff]
    %v184 = vld [vmem:[%s2 + $0x490] sm:$0xff]
    %v185 = vld [vmem:[%s2 + $0x498] sm:$0xff]
    %v186 = vld [vmem:[%s2 + $0x4a0] sm:$0xff]
    %v187 = vld [vmem:[%s2 + $0x4a8] sm:$0xff]
    %v188 = vld [vmem:[%s2 + $0x4b0] sm:$0xff]
    %v189 = vld [vmem:[%s2 + $0x4b8] sm:$0xff]
    %v190 = vld [vmem:[%s2 + $0x4c0] sm:$0xff]
    %v191 = vld [vmem:[%s2 + $0x4c8] sm:$0xff]
    %v192 = vld [vmem:[%s2 + $0x4d0] sm:$0xff]
    %v193 = vld [vmem:[%s2 + $0x4d8] sm:$0xff]
    %v194 = vld [vmem:[%s2 + $0x4e0] sm:$0xff]
    %v195 = vld [vmem:[%s2 + $0x4e8] sm:$0xff]
    %v196 = vld [vmem:[%s2 + $0x4f0] sm:$0xff]
    %v197 = vld [vmem:[%s2 + $0x4f8] sm:$0xff]
    %v198 = vld [vmem:[%s2 + $0x500] sm:$0xff]
    %v199 = vld [vmem:[%s2 + $0x508] sm:$0xff]
    %v200 = vld [vmem:[%s2 + $0x510] sm:$0xff]
    %v201 = vld [vmem:[%s2 + $0x518] sm:$0xff]
    %v202 = vld [vmem:[%s2 + $0x520] sm:$0xff]
    %v203 = vld [vmem:[%s2 + $0x528] sm:$0xff]
    %v204 = vld [vmem:[%s2 + $0x530] sm:$0xff]
    %v205 = vld [vmem:[%s2 + $0x538] sm:$0xff]
    %v206 = vld [vmem:[%s2 + $0x540] sm:$0xff]
    %v207 = vld [vmem:[%s2 + $0x548] sm:$0xff]
    %v208 = vld [vmem:[%s2 + $0x550] sm:$0xff]
    %v209 = vld [vmem:[%s2 + $0x558] sm:$0xff]
    %v210 = vld [vmem:[%s2 + $0x560] sm:$0xff]
    %v211 = vld [vmem:[%s2 + $0x568] sm:$0xff]
    %v212 = vld [vmem:[%s2 + $0x570] sm:$0xff]
    %v213 = vld [vmem:[%s2 + $0x578] sm:$0xff]
    %v214 = vld [vmem:[%s2 + $0x580] sm:$0xff]
    %v215 = vld [vmem:[%s2 + $0x588] sm:$0xff]
    %v216 = vld [vmem:[%s2 + $0x590] sm:$0xff]
    %v217 = vld [vmem:[%s2 + $0x598] sm:$0xff]
    %v218 = vld [vmem:[%s2 + $0x5a0] sm:$0xff]
    %v219 = vld [vmem:[%s2 + $0x5a8] sm:$0xff]
    %v220 = vld [vmem:[%s2 + $0x5b0] sm:$0xff]
    %v221 = vld [vmem:[%s2 + $0x5b8] sm:$0xff]
    %v222 = vld [vmem:[%s2 + $0x5c0] sm:$0xff]
    %v223 = vld [vmem:[%s2 + $0x5c8] sm:$0xff]
    %v224 = vld [vmem:[%s2 + $0x5d0] sm:$0xff]
    %v225 = vld [vmem:[%s2 + $0x5d8] sm:$0xff]
    %v226 = vld [vmem:[%s2 + $0x5e0] sm:$0xff]
    %v227 = vld [vmem:[%s2 + $0x5e8] sm:$0xff]
    %v228 = vld [vmem:[%s2 + $0x5f0] sm:$0xff]
    %v229 = vld [vmem:[%s2 + $0x5f8] sm:$0xff]
    %v230 = vld [vmem:[%s2 + $0x600] sm:$0xff]
    %v231 = vld [vmem:[%s2 + $0x608] sm:$0xff]
    %v232 = vld [vmem:[%s2 + $0x610] sm:$0xff]
    %v233 = vld [vmem:[%s2 + $0x618] sm:$0xff]
    %v234 = vld [vmem:[%s2 + $0x620] sm:$0xff]
    %v235 = vld [vmem:[%s2 + $0x628] sm:$0xff]
    %v236 = vld [vmem:[%s2 + $0x630] sm:$0xff]
    %v237 = vld [vmem:[%s2 + $0x638] sm:$0xff]
    %v238 = vld [vmem:[%s2 + $0x640] sm:$0xff]
    %v239 = vld [vmem:[%s2 + $0x648] sm:$0xff]
    %v240 = vld [vmem:[%s2 + $0x650] sm:$0xff]
    %v241 = vld [vmem:[%s2 + $0x658] sm:$0xff]
    %v242 = vld [vmem:[%s2 + $0x660] sm:$0xff]
    %v243 = vld [vmem:[%s2 + $0x668] sm:$0xff]
    %v244 = vld [vmem:[%s2 + $0x670] sm:$0xff]
    %v245 = vld [vmem:[%s2 + $0x678] sm:$0xff]
    %v246 = vld [vmem:[%s2 + $0x680] sm:$0xff]
    %v247 = vld [vmem:[%s2 + $0x688] sm:$0xff]
    %v248 = vld [vmem:[%s2 + $0x690] sm:$0xff]
    %v249 = vld [vmem:[%s2 + $0x698] sm:$0xff]
    %v250 = vld [vmem:[%s2 + $0x6a0] sm:$0xff]
    %v251 = vld [vmem:[%s2 + $0x6a8] sm:$0xff]
    %v252 = vld [vmem:[%s2 + $0x6b0] sm:$0xff]
    %v253 = vld [vmem:[%s2 + $0x6b8] sm:$0xff]
    %v254 = vld [vmem:[%s2 + $0x6c0] sm:$0xff]
    %v255 = vld [vmem:[%s2 + $0x6c8] sm:$0xff]
    %v256 = vld [vmem:[%s2 + $0x6d0] sm:$0xff]
    %v257 = vld [vmem:[%s2 + $0x6d8] sm:$0xff]
    %v258 = vld [vmem:[%s2 + $0x6e0] sm:$0xff]
    %v259 = vld [vmem:[%s2 + $0x6e8] sm:$0xff]
    %v260 = vld [vmem:[%s2 + $0x6f0] sm:$0xff]
    %v261 = vld [vmem:[%s2 + $0x6f8] sm:$0xff]
    %v262 = vld [vmem:[%s2 + $0x700] sm:$0xff]
    %v263 = vld [vmem:[%s2 + $0x708] sm:$0xff]
    %v264 = vld [vmem:[%s2 + $0x710] sm:$0xff]
    %v265 = vld [vmem:[%s2 + $0x718] sm:$0xff]
    %v266 = vld [vmem:[%s2 + $0x720] sm:$0xff]
    %v267 = vld [vmem:[%s2 + $0x728] sm:$0xff]
    %v268 = vld [vmem:[%s2 + $0x730] sm:$0xff]
    %v269 = vld [vmem:[%s2 + $0x738] sm:$0xff]
    %v270 = vld [vmem:[%s2 + $0x740] sm:$0xff]
    %v271 = vld [vmem:[%s2 + $0x748] sm:$0xff]
    %v272 = vld [vmem:[%s2 + $0x750] sm:$0xff]
    %v273 = vld [vmem:[%s2 + $0x758] sm:$0xff]
    %v274 = vld [vmem:[%s2 + $0x760] sm:$0xff]
    %v275 = vld [vmem:[%s2 + $0x768] sm:$0xff]
    %v276 = vld [vmem:[%s2 + $0x770] sm:$0xff]
    %v277 = vld [vmem:[%s2 + $0x778] sm:$0xff]
    %v278 = vld [vmem:[%s2 + $0x780] sm:$0xff]
    %v279 = vld [vmem:[%s2 + $0x788] sm:$0xff]
    %v280 = vld [vmem:[%s2 + $0x790] sm:$0xff]
    %v281 = vld [vmem:[%s2 + $0x798] sm:$0xff]
    %v282 = vld [vmem:[%s2 + $0x7a0] sm:$0xff]
    %v283 = vld [vmem:[%s2 + $0x7a8] sm:$0xff]
    %v284 = vld [vmem:[%s2 + $0x7b0] sm:$0xff]
    %v285 = vld [vmem:[%s2 + $0x7b8] sm:$0xff]
    %v286 = vld [vmem:[%s2 + $0x7c0] sm:$0xff]
    %v287 = vld [vmem:[%s2 + $0x7c8] sm:$0xff]
    %v288 = vld [vmem:[%s2 + $0x7d0] sm:$0xff]
    %v289 = vld [vmem:[%s2 + $0x7d8] sm:$0xff]
    %v290 = vld [vmem:[%s2 + $0x7e0] sm:$0xff]
    %v291 = vld [vmem:[%s2 + $0x7e8] sm:$0xff]
    %v292 = vld [vmem:[%s2 + $0x7f0] sm:$0xff]
    %v293 = vld [vmem:[%s2 + $0x7f8] sm:$0xff]
    %v294 = vld [vmem:[%s2 + $0x800] sm:$0xff]
    %v295 = vld [vmem:[%s2 + $0x808] sm:$0xff]
    %v296 = vld [vmem:[%s2 + $0x810] sm:$0xff]
    %v297 = vld [vmem:[%s2 + $0x818] sm:$0xff]
    %v298 = vld [vmem:[%s2 + $0x820] sm:$0xff]
    %v299 = vld [vmem:[%s2 + $0x828] sm:$0xff]
    %v300 = vld [vmem:[%s2 + $0x830] sm:$0xff]
    %v301 = vld [vmem:[%s2 + $0x838] sm:$0xff]
    %v302 = vld [vmem:[%s2 + $0x840] sm:$0xff]
    %v303 = vld [vmem:[%s2 + $0x848] sm:$0xff]
    %v304 = vld [vmem:[%s2 + $0x850] sm:$0xff]
    %v305 = vld [vmem:[%s2 + $0x858] sm:$0xff]
    %v306 = vld [vmem:[%s2 + $0x860] sm:$0xff]
    %v307 = vld [vmem:[%s2 + $0x868] sm:$0xff]
    %v308 = vld [vmem:[%s2 + $0x870] sm:$0xff]
    %v309 = vld [vmem:[%s2 + $0x878] sm:$0xff]
    %v310 = vld [vmem:[%s2 + $0x880] sm:$0xff]
    %v311 = vld [vmem:[%s2 + $0x888] sm:$0xff]
    %v312 = vld [vmem:[%s2 + $0x890] sm:$0xff]
    %v313 = vld [vmem:[%s2 + $0x898] sm:$0xff]
    %v314 = vld [vmem:[%s2 + $0x8a0] sm:$0xff]
    %v315 = vld [vmem:[%s2 + $0x8a8] sm:$0xff]
    %v316 = vld [vmem:[%s2 + $0x8b0] sm:$0xff]
    %v317 = vld [vmem:[%s2 + $0x8b8] sm:$0xff]
    %v318 = vld [vmem:[%s2 + $0x8c0] sm:$0xff]
    %v319 = vld [vmem:[%s2 + $0x8c8] sm:$0xff]
    %v320 = vld [vmem:[%s2 + $0x8d0] sm:$0xff]
    %v321 = vld [vmem:[%s2 + $0x8d8] sm:$0xff]
    %v322 = vld [vmem:[%s2 + $0x8e0] sm:$0xff]
    %v323 = vld [vmem:[%s2 + $0x8e8] sm:$0xff]
    %v324 = vld [vmem:[%s2 + $0x8f0] sm:$0xff]
    %v325 = vld [vmem:[%s2 + $0x8f8] sm:$0xff]
    %v326 = vld [vmem:[%s2 + $0x900] sm:$0xff]
    %v327 = vld [vmem:[%s2 + $0x908] sm:$0xff]
    %v328 = vld [vmem:[%s2 + $0x910] sm:$0xff]
    %v329 = vld [vmem:[%s2 + $0x918] sm:$0xff]
    %v330 = vld [vmem:[%s2 + $0x920] sm:$0xff]
    %v331 = vld [vmem:[%s2 + $0x928] sm:$0xff]
    %v332 = vld [vmem:[%s2 + $0x930] sm:$0xff]
    %v333 = vld [vmem:[%s2 + $0x938] sm:$0xff]
    %v334 = vld [vmem:[%s2 + $0x940] sm:$0xff]
    %v335 = vld [vmem:[%s2 + $0x948] sm:$0xff]
    %v336 = vld [vmem:[%s2 + $0x950] sm:$0xff]
    %v337 = vld [vmem:[%s2 + $0x958] sm:$0xff]
    %v338 = vld [vmem:[%s2 + $0x960] sm:$0xff]
    %v339 = vld [vmem:[%s2 + $0x968] sm:$0xff]
    %v340 = vld [vmem:[%s2 + $0x970] sm:$0xff]
    %v341 = vld [vmem:[%s2 + $0x978] sm:$0xff]
    %v342 = vld [vmem:[%s2 + $0x980] sm:$0xff]
    %v343 = vld [vmem:[%s2 + $0x988] sm:$0xff]
    %v344 = vld [vmem:[%s2 + $0x990] sm:$0xff]
    %v345 = vld [vmem:[%s2 + $0x998] sm:$0xff]
    %v346 = vld [vmem:[%s2 + $0x9a0] sm:$0xff]
    %v347 = vld [vmem:[%s2 + $0x9a8] sm:$0xff]
    %v348 = vld [vmem:[%s2 + $0x9b0] sm:$0xff]
    %v349 = vld [vmem:[%s2 + $0x9b8] sm:$0xff]
    %v350 = vld [vmem:[%s2 + $0x9c0] sm:$0xff]
    %v351 = vld [vmem:[%s2 + $0x9c8] sm:$0xff]
    %v352 = vld [vmem:[%s2 + $0x9d0] sm:$0xff]
    %v353 = vld [vmem:[%s2 + $0x9d8] sm:$0xff]
    %v354 = vld [vmem:[%s2 + $0x9e0] sm:$0xff]
    %v355 = vld [vmem:[%s2 + $0x9e8] sm:$0xff]
    %v356 = vld [vmem:[%s2 + $0x9f0] sm:$0xff]
    %v357 = vld [vmem:[%s2 + $0x9f8] sm:$0xff]
    %v358 = vld [vmem:[%s2 + $0xa00] sm:$0xff]
    %v359 = vld [vmem:[%s2 + $0xa08] sm:$0xff]
    %v360 = vld [vmem:[%s2 + $0xa10] sm:$0xff]
    %v361 = vld [vmem:[%s2 + $0xa18] sm:$0xff]
    %v362 = vld [vmem:[%s2 + $0xa20] sm:$0xff]
    %v363 = vld [vmem:[%s2 + $0xa28] sm:$0xff]
    %v364 = vld [vmem:[%s2 + $0xa30] sm:$0xff]
    %v365 = vld [vmem:[%s2 + $0xa38] sm:$0xff]
    %v366 = vld [vmem:[%s2 + $0xa40] sm:$0xff]
    %v367 = vld [vmem:[%s2 + $0xa48] sm:$0xff]
    %v368 = vld [vmem:[%s2 + $0xa50] sm:$0xff]
    %v369 = vld [vmem:[%s2 + $0xa58] sm:$0xff]
    %v370 = vld [vmem:[%s2 + $0xa60] sm:$0xff]
    %v371 = vld [vmem:[%s2 + $0xa68] sm:$0xff]
    %v372 = vld [vmem:[%s2 + $0xa70] sm:$0xff]
    %v373 = vld [vmem:[%s2 + $0xa78] sm:$0xff]
    %v374 = vld [vmem:[%s2 + $0xa80] sm:$0xff]
    %v375 = vld [vmem:[%s2 + $0xa88] sm:$0xff]
    %v376 = vld [vmem:[%s2 + $0xa90] sm:$0xff]
    %v377 = vld [vmem:[%s2 + $0xa98] sm:$0xff]
    %v378 = vld [vmem:[%s2 + $0xaa0] sm:$0xff]
    %v379 = vld [vmem:[%s2 + $0xaa8] sm:$0xff]
    %v380 = vld [vmem:[%s2 + $0xab0] sm:$0xff]
    %v381 = vld [vmem:[%s2 + $0xab8] sm:$0xff]
    %v382 = vld [vmem:[%s2 + $0xac0] sm:$0xff]
    %v383 = vld [vmem:[%s2 + $0xac8] sm:$0xff]
    %v384 = vld [vmem:[%s2 + $0xad0] sm:$0xff]
    %v385 = vld [vmem:[%s2 + $0xad8] sm:$0xff]
    %v386 = vld [vmem:[%s2 + $0xae0] sm:$0xff]
    %v387 = vld [vmem:[%s2 + $0xae8] sm:$0xff]
    %v388 = vld [vmem:[%s2 + $0xaf0] sm:$0xff]
    %v389 = vld [vmem:[%s2 + $0xaf8] sm:$0xff]
    %v390 = vld [vmem:[%s2 + $0xb00] sm:$0xff]
    %v391 = vld [vmem:[%s2 + $0xb08] sm:$0xff]
    %v392 = vld [vmem:[%s2 + $0xb10] sm:$0xff]
    %v393 = vld [vmem:[%s2 + $0xb18] sm:$0xff]
    %v394 = vld [vmem:[%s2 + $0xb20] sm:$0xff]
    %v395 = vld [vmem:[%s2 + $0xb28] sm:$0xff]
    %v396 = vld [vmem:[%s2 + $0xb30] sm:$0xff]
    %v397 = vld [vmem:[%s2 + $0xb38] sm:$0xff]
    %v398 = vld [vmem:[%s2 + $0xb40] sm:$0xff]
    %v399 = vld [vmem:[%s2 + $0xb48] sm:$0xff]
    %v400 = vld [vmem:[%s2 + $0xb50] sm:$0xff]
    %v401 = vld [vmem:[%s2 + $0xb58] sm:$0xff]
    %v402 = vld [vmem:[%s2 + $0xb60] sm:$0xff]
    %v403 = vld [vmem:[%s2 + $0xb68] sm:$0xff]
    %v404 = vld [vmem:[%s2 + $0xb70] sm:$0xff]
    %v405 = vld [vmem:[%s2 + $0xb78] sm:$0xff]
    %v406 = vld [vmem:[%s2 + $0xb80] sm:$0xff]
    %v407 = vld [vmem:[%s2 + $0xb88] sm:$0xff]
    %v408 = vld [vmem:[%s2 + $0xb90] sm:$0xff]
    %v409 = vld [vmem:[%s2 + $0xb98] sm:$0xff]
    %v410 = vld [vmem:[%s2 + $0xba0] sm:$0xff]
    %v411 = vld [vmem:[%s2 + $0xba8] sm:$0xff]
    %v412 = vld [vmem:[%s2 + $0xbb0] sm:$0xff]
    %v413 = vld [vmem:[%s2 + $0xbb8] sm:$0xff]
    %v414 = vld [vmem:[%s2 + $0xbc0] sm:$0xff]
    %v415 = vld [vmem:[%s2 + $0xbc8] sm:$0xff]
    %v416 = vld [vmem:[%s2 + $0xbd0] sm:$0xff]
    %v417 = vld [vmem:[%s2 + $0xbd8] sm:$0xff]
    %v418 = vld [vmem:[%s2 + $0xbe0] sm:$0xff]
    %v419 = vld [vmem:[%s2 + $0xbe8] sm:$0xff]
    %v420 = vld [vmem:[%s2 + $0xbf0] sm:$0xff]
    %v421 = vld [vmem:[%s2 + $0xbf8] sm:$0xff]
    %v422 = vld [vmem:[%s3] sm:$0xf]
    %v424 = vlaneseq
    %v425 = vshrl.u32 %v424, 7
    %v426 = vsub.s32 0, %v425
    %v427 = vrot.slane %v422, %v426
    %v428 = vlaneseq
    %v429 = vshrl.u32 %v428, 7
    %v430 = vsub.s32 1, %v429
    %v431 = vrot.slane %v422, %v430
    %v432 = vlaneseq
    %v433 = vshrl.u32 %v432, 7
    %v434 = vsub.s32 2, %v433
    %v435 = vrot.slane %v422, %v434
    %v436 = vlaneseq
    %v437 = vshrl.u32 %v436, 7
    %v438 = vsub.s32 3, %v437
    %v439 = vrot.slane %v422, %v438
    %v446 = vcombine.high %v36, %v36
    %v448 = vunpack.c.l.s4 1983009808
    %v449 = vunpack.c.0.s8 %v448
    %v450 = vlaneseq
    %v451 = vshrl.u32 %v450, 7
    %v452 = vsub.s32 %v449, %v451
    %v453 = vrot.slane %v36, %v452
    %v455 = vunpack.c.l.s4 1983009808
    %v456 = vunpack.c.0.s8 %v455
    %v457 = vlaneseq
    %v458 = vshrl.u32 %v457, 7
    %v459 = vsub.s32 %v456, %v458
    %v460 = vrot.slane %v446, %v459
    %v461 = vcombine.high %v453, %v453
    %v462 = vcombine.high %v460, %v460
    %v464 = vunpack.c.l.s4 1983009808
    %v465 = vunpack.c.0.s8 %v464
    %v466 = vlaneseq
    %v467 = vshrl.u32 %v466, 7
    %v468 = vsub.s32 %v465, %v467
    %v469 = vrot.slane %v37, %v468
    %v470 = vcombine.high %v469, %v469
    %477 = vmatprep.subr.mxu0 %v99
    %478 = vmatpush1.msra.mxu0 %v98
    %479 = vmatprep.subr.mxu0 %v95
    %480 = vmatpush1.msra.mxu0 %v94
    %481 = vmatprep.subr.mxu0 %v91
    %482 = vmatpush1.msra.mxu0 %v90
    %483 = vmatprep.subr.mxu0 %v87
    %484 = vmatpush1.msra.mxu0 %v86
    %485 = vmatprep.subr.mxu0 %v83
    %486 = vmatpush1.msra.mxu0 %v82
    %487 = vmatprep.subr.mxu0 %v79
    %488 = vmatpush1.msra.mxu0 %v78
    %489 = vmatprep.subr.mxu0 %v75
    %490 = vmatpush1.msra.mxu0 %v74
    %491 = vmatprep.subr.mxu0 %v71
    %492 = vmatpush1.msra.mxu0 %v70
    %493 = vmatprep.subr.mxu0 %v67
    %494 = vmatpush1.msra.mxu0 %v66
    %495 = vmatprep.subr.mxu0 %v63
    %496 = vmatpush1.msra.mxu0 %v62
    %497 = vmatprep.subr.mxu0 %v59
    %498 = vmatpush1.msra.mxu0 %v58
    %499 = vmatprep.subr.mxu0 %v55
    %500 = vmatpush1.msra.mxu0 %v54
    %501 = vmatprep.subr.mxu0 %v51
    %502 = vmatpush1.msra.mxu0 %v50
    %503 = vmatprep.subr.mxu0 %v47
    %504 = vmatpush1.msra.mxu0 %v46
    %505 = vmatprep.subr.mxu0 %v43
    %506 = vmatpush1.msra.mxu0 %v42
    %507 = vmatprep.subr.mxu0 %v39
    %508 = vmatpush1.msra.mxu0 %v38
    %509 = vmatprep.subr.mxu0 %v163
    %510 = vmatpush2.msra.mxu0 %v162
    %511 = vmatprep.subr.mxu0 %v159
    %512 = vmatpush2.msra.mxu0 %v158
    %513 = vmatprep.subr.mxu0 %v155
    %514 = vmatpush2.msra.mxu0 %v154
    %515 = vmatprep.subr.mxu0 %v151
    %516 = vmatpush2.msra.mxu0 %v150
    %517 = vmatprep.subr.mxu0 %v147
    %518 = vmatpush2.msra.mxu0 %v146
    %519 = vmatprep.subr.mxu0 %v143
    %520 = vmatpush2.msra.mxu0 %v142
    %521 = vmatprep.subr.mxu0 %v139
    %522 = vmatpush2.msra.mxu0 %v138
    %523 = vmatprep.subr.mxu0 %v135
    %524 = vmatpush2.msra.mxu0 %v134
    %525 = vmatprep.subr.mxu0 %v131
    %526 = vmatpush2.msra.mxu0 %v130
    %527 = vmatprep.subr.mxu0 %v127
    %528 = vmatpush2.msra.mxu0 %v126
    %529 = vmatprep.subr.mxu0 %v123
    %530 = vmatpush2.msra.mxu0 %v122
    %531 = vmatprep.subr.mxu0 %v119
    %532 = vmatpush2.msra.mxu0 %v118
    %533 = vmatprep.subr.mxu0 %v115
    %534 = vmatpush2.msra.mxu0 %v114
    %535 = vmatprep.subr.mxu0 %v111
    %536 = vmatpush2.msra.mxu0 %v110
    %537 = vmatprep.subr.mxu0 %v107
    %538 = vmatpush2.msra.mxu0 %v106
    %539 = vmatprep.subr.mxu0 %v103
    %540 = vmatpush2.msra.mxu0 %v102
    %541 = vmatprep.mubr.f32.mxu0 %v461
    %542 = vmatmul.mubr.f32.gmra.mxu0 %v453
    %v543 = vpop.f32.mrf.mxu0
    %v544 = vadd.f32 %v427, %v543
    %v545 = vpop.f32.mrf.mxu0
    %v546 = vadd.f32 %v431, %v545
    %547 = vdwg.mxu0
    %548 = vmatprep.subr.mxu0 %v227
    %549 = vmatpush1.msra.mxu0 %v226
    %550 = vmatprep.subr.mxu0 %v223
    %551 = vmatpush1.msra.mxu0 %v222
    %552 = vmatprep.subr.mxu0 %v219
    %553 = vmatpush1.msra.mxu0 %v218
    %554 = vmatprep.subr.mxu0 %v215
    %555 = vmatpush1.msra.mxu0 %v214
    %556 = vmatprep.subr.mxu0 %v211
    %557 = vmatpush1.msra.mxu0 %v210
    %558 = vmatprep.subr.mxu0 %v207
    %559 = vmatpush1.msra.mxu0 %v206
    %560 = vmatprep.subr.mxu0 %v203
    %561 = vmatpush1.msra.mxu0 %v202
    %562 = vmatprep.subr.mxu0 %v199
    %563 = vmatpush1.msra.mxu0 %v198
    %564 = vmatprep.subr.mxu0 %v195
    %565 = vmatpush1.msra.mxu0 %v194
    %566 = vmatprep.subr.mxu0 %v191
    %567 = vmatpush1.msra.mxu0 %v190
    %568 = vmatprep.subr.mxu0 %v187
    %569 = vmatpush1.msra.mxu0 %v186
    %570 = vmatprep.subr.mxu0 %v183
    %571 = vmatpush1.msra.mxu0 %v182
    %572 = vmatprep.subr.mxu0 %v179
    %573 = vmatpush1.msra.mxu0 %v178
    %574 = vmatprep.subr.mxu0 %v175
    %575 = vmatpush1.msra.mxu0 %v174
    %576 = vmatprep.subr.mxu0 %v171
    %577 = vmatpush1.msra.mxu0 %v170
    %578 = vmatprep.subr.mxu0 %v167
    %579 = vmatpush1.msra.mxu0 %v166
    %580 = vmatprep.subr.mxu0 %v291
    %581 = vmatpush2.msra.mxu0 %v290
    %582 = vmatprep.subr.mxu0 %v287
    %583 = vmatpush2.msra.mxu0 %v286
    %584 = vmatprep.subr.mxu0 %v283
    %585 = vmatpush2.msra.mxu0 %v282
    %586 = vmatprep.subr.mxu0 %v279
    %587 = vmatpush2.msra.mxu0 %v278
    %588 = vmatprep.subr.mxu0 %v275
    %589 = vmatpush2.msra.mxu0 %v274
    %590 = vmatprep.subr.mxu0 %v271
    %591 = vmatpush2.msra.mxu0 %v270
    %592 = vmatprep.subr.mxu0 %v267
    %593 = vmatpush2.msra.mxu0 %v266
    %594 = vmatprep.subr.mxu0 %v263
    %595 = vmatpush2.msra.mxu0 %v262
    %596 = vmatprep.subr.mxu0 %v259
    %597 = vmatpush2.msra.mxu0 %v258
    %598 = vmatprep.subr.mxu0 %v255
    %599 = vmatpush2.msra.mxu0 %v254
    %600 = vmatprep.subr.mxu0 %v251
    %601 = vmatpush2.msra.mxu0 %v250
    %602 = vmatprep.subr.mxu0 %v247
    %603 = vmatpush2.msra.mxu0 %v246
    %604 = vmatprep.subr.mxu0 %v243
    %605 = vmatpush2.msra.mxu0 %v242
    %606 = vmatprep.subr.mxu0 %v239
    %607 = vmatpush2.msra.mxu0 %v238
    %608 = vmatprep.subr.mxu0 %v235
    %609 = vmatpush2.msra.mxu0 %v234
    %610 = vmatprep.subr.mxu0 %v231
    %611 = vmatpush2.msra.mxu0 %v230
    %612 = vmatprep.mubr.f32.mxu0 %v462
    %613 = vmatmul.mubr.f32.gmra.mxu0 %v460
    %v614 = vpop.f32.mrf.mxu0
    %v615 = vadd.f32 %v544, %v614
    %v616 = vpop.f32.mrf.mxu0
    %v617 = vadd.f32 %v546, %v616
    %618 = vdwg.mxu0
    %619 = vmatprep.subr.mxu0 %v355
    %620 = vmatpush1.msra.mxu0 %v354
    %621 = vmatprep.subr.mxu0 %v351
    %622 = vmatpush1.msra.mxu0 %v350
    %623 = vmatprep.subr.mxu0 %v347
    %624 = vmatpush1.msra.mxu0 %v346
    %625 = vmatprep.subr.mxu0 %v343
    %626 = vmatpush1.msra.mxu0 %v342
    %627 = vmatprep.subr.mxu0 %v339
    %628 = vmatpush1.msra.mxu0 %v338
    %629 = vmatprep.subr.mxu0 %v335
    %630 = vmatpush1.msra.mxu0 %v334
    %631 = vmatprep.subr.mxu0 %v331
    %632 = vmatpush1.msra.mxu0 %v330
    %633 = vmatprep.subr.mxu0 %v327
    %634 = vmatpush1.msra.mxu0 %v326
    %635 = vmatprep.subr.mxu0 %v323
    %636 = vmatpush1.msra.mxu0 %v322
    %637 = vmatprep.subr.mxu0 %v319
    %638 = vmatpush1.msra.mxu0 %v318
    %639 = vmatprep.subr.mxu0 %v315
    %640 = vmatpush1.msra.mxu0 %v314
    %641 = vmatprep.subr.mxu0 %v311
    %642 = vmatpush1.msra.mxu0 %v310
    %643 = vmatprep.subr.mxu0 %v307
    %644 = vmatpush1.msra.mxu0 %v306
    %645 = vmatprep.subr.mxu0 %v303
    %646 = vmatpush1.msra.mxu0 %v302
    %647 = vmatprep.subr.mxu0 %v299
    %648 = vmatpush1.msra.mxu0 %v298
    %649 = vmatprep.subr.mxu0 %v295
    %650 = vmatpush1.msra.mxu0 %v294
    %651 = vmatprep.subr.mxu0 %v419
    %652 = vmatpush2.msra.mxu0 %v418
    %653 = vmatprep.subr.mxu0 %v415
    %654 = vmatpush2.msra.mxu0 %v414
    %655 = vmatprep.subr.mxu0 %v411
    %656 = vmatpush2.msra.mxu0 %v410
    %657 = vmatprep.subr.mxu0 %v407
    %658 = vmatpush2.msra.mxu0 %v406
    %659 = vmatprep.subr.mxu0 %v403
    %660 = vmatpush2.msra.mxu0 %v402
    %661 = vmatprep.subr.mxu0 %v399
    %662 = vmatpush2.msra.mxu0 %v398
    %663 = vmatprep.subr.mxu0 %v395
    %664 = vmatpush2.msra.mxu0 %v394
    %665 = vmatprep.subr.mxu0 %v391
    %666 = vmatpush2.msra.mxu0 %v390
    %667 = vmatprep.subr.mxu0 %v387
    %668 = vmatpush2.msra.mxu0 %v386
    %669 = vmatprep.subr.mxu0 %v383
    %670 = vmatpush2.msra.mxu0 %v382
    %671 = vmatprep.subr.mxu0 %v379
    %672 = vmatpush2.msra.mxu0 %v378
    %673 = vmatprep.subr.mxu0 %v375
    %674 = vmatpush2.msra.mxu0 %v374
    %675 = vmatprep.subr.mxu0 %v371
    %676 = vmatpush2.msra.mxu0 %v370
    %677 = vmatprep.subr.mxu0 %v367
    %678 = vmatpush2.msra.mxu0 %v366
    %679 = vmatprep.subr.mxu0 %v363
    %680 = vmatpush2.msra.mxu0 %v362
    %681 = vmatprep.subr.mxu0 %v359
    %682 = vmatpush2.msra.mxu0 %v358
    %683 = vmatprep.mubr.f32.mxu0 %v470
    %684 = vmatmul.mubr.f32.gmra.mxu0 %v469
    %v685 = vpop.f32.mrf.mxu0
    %v686 = vadd.f32 %v615, %v685
    %v687 = vpop.f32.mrf.mxu0
    %v688 = vadd.f32 %v617, %v687
    %689 = vdwg.mxu0
    %690 = vmatprep.subr.mxu0 %v101
    %691 = vmatpush1.msra.mxu0 %v100
    %692 = vmatprep.subr.mxu0 %v97
    %693 = vmatpush1.msra.mxu0 %v96
    %694 = vmatprep.subr.mxu0 %v93
    %695 = vmatpush1.msra.mxu0 %v92
    %696 = vmatprep.subr.mxu0 %v89
    %697 = vmatpush1.msra.mxu0 %v88
    %698 = vmatprep.subr.mxu0 %v85
    %699 = vmatpush1.msra.mxu0 %v84
    %700 = vmatprep.subr.mxu0 %v81
    %701 = vmatpush1.msra.mxu0 %v80
    %702 = vmatprep.subr.mxu0 %v77
    %703 = vmatpush1.msra.mxu0 %v76
    %704 = vmatprep.subr.mxu0 %v73
    %705 = vmatpush1.msra.mxu0 %v72
    %706 = vmatprep.subr.mxu0 %v69
    %707 = vmatpush1.msra.mxu0 %v68
    %708 = vmatprep.subr.mxu0 %v65
    %709 = vmatpush1.msra.mxu0 %v64
    %710 = vmatprep.subr.mxu0 %v61
    %711 = vmatpush1.msra.mxu0 %v60
    %712 = vmatprep.subr.mxu0 %v57
    %713 = vmatpush1.msra.mxu0 %v56
    %714 = vmatprep.subr.mxu0 %v53
    %715 = vmatpush1.msra.mxu0 %v52
    %716 = vmatprep.subr.mxu0 %v49
    %717 = vmatpush1.msra.mxu0 %v48
    %718 = vmatprep.subr.mxu0 %v45
    %719 = vmatpush1.msra.mxu0 %v44
    %720 = vmatprep.subr.mxu0 %v41
    %721 = vmatpush1.msra.mxu0 %v40
    %722 = vmatprep.subr.mxu0 %v165
    %723 = vmatpush2.msra.mxu0 %v164
    %724 = vmatprep.subr.mxu0 %v161
    %725 = vmatpush2.msra.mxu0 %v160
    %726 = vmatprep.subr.mxu0 %v157
    %727 = vmatpush2.msra.mxu0 %v156
    %728 = vmatprep.subr.mxu0 %v153
    %729 = vmatpush2.msra.mxu0 %v152
    %730 = vmatprep.subr.mxu0 %v149
    %731 = vmatpush2.msra.mxu0 %v148
    %732 = vmatprep.subr.mxu0 %v145
    %733 = vmatpush2.msra.mxu0 %v144
    %734 = vmatprep.subr.mxu0 %v141
    %735 = vmatpush2.msra.mxu0 %v140
    %736 = vmatprep.subr.mxu0 %v137
    %737 = vmatpush2.msra.mxu0 %v136
    %738 = vmatprep.subr.mxu0 %v133
    %739 = vmatpush2.msra.mxu0 %v132
    %740 = vmatprep.subr.mxu0 %v129
    %741 = vmatpush2.msra.mxu0 %v128
    %742 = vmatprep.subr.mxu0 %v125
    %743 = vmatpush2.msra.mxu0 %v124
    %744 = vmatprep.subr.mxu0 %v121
    %745 = vmatpush2.msra.mxu0 %v120
    %746 = vmatprep.subr.mxu0 %v117
    %747 = vmatpush2.msra.mxu0 %v116
    %748 = vmatprep.subr.mxu0 %v113
    %749 = vmatpush2.msra.mxu0 %v112
    %750 = vmatprep.subr.mxu0 %v109
    %751 = vmatpush2.msra.mxu0 %v108
    %752 = vmatprep.subr.mxu0 %v105
    %753 = vmatpush2.msra.mxu0 %v104
    %754 = vmatprep.mubr.f32.mxu0 %v461
    %755 = vmatmul.mubr.f32.gmra.mxu0 %v453
    %v756 = vpop.f32.mrf.mxu0
    %v757 = vadd.f32 %v435, %v756
    %v758 = vpop.f32.mrf.mxu0
    %v759 = vadd.f32 %v439, %v758
    %760 = vdwg.mxu0
    %761 = vmatprep.subr.mxu0 %v229
    %762 = vmatpush1.msra.mxu0 %v228
    %763 = vmatprep.subr.mxu0 %v225
    %764 = vmatpush1.msra.mxu0 %v224
    %765 = vmatprep.subr.mxu0 %v221
    %766 = vmatpush1.msra.mxu0 %v220
    %767 = vmatprep.subr.mxu0 %v217
    %768 = vmatpush1.msra.mxu0 %v216
    %769 = vmatprep.subr.mxu0 %v213
    %770 = vmatpush1.msra.mxu0 %v212
    %771 = vmatprep.subr.mxu0 %v209
    %772 = vmatpush1.msra.mxu0 %v208
    %773 = vmatprep.subr.mxu0 %v205
    %774 = vmatpush1.msra.mxu0 %v204
    %775 = vmatprep.subr.mxu0 %v201
    %776 = vmatpush1.msra.mxu0 %v200
    %777 = vmatprep.subr.mxu0 %v197
    %778 = vmatpush1.msra.mxu0 %v196
    %779 = vmatprep.subr.mxu0 %v193
    %780 = vmatpush1.msra.mxu0 %v192
    %781 = vmatprep.subr.mxu0 %v189
    %782 = vmatpush1.msra.mxu0 %v188
    %783 = vmatprep.subr.mxu0 %v185
    %784 = vmatpush1.msra.mxu0 %v184
    %785 = vmatprep.subr.mxu0 %v181
    %786 = vmatpush1.msra.mxu0 %v180
    %787 = vmatprep.subr.mxu0 %v177
    %788 = vmatpush1.msra.mxu0 %v176
    %789 = vmatprep.subr.mxu0 %v173
    %790 = vmatpush1.msra.mxu0 %v172
    %791 = vmatprep.subr.mxu0 %v169
    %792 = vmatpush1.msra.mxu0 %v168
    %793 = vmatprep.subr.mxu0 %v293
    %794 = vmatpush2.msra.mxu0 %v292
    %795 = vmatprep.subr.mxu0 %v289
    %796 = vmatpush2.msra.mxu0 %v288
    %797 = vmatprep.subr.mxu0 %v285
    %798 = vmatpush2.msra.mxu0 %v284
    %799 = vmatprep.subr.mxu0 %v281
    %800 = vmatpush2.msra.mxu0 %v280
    %801 = vmatprep.subr.mxu0 %v277
    %802 = vmatpush2.msra.mxu0 %v276
    %803 = vmatprep.subr.mxu0 %v273
    %804 = vmatpush2.msra.mxu0 %v272
    %805 = vmatprep.subr.mxu0 %v269
    %806 = vmatpush2.msra.mxu0 %v268
    %807 = vmatprep.subr.mxu0 %v265
    %808 = vmatpush2.msra.mxu0 %v264
    %809 = vmatprep.subr.mxu0 %v261
    %810 = vmatpush2.msra.mxu0 %v260
    %811 = vmatprep.subr.mxu0 %v257
    %812 = vmatpush2.msra.mxu0 %v256
    %813 = vmatprep.subr.mxu0 %v253
    %814 = vmatpush2.msra.mxu0 %v252
    %815 = vmatprep.subr.mxu0 %v249
    %816 = vmatpush2.msra.mxu0 %v248
    %817 = vmatprep.subr.mxu0 %v245
    %818 = vmatpush2.msra.mxu0 %v244
    %819 = vmatprep.subr.mxu0 %v241
    %820 = vmatpush2.msra.mxu0 %v240
    %821 = vmatprep.subr.mxu0 %v237
    %822 = vmatpush2.msra.mxu0 %v236
    %823 = vmatprep.subr.mxu0 %v233
    %824 = vmatpush2.msra.mxu0 %v232
    %825 = vmatprep.mubr.f32.mxu0 %v462
    %826 = vmatmul.mubr.f32.gmra.mxu0 %v460
    %v827 = vpop.f32.mrf.mxu0
    %v828 = vadd.f32 %v757, %v827
    %v829 = vpop.f32.mrf.mxu0
    %v830 = vadd.f32 %v759, %v829
    %831 = vdwg.mxu0
    %832 = vmatprep.subr.mxu0 %v357
    %833 = vmatpush1.msra.mxu0 %v356
    %834 = vmatprep.subr.mxu0 %v353
    %835 = vmatpush1.msra.mxu0 %v352
    %836 = vmatprep.subr.mxu0 %v349
    %837 = vmatpush1.msra.mxu0 %v348
    %838 = vmatprep.subr.mxu0 %v345
    %839 = vmatpush1.msra.mxu0 %v344
    %840 = vmatprep.subr.mxu0 %v341
    %841 = vmatpush1.msra.mxu0 %v340
    %842 = vmatprep.subr.mxu0 %v337
    %843 = vmatpush1.msra.mxu0 %v336
    %844 = vmatprep.subr.mxu0 %v333
    %845 = vmatpush1.msra.mxu0 %v332
    %846 = vmatprep.subr.mxu0 %v329
    %847 = vmatpush1.msra.mxu0 %v328
    %848 = vmatprep.subr.mxu0 %v325
    %849 = vmatpush1.msra.mxu0 %v324
    %850 = vmatprep.subr.mxu0 %v321
    %851 = vmatpush1.msra.mxu0 %v320
    %852 = vmatprep.subr.mxu0 %v317
    %853 = vmatpush1.msra.mxu0 %v316
    %854 = vmatprep.subr.mxu0 %v313
    %855 = vmatpush1.msra.mxu0 %v312
    %856 = vmatprep.subr.mxu0 %v309
    %857 = vmatpush1.msra.mxu0 %v308
    %858 = vmatprep.subr.mxu0 %v305
    %859 = vmatpush1.msra.mxu0 %v304
    %860 = vmatprep.subr.mxu0 %v301
    %861 = vmatpush1.msra.mxu0 %v300
    %862 = vmatprep.subr.mxu0 %v297
    %863 = vmatpush1.msra.mxu0 %v296
    %864 = vmatprep.subr.mxu0 %v421
    %865 = vmatpush2.msra.mxu0 %v420
    %866 = vmatprep.subr.mxu0 %v417
    %867 = vmatpush2.msra.mxu0 %v416
    %868 = vmatprep.subr.mxu0 %v413
    %869 = vmatpush2.msra.mxu0 %v412
    %870 = vmatprep.subr.mxu0 %v409
    %871 = vmatpush2.msra.mxu0 %v408
    %872 = vmatprep.subr.mxu0 %v405
    %873 = vmatpush2.msra.mxu0 %v404
    %874 = vmatprep.subr.mxu0 %v401
    %875 = vmatpush2.msra.mxu0 %v400
    %876 = vmatprep.subr.mxu0 %v397
    %877 = vmatpush2.msra.mxu0 %v396
    %878 = vmatprep.subr.mxu0 %v393
    %879 = vmatpush2.msra.mxu0 %v392
    %880 = vmatprep.subr.mxu0 %v389
    %881 = vmatpush2.msra.mxu0 %v388
    %882 = vmatprep.subr.mxu0 %v385
    %883 = vmatpush2.msra.mxu0 %v384
    %884 = vmatprep.subr.mxu0 %v381
    %885 = vmatpush2.msra.mxu0 %v380
    %886 = vmatprep.subr.mxu0 %v377
    %887 = vmatpush2.msra.mxu0 %v376
    %888 = vmatprep.subr.mxu0 %v373
    %889 = vmatpush2.msra.mxu0 %v372
    %890 = vmatprep.subr.mxu0 %v369
    %891 = vmatpush2.msra.mxu0 %v368
    %892 = vmatprep.subr.mxu0 %v365
    %893 = vmatpush2.msra.mxu0 %v364
    %894 = vmatprep.subr.mxu0 %v361
    %895 = vmatpush2.msra.mxu0 %v360
    %896 = vmatprep.mubr.f32.mxu0 %v470
    %897 = vmatmul.mubr.f32.gmra.mxu0 %v469
    %v898 = vpop.f32.mrf.mxu0
    %v899 = vadd.f32 %v828, %v898
    %v900 = vpop.f32.mrf.mxu0
    %v901 = vadd.f32 %v830, %v900
    %902 = vdwg.mxu0
    %v903 = vmax.f32 %v686, 0.0
    %v904 = vmax.f32 %v688, 0.0
    %v905 = vmax.f32 %v899, 0.0
    %v906 = vmax.f32 %v901, 0.0
    %v907 = vld [vmem:[%s1] sm:$0x3]
    %v908 = vld [vmem:[%s4] sm:$0xff]
    %v909 = vld [vmem:[%s4 + $0x8] sm:$0xff]
    %v910 = vld [vmem:[%s4 + $0x10] sm:$0xff]
    %v911 = vld [vmem:[%s4 + $0x18] sm:$0xff]
    %v912 = vld [vmem:[%s4 + $0x20] sm:$0xff]
    %v913 = vld [vmem:[%s4 + $0x28] sm:$0xff]
    %v914 = vld [vmem:[%s4 + $0x30] sm:$0xff]
    %v915 = vld [vmem:[%s4 + $0x38] sm:$0xff]
    %v916 = vld [vmem:[%s5] sm:$0x3]
    %v918 = vlaneseq
    %v919 = vshrl.u32 %v918, 7
    %v920 = vsub.s32 0, %v919
    %v921 = vrot.slane %v916, %v920
    %v922 = vlaneseq
    %v923 = vshrl.u32 %v922, 7
    %v924 = vsub.s32 1, %v923
    %v925 = vrot.slane %v916, %v924
    %vm928 = vcmask 261120
    %v930 = vsel %vm928, %v907, 0
    %932 = vmatprep.subr.mxu0 0.0
    %933 = vmatpush1.msra.mxu0 0.0
    %934 = vmatprep.subr.mxu0 0.0
    %935 = vmatpush1.msra.mxu0 0.0
    %936 = vmatprep.subr.mxu0 0.0
    %937 = vmatpush1.msra.mxu0 0.0
    %938 = vmatprep.subr.mxu0 0.0
    %939 = vmatpush1.msra.mxu0 0.0
    %940 = vmatprep.subr.mxu0 0.0
    %941 = vmatpush1.msra.mxu0 0.0
    %942 = vmatprep.subr.mxu0 0.0
    %943 = vmatpush1.msra.mxu0 0.0
    %944 = vmatprep.subr.mxu0 0.0
    %945 = vmatpush1.msra.mxu0 0.0
    %946 = vmatprep.subr.mxu0 0.0
    %947 = vmatpush1.msra.mxu0 0.0
    %948 = vmatprep.subr.mxu0 0.0
    %949 = vmatpush1.msra.mxu0 0.0
    %950 = vmatprep.subr.mxu0 0.0
    %951 = vmatpush1.msra.mxu0 0.0
    %952 = vmatprep.subr.mxu0 0.0
    %953 = vmatpush1.msra.mxu0 0.0
    %954 = vmatprep.subr.mxu0 0.0
    %955 = vmatpush1.msra.mxu0 0.0
    %956 = vmatprep.subr.mxu0 %v915
    %957 = vmatpush1.msra.mxu0 %v914
    %958 = vmatprep.subr.mxu0 %v913
    %959 = vmatpush1.msra.mxu0 %v912
    %960 = vmatprep.subr.mxu0 %v911
    %961 = vmatpush1.msra.mxu0 %v910
    %962 = vmatprep.subr.mxu0 %v909
    %963 = vmatpush1.msra.mxu0 %v908
    %964 = vmatprep.subr.mxu0 0.0
    %965 = vmatpush2.msra.mxu0 0.0
    %966 = vmatprep.subr.mxu0 0.0
    %967 = vmatpush2.msra.mxu0 0.0
    %968 = vmatprep.subr.mxu0 0.0
    %969 = vmatpush2.msra.mxu0 0.0
    %970 = vmatprep.subr.mxu0 0.0
    %971 = vmatpush2.msra.mxu0 0.0
    %972 = vmatprep.subr.mxu0 0.0
    %973 = vmatpush2.msra.mxu0 0.0
    %974 = vmatprep.subr.mxu0 0.0
    %975 = vmatpush2.msra.mxu0 0.0
    %976 = vmatprep.subr.mxu0 0.0
    %977 = vmatpush2.msra.mxu0 0.0
    %978 = vmatprep.subr.mxu0 0.0
    %979 = vmatpush2.msra.mxu0 0.0
    %980 = vmatprep.subr.mxu0 0.0
    %981 = vmatpush2.msra.mxu0 0.0
    %982 = vmatprep.subr.mxu0 0.0
    %983 = vmatpush2.msra.mxu0 0.0
    %984 = vmatprep.subr.mxu0 0.0
    %985 = vmatpush2.msra.mxu0 0.0
    %986 = vmatprep.subr.mxu0 0.0
    %987 = vmatpush2.msra.mxu0 0.0
    %988 = vmatprep.subr.mxu0 0.0
    %989 = vmatpush2.msra.mxu0 0.0
    %990 = vmatprep.subr.mxu0 0.0
    %991 = vmatpush2.msra.mxu0 0.0
    %992 = vmatprep.subr.mxu0 0.0
    %993 = vmatpush2.msra.mxu0 0.0
    %994 = vmatprep.subr.mxu0 0.0
    %995 = vmatpush2.msra.mxu0 0.0
    %996 = vmatprep.mubr.f32.mxu0 0.0
    %997 = vmatmul.mubr.f32.gmra.mxu0 %v930
    %v998 = vpop.f32.mrf.mxu0
    %v999 = vadd.f32 %v921, %v998
    %v1000 = vpop.f32.mrf.mxu0
    %v1001 = vadd.f32 %v925, %v1000
    %1002 = vdwg.mxu0
    %v1003 = vmax.f32 %v999, 0.0
    %v1004 = vmax.f32 %v1001, 0.0
    %v1005 = vld [vmem:[%s6] sm:$0xff]
    %v1006 = vld [vmem:[%s6 + $0x8] sm:$0xff]
    %v1007 = vld [vmem:[%s6 + $0x10] sm:$0xff]
    %v1008 = vld [vmem:[%s6 + $0x18] sm:$0xff]
    %v1009 = vld [vmem:[%s6 + $0x20] sm:$0xff]
    %v1010 = vld [vmem:[%s6 + $0x28] sm:$0xff]
    %v1011 = vld [vmem:[%s6 + $0x30] sm:$0xff]
    %v1012 = vld [vmem:[%s6 + $0x38] sm:$0xff]
    %v1013 = vld [vmem:[%s6 + $0x40] sm:$0xff]
    %v1014 = vld [vmem:[%s6 + $0x48] sm:$0xff]
    %v1015 = vld [vmem:[%s6 + $0x50] sm:$0xff]
    %v1016 = vld [vmem:[%s6 + $0x58] sm:$0xff]
    %v1017 = vld [vmem:[%s6 + $0x60] sm:$0xff]
    %v1018 = vld [vmem:[%s6 + $0x68] sm:$0xff]
    %v1019 = vld [vmem:[%s6 + $0x70] sm:$0xff]
    %v1020 = vld [vmem:[%s6 + $0x78] sm:$0xff]
    %v1021 = vld [vmem:[%s6 + $0x80] sm:$0xff]
    %v1022 = vld [vmem:[%s6 + $0x88] sm:$0xff]
    %v1023 = vld [vmem:[%s6 + $0x90] sm:$0xff]
    %v1024 = vld [vmem:[%s6 + $0x98] sm:$0xff]
    %v1025 = vld [vmem:[%s6 + $0xa0] sm:$0xff]
    %v1026 = vld [vmem:[%s6 + $0xa8] sm:$0xff]
    %v1027 = vld [vmem:[%s6 + $0xb0] sm:$0xff]
    %v1028 = vld [vmem:[%s6 + $0xb8] sm:$0xff]
    %v1029 = vld [vmem:[%s6 + $0xc0] sm:$0xff]
    %v1030 = vld [vmem:[%s6 + $0xc8] sm:$0xff]
    %v1031 = vld [vmem:[%s6 + $0xd0] sm:$0xff]
    %v1032 = vld [vmem:[%s6 + $0xd8] sm:$0xff]
    %v1033 = vld [vmem:[%s6 + $0xe0] sm:$0xff]
    %v1034 = vld [vmem:[%s6 + $0xe8] sm:$0xff]
    %v1035 = vld [vmem:[%s6 + $0xf0] sm:$0xff]
    %v1036 = vld [vmem:[%s6 + $0xf8] sm:$0xff]
    %v1037 = vld [vmem:[%s6 + $0x100] sm:$0xff]
    %v1038 = vld [vmem:[%s6 + $0x108] sm:$0xff]
    %v1039 = vld [vmem:[%s6 + $0x110] sm:$0xff]
    %v1040 = vld [vmem:[%s6 + $0x118] sm:$0xff]
    %v1041 = vld [vmem:[%s6 + $0x120] sm:$0xff]
    %v1042 = vld [vmem:[%s6 + $0x128] sm:$0xff]
    %v1043 = vld [vmem:[%s6 + $0x130] sm:$0xff]
    %v1044 = vld [vmem:[%s6 + $0x138] sm:$0xff]
    %v1045 = vld [vmem:[%s6 + $0x140] sm:$0xff]
    %v1046 = vld [vmem:[%s6 + $0x148] sm:$0xff]
    %v1047 = vld [vmem:[%s6 + $0x150] sm:$0xff]
    %v1048 = vld [vmem:[%s6 + $0x158] sm:$0xff]
    %v1049 = vld [vmem:[%s6 + $0x160] sm:$0xff]
    %v1050 = vld [vmem:[%s6 + $0x168] sm:$0xff]
    %v1051 = vld [vmem:[%s6 + $0x170] sm:$0xff]
    %v1052 = vld [vmem:[%s6 + $0x178] sm:$0xff]
    %v1053 = vld [vmem:[%s6 + $0x180] sm:$0xff]
    %v1054 = vld [vmem:[%s6 + $0x188] sm:$0xff]
    %v1055 = vld [vmem:[%s6 + $0x190] sm:$0xff]
    %v1056 = vld [vmem:[%s6 + $0x198] sm:$0xff]
    %v1057 = vld [vmem:[%s6 + $0x1a0] sm:$0xff]
    %v1058 = vld [vmem:[%s6 + $0x1a8] sm:$0xff]
    %v1059 = vld [vmem:[%s6 + $0x1b0] sm:$0xff]
    %v1060 = vld [vmem:[%s6 + $0x1b8] sm:$0xff]
    %v1061 = vld [vmem:[%s6 + $0x1c0] sm:$0xff]
    %v1062 = vld [vmem:[%s6 + $0x1c8] sm:$0xff]
    %v1063 = vld [vmem:[%s6 + $0x1d0] sm:$0xff]
    %v1064 = vld [vmem:[%s6 + $0x1d8] sm:$0xff]
    %v1065 = vld [vmem:[%s6 + $0x1e0] sm:$0xff]
    %v1066 = vld [vmem:[%s6 + $0x1e8] sm:$0xff]
    %v1067 = vld [vmem:[%s6 + $0x1f0] sm:$0xff]
    %v1068 = vld [vmem:[%s6 + $0x1f8] sm:$0xff]
    %v1069 = vld [vmem:[%s6 + $0x200] sm:$0xff]
    %v1070 = vld [vmem:[%s6 + $0x208] sm:$0xff]
    %v1071 = vld [vmem:[%s6 + $0x210] sm:$0xff]
    %v1072 = vld [vmem:[%s6 + $0x218] sm:$0xff]
    %v1073 = vld [vmem:[%s6 + $0x220] sm:$0xff]
    %v1074 = vld [vmem:[%s6 + $0x228] sm:$0xff]
    %v1075 = vld [vmem:[%s6 + $0x230] sm:$0xff]
    %v1076 = vld [vmem:[%s6 + $0x238] sm:$0xff]
    %v1077 = vld [vmem:[%s6 + $0x240] sm:$0xff]
    %v1078 = vld [vmem:[%s6 + $0x248] sm:$0xff]
    %v1079 = vld [vmem:[%s6 + $0x250] sm:$0xff]
    %v1080 = vld [vmem:[%s6 + $0x258] sm:$0xff]
    %v1081 = vld [vmem:[%s6 + $0x260] sm:$0xff]
    %v1082 = vld [vmem:[%s6 + $0x268] sm:$0xff]
    %v1083 = vld [vmem:[%s6 + $0x270] sm:$0xff]
    %v1084 = vld [vmem:[%s6 + $0x278] sm:$0xff]
    %v1085 = vld [vmem:[%s6 + $0x280] sm:$0xff]
    %v1086 = vld [vmem:[%s6 + $0x288] sm:$0xff]
    %v1087 = vld [vmem:[%s6 + $0x290] sm:$0xff]
    %v1088 = vld [vmem:[%s6 + $0x298] sm:$0xff]
    %v1089 = vld [vmem:[%s6 + $0x2a0] sm:$0xff]
    %v1090 = vld [vmem:[%s6 + $0x2a8] sm:$0xff]
    %v1091 = vld [vmem:[%s6 + $0x2b0] sm:$0xff]
    %v1092 = vld [vmem:[%s6 + $0x2b8] sm:$0xff]
    %v1093 = vld [vmem:[%s6 + $0x2c0] sm:$0xff]
    %v1094 = vld [vmem:[%s6 + $0x2c8] sm:$0xff]
    %v1095 = vld [vmem:[%s6 + $0x2d0] sm:$0xff]
    %v1096 = vld [vmem:[%s6 + $0x2d8] sm:$0xff]
    %v1097 = vld [vmem:[%s6 + $0x2e0] sm:$0xff]
    %v1098 = vld [vmem:[%s6 + $0x2e8] sm:$0xff]
    %v1099 = vld [vmem:[%s6 + $0x2f0] sm:$0xff]
    %v1100 = vld [vmem:[%s6 + $0x2f8] sm:$0xff]
    %v1101 = vld [vmem:[%s6 + $0x300] sm:$0xff]
    %v1102 = vld [vmem:[%s6 + $0x308] sm:$0xff]
    %v1103 = vld [vmem:[%s6 + $0x310] sm:$0xff]
    %v1104 = vld [vmem:[%s6 + $0x318] sm:$0xff]
    %v1105 = vld [vmem:[%s6 + $0x320] sm:$0xff]
    %v1106 = vld [vmem:[%s6 + $0x328] sm:$0xff]
    %v1107 = vld [vmem:[%s6 + $0x330] sm:$0xff]
    %v1108 = vld [vmem:[%s6 + $0x338] sm:$0xff]
    %v1109 = vld [vmem:[%s6 + $0x340] sm:$0xff]
    %v1110 = vld [vmem:[%s6 + $0x348] sm:$0xff]
    %v1111 = vld [vmem:[%s6 + $0x350] sm:$0xff]
    %v1112 = vld [vmem:[%s6 + $0x358] sm:$0xff]
    %v1113 = vld [vmem:[%s6 + $0x360] sm:$0xff]
    %v1114 = vld [vmem:[%s6 + $0x368] sm:$0xff]
    %v1115 = vld [vmem:[%s6 + $0x370] sm:$0xff]
    %v1116 = vld [vmem:[%s6 + $0x378] sm:$0xff]
    %v1117 = vld [vmem:[%s6 + $0x380] sm:$0xff]
    %v1118 = vld [vmem:[%s6 + $0x388] sm:$0xff]
    %v1119 = vld [vmem:[%s6 + $0x390] sm:$0xff]
    %v1120 = vld [vmem:[%s6 + $0x398] sm:$0xff]
    %v1121 = vld [vmem:[%s6 + $0x3a0] sm:$0xff]
    %v1122 = vld [vmem:[%s6 + $0x3a8] sm:$0xff]
    %v1123 = vld [vmem:[%s6 + $0x3b0] sm:$0xff]
    %v1124 = vld [vmem:[%s6 + $0x3b8] sm:$0xff]
    %v1125 = vld [vmem:[%s6 + $0x3c0] sm:$0xff]
    %v1126 = vld [vmem:[%s6 + $0x3c8] sm:$0xff]
    %v1127 = vld [vmem:[%s6 + $0x3d0] sm:$0xff]
    %v1128 = vld [vmem:[%s6 + $0x3d8] sm:$0xff]
    %v1129 = vld [vmem:[%s6 + $0x3e0] sm:$0xff]
    %v1130 = vld [vmem:[%s6 + $0x3e8] sm:$0xff]
    %v1131 = vld [vmem:[%s6 + $0x3f0] sm:$0xff]
    %v1132 = vld [vmem:[%s6 + $0x3f8] sm:$0xff]
    %v1133 = vld [vmem:[%s7] sm:$0xf]
    %v1135 = vlaneseq
    %v1136 = vshrl.u32 %v1135, 7
    %v1137 = vsub.s32 0, %v1136
    %v1138 = vrot.slane %v1133, %v1137
    %v1139 = vlaneseq
    %v1140 = vshrl.u32 %v1139, 7
    %v1141 = vsub.s32 1, %v1140
    %v1142 = vrot.slane %v1133, %v1141
    %v1143 = vlaneseq
    %v1144 = vshrl.u32 %v1143, 7
    %v1145 = vsub.s32 2, %v1144
    %v1146 = vrot.slane %v1133, %v1145
    %v1147 = vlaneseq
    %v1148 = vshrl.u32 %v1147, 7
    %v1149 = vsub.s32 3, %v1148
    %v1150 = vrot.slane %v1133, %v1149
    %1155 = vmatprep.subr.mxu0 %v1066
    %1156 = vmatpush1.msra.mxu0 %v1065
    %1157 = vmatprep.subr.mxu0 %v1062
    %1158 = vmatpush1.msra.mxu0 %v1061
    %1159 = vmatprep.subr.mxu0 %v1058
    %1160 = vmatpush1.msra.mxu0 %v1057
    %1161 = vmatprep.subr.mxu0 %v1054
    %1162 = vmatpush1.msra.mxu0 %v1053
    %1163 = vmatprep.subr.mxu0 %v1050
    %1164 = vmatpush1.msra.mxu0 %v1049
    %1165 = vmatprep.subr.mxu0 %v1046
    %1166 = vmatpush1.msra.mxu0 %v1045
    %1167 = vmatprep.subr.mxu0 %v1042
    %1168 = vmatpush1.msra.mxu0 %v1041
    %1169 = vmatprep.subr.mxu0 %v1038
    %1170 = vmatpush1.msra.mxu0 %v1037
    %1171 = vmatprep.subr.mxu0 %v1034
    %1172 = vmatpush1.msra.mxu0 %v1033
    %1173 = vmatprep.subr.mxu0 %v1030
    %1174 = vmatpush1.msra.mxu0 %v1029
    %1175 = vmatprep.subr.mxu0 %v1026
    %1176 = vmatpush1.msra.mxu0 %v1025
    %1177 = vmatprep.subr.mxu0 %v1022
    %1178 = vmatpush1.msra.mxu0 %v1021
    %1179 = vmatprep.subr.mxu0 %v1018
    %1180 = vmatpush1.msra.mxu0 %v1017
    %1181 = vmatprep.subr.mxu0 %v1014
    %1182 = vmatpush1.msra.mxu0 %v1013
    %1183 = vmatprep.subr.mxu0 %v1010
    %1184 = vmatpush1.msra.mxu0 %v1009
    %1185 = vmatprep.subr.mxu0 %v1006
    %1186 = vmatpush1.msra.mxu0 %v1005
    %1187 = vmatprep.subr.mxu0 %v1130
    %1188 = vmatpush2.msra.mxu0 %v1129
    %1189 = vmatprep.subr.mxu0 %v1126
    %1190 = vmatpush2.msra.mxu0 %v1125
    %1191 = vmatprep.subr.mxu0 %v1122
    %1192 = vmatpush2.msra.mxu0 %v1121
    %1193 = vmatprep.subr.mxu0 %v1118
    %1194 = vmatpush2.msra.mxu0 %v1117
    %1195 = vmatprep.subr.mxu0 %v1114
    %1196 = vmatpush2.msra.mxu0 %v1113
    %1197 = vmatprep.subr.mxu0 %v1110
    %1198 = vmatpush2.msra.mxu0 %v1109
    %1199 = vmatprep.subr.mxu0 %v1106
    %1200 = vmatpush2.msra.mxu0 %v1105
    %1201 = vmatprep.subr.mxu0 %v1102
    %1202 = vmatpush2.msra.mxu0 %v1101
    %1203 = vmatprep.subr.mxu0 %v1098
    %1204 = vmatpush2.msra.mxu0 %v1097
    %1205 = vmatprep.subr.mxu0 %v1094
    %1206 = vmatpush2.msra.mxu0 %v1093
    %1207 = vmatprep.subr.mxu0 %v1090
    %1208 = vmatpush2.msra.mxu0 %v1089
    %1209 = vmatprep.subr.mxu0 %v1086
    %1210 = vmatpush2.msra.mxu0 %v1085
    %1211 = vmatprep.subr.mxu0 %v1082
    %1212 = vmatpush2.msra.mxu0 %v1081
    %1213 = vmatprep.subr.mxu0 %v1078
    %1214 = vmatpush2.msra.mxu0 %v1077
    %1215 = vmatprep.subr.mxu0 %v1074
    %1216 = vmatpush2.msra.mxu0 %v1073
    %1217 = vmatprep.subr.mxu0 %v1070
    %1218 = vmatpush2.msra.mxu0 %v1069
    %1219 = vmatprep.mubr.f32.mxu0 %v1004
    %1220 = vmatmul.mubr.f32.gmra.mxu0 %v1003
    %v1221 = vpop.f32.mrf.mxu0
    %v1222 = vadd.f32 %v1138, %v1221
    %v1223 = vpop.f32.mrf.mxu0
    %v1224 = vadd.f32 %v1142, %v1223
    %1225 = vdwg.mxu0
    %1226 = vmatprep.subr.mxu0 %v1068
    %1227 = vmatpush1.msra.mxu0 %v1067
    %1228 = vmatprep.subr.mxu0 %v1064
    %1229 = vmatpush1.msra.mxu0 %v1063
    %1230 = vmatprep.subr.mxu0 %v1060
    %1231 = vmatpush1.msra.mxu0 %v1059
    %1232 = vmatprep.subr.mxu0 %v1056
    %1233 = vmatpush1.msra.mxu0 %v1055
    %1234 = vmatprep.subr.mxu0 %v1052
    %1235 = vmatpush1.msra.mxu0 %v1051
    %1236 = vmatprep.subr.mxu0 %v1048
    %1237 = vmatpush1.msra.mxu0 %v1047
    %1238 = vmatprep.subr.mxu0 %v1044
    %1239 = vmatpush1.msra.mxu0 %v1043
    %1240 = vmatprep.subr.mxu0 %v1040
    %1241 = vmatpush1.msra.mxu0 %v1039
    %1242 = vmatprep.subr.mxu0 %v1036
    %1243 = vmatpush1.msra.mxu0 %v1035
    %1244 = vmatprep.subr.mxu0 %v1032
    %1245 = vmatpush1.msra.mxu0 %v1031
    %1246 = vmatprep.subr.mxu0 %v1028
    %1247 = vmatpush1.msra.mxu0 %v1027
    %1248 = vmatprep.subr.mxu0 %v1024
    %1249 = vmatpush1.msra.mxu0 %v1023
    %1250 = vmatprep.subr.mxu0 %v1020
    %1251 = vmatpush1.msra.mxu0 %v1019
    %1252 = vmatprep.subr.mxu0 %v1016
    %1253 = vmatpush1.msra.mxu0 %v1015
    %1254 = vmatprep.subr.mxu0 %v1012
    %1255 = vmatpush1.msra.mxu0 %v1011
    %1256 = vmatprep.subr.mxu0 %v1008
    %1257 = vmatpush1.msra.mxu0 %v1007
    %1258 = vmatprep.subr.mxu0 %v1132
    %1259 = vmatpush2.msra.mxu0 %v1131
    %1260 = vmatprep.subr.mxu0 %v1128
    %1261 = vmatpush2.msra.mxu0 %v1127
    %1262 = vmatprep.subr.mxu0 %v1124
    %1263 = vmatpush2.msra.mxu0 %v1123
    %1264 = vmatprep.subr.mxu0 %v1120
    %1265 = vmatpush2.msra.mxu0 %v1119
    %1266 = vmatprep.subr.mxu0 %v1116
    %1267 = vmatpush2.msra.mxu0 %v1115
    %1268 = vmatprep.subr.mxu0 %v1112
    %1269 = vmatpush2.msra.mxu0 %v1111
    %1270 = vmatprep.subr.mxu0 %v1108
    %1271 = vmatpush2.msra.mxu0 %v1107
    %1272 = vmatprep.subr.mxu0 %v1104
    %1273 = vmatpush2.msra.mxu0 %v1103
    %1274 = vmatprep.subr.mxu0 %v1100
    %1275 = vmatpush2.msra.mxu0 %v1099
    %1276 = vmatprep.subr.mxu0 %v1096
    %1277 = vmatpush2.msra.mxu0 %v1095
    %1278 = vmatprep.subr.mxu0 %v1092
    %1279 = vmatpush2.msra.mxu0 %v1091
    %1280 = vmatprep.subr.mxu0 %v1088
    %1281 = vmatpush2.msra.mxu0 %v1087
    %1282 = vmatprep.subr.mxu0 %v1084
    %1283 = vmatpush2.msra.mxu0 %v1083
    %1284 = vmatprep.subr.mxu0 %v1080
    %1285 = vmatpush2.msra.mxu0 %v1079
    %1286 = vmatprep.subr.mxu0 %v1076
    %1287 = vmatpush2.msra.mxu0 %v1075
    %1288 = vmatprep.subr.mxu0 %v1072
    %1289 = vmatpush2.msra.mxu0 %v1071
    %1290 = vmatprep.mubr.f32.mxu0 %v1004
    %1291 = vmatmul.mubr.f32.gmra.mxu0 %v1003
    %v1292 = vpop.f32.mrf.mxu0
    %v1293 = vadd.f32 %v1146, %v1292
    %v1294 = vpop.f32.mrf.mxu0
    %v1295 = vadd.f32 %v1150, %v1294
    %1296 = vdwg.mxu0
    %v1297 = vmax.f32 %v1222, 0.0
    %v1298 = vmax.f32 %v1224, 0.0
    %v1299 = vmax.f32 %v1293, 0.0
    %v1300 = vmax.f32 %v1295, 0.0
    %v1301 = vadd.f32 %v903, %v1297
    %v1302 = vadd.f32 %v904, %v1298
    %v1303 = vadd.f32 %v905, %v1299
    %v1304 = vadd.f32 %v906, %v1300
    %v1305 = vld [vmem:[%s8] sm:$0xff]
    %v1306 = vld [vmem:[%s8 + $0x8] sm:$0xff]
    %v1307 = vld [vmem:[%s8 + $0x10] sm:$0xff]
    %v1308 = vld [vmem:[%s8 + $0x18] sm:$0xff]
    %v1309 = vld [vmem:[%s8 + $0x20] sm:$0xff]
    %v1310 = vld [vmem:[%s8 + $0x28] sm:$0xff]
    %v1311 = vld [vmem:[%s8 + $0x30] sm:$0xff]
    %v1312 = vld [vmem:[%s8 + $0x38] sm:$0xff]
    %v1313 = vld [vmem:[%s8 + $0x40] sm:$0xff]
    %v1314 = vld [vmem:[%s8 + $0x48] sm:$0xff]
    %v1315 = vld [vmem:[%s8 + $0x50] sm:$0xff]
    %v1316 = vld [vmem:[%s8 + $0x58] sm:$0xff]
    %v1317 = vld [vmem:[%s8 + $0x60] sm:$0xff]
    %v1318 = vld [vmem:[%s8 + $0x68] sm:$0xff]
    %v1319 = vld [vmem:[%s8 + $0x70] sm:$0xff]
    %v1320 = vld [vmem:[%s8 + $0x78] sm:$0xff]
    %v1321 = vld [vmem:[%s8 + $0x80] sm:$0xff]
    %v1322 = vld [vmem:[%s8 + $0x88] sm:$0xff]
    %v1323 = vld [vmem:[%s8 + $0x90] sm:$0xff]
    %v1324 = vld [vmem:[%s8 + $0x98] sm:$0xff]
    %v1325 = vld [vmem:[%s8 + $0xa0] sm:$0xff]
    %v1326 = vld [vmem:[%s8 + $0xa8] sm:$0xff]
    %v1327 = vld [vmem:[%s8 + $0xb0] sm:$0xff]
    %v1328 = vld [vmem:[%s8 + $0xb8] sm:$0xff]
    %v1329 = vld [vmem:[%s8 + $0xc0] sm:$0xff]
    %v1330 = vld [vmem:[%s8 + $0xc8] sm:$0xff]
    %v1331 = vld [vmem:[%s8 + $0xd0] sm:$0xff]
    %v1332 = vld [vmem:[%s8 + $0xd8] sm:$0xff]
    %v1333 = vld [vmem:[%s8 + $0xe0] sm:$0xff]
    %v1334 = vld [vmem:[%s8 + $0xe8] sm:$0xff]
    %v1335 = vld [vmem:[%s8 + $0xf0] sm:$0xff]
    %v1336 = vld [vmem:[%s8 + $0xf8] sm:$0xff]
    %v1337 = vld [vmem:[%s8 + $0x100] sm:$0xff]
    %v1338 = vld [vmem:[%s8 + $0x108] sm:$0xff]
    %v1339 = vld [vmem:[%s8 + $0x110] sm:$0xff]
    %v1340 = vld [vmem:[%s8 + $0x118] sm:$0xff]
    %v1341 = vld [vmem:[%s8 + $0x120] sm:$0xff]
    %v1342 = vld [vmem:[%s8 + $0x128] sm:$0xff]
    %v1343 = vld [vmem:[%s8 + $0x130] sm:$0xff]
    %v1344 = vld [vmem:[%s8 + $0x138] sm:$0xff]
    %v1345 = vld [vmem:[%s8 + $0x140] sm:$0xff]
    %v1346 = vld [vmem:[%s8 + $0x148] sm:$0xff]
    %v1347 = vld [vmem:[%s8 + $0x150] sm:$0xff]
    %v1348 = vld [vmem:[%s8 + $0x158] sm:$0xff]
    %v1349 = vld [vmem:[%s8 + $0x160] sm:$0xff]
    %v1350 = vld [vmem:[%s8 + $0x168] sm:$0xff]
    %v1351 = vld [vmem:[%s8 + $0x170] sm:$0xff]
    %v1352 = vld [vmem:[%s8 + $0x178] sm:$0xff]
    %v1353 = vld [vmem:[%s8 + $0x180] sm:$0xff]
    %v1354 = vld [vmem:[%s8 + $0x188] sm:$0xff]
    %v1355 = vld [vmem:[%s8 + $0x190] sm:$0xff]
    %v1356 = vld [vmem:[%s8 + $0x198] sm:$0xff]
    %v1357 = vld [vmem:[%s8 + $0x1a0] sm:$0xff]
    %v1358 = vld [vmem:[%s8 + $0x1a8] sm:$0xff]
    %v1359 = vld [vmem:[%s8 + $0x1b0] sm:$0xff]
    %v1360 = vld [vmem:[%s8 + $0x1b8] sm:$0xff]
    %v1361 = vld [vmem:[%s8 + $0x1c0] sm:$0xff]
    %v1362 = vld [vmem:[%s8 + $0x1c8] sm:$0xff]
    %v1363 = vld [vmem:[%s8 + $0x1d0] sm:$0xff]
    %v1364 = vld [vmem:[%s8 + $0x1d8] sm:$0xff]
    %v1365 = vld [vmem:[%s8 + $0x1e0] sm:$0xff]
    %v1366 = vld [vmem:[%s8 + $0x1e8] sm:$0xff]
    %v1367 = vld [vmem:[%s8 + $0x1f0] sm:$0xff]
    %v1368 = vld [vmem:[%s8 + $0x1f8] sm:$0xff]
    %v1369 = vld [vmem:[%s9] sm:$0x1]
    %v1371 = vlaneseq
    %v1372 = vshrl.u32 %v1371, 7
    %v1373 = vsub.s32 0, %v1372
    %v1374 = vrot.slane %v1369, %v1373
    %1376 = vmatprep.subr.mxu0 0.0
    %1377 = vmatpush1.msra.mxu0 %v1320
    %1378 = vmatprep.subr.mxu0 0.0
    %1379 = vmatpush1.msra.mxu0 %v1319
    %1380 = vmatprep.subr.mxu0 0.0
    %1381 = vmatpush1.msra.mxu0 %v1318
    %1382 = vmatprep.subr.mxu0 0.0
    %1383 = vmatpush1.msra.mxu0 %v1317
    %1384 = vmatprep.subr.mxu0 0.0
    %1385 = vmatpush1.msra.mxu0 %v1316
    %1386 = vmatprep.subr.mxu0 0.0
    %1387 = vmatpush1.msra.mxu0 %v1315
    %1388 = vmatprep.subr.mxu0 0.0
    %1389 = vmatpush1.msra.mxu0 %v1314
    %1390 = vmatprep.subr.mxu0 0.0
    %1391 = vmatpush1.msra.mxu0 %v1313
    %1392 = vmatprep.subr.mxu0 0.0
    %1393 = vmatpush1.msra.mxu0 %v1312
    %1394 = vmatprep.subr.mxu0 0.0
    %1395 = vmatpush1.msra.mxu0 %v1311
    %1396 = vmatprep.subr.mxu0 0.0
    %1397 = vmatpush1.msra.mxu0 %v1310
    %1398 = vmatprep.subr.mxu0 0.0
    %1399 = vmatpush1.msra.mxu0 %v1309
    %1400 = vmatprep.subr.mxu0 0.0
    %1401 = vmatpush1.msra.mxu0 %v1308
    %1402 = vmatprep.subr.mxu0 0.0
    %1403 = vmatpush1.msra.mxu0 %v1307
    %1404 = vmatprep.subr.mxu0 0.0
    %1405 = vmatpush1.msra.mxu0 %v1306
    %1406 = vmatprep.subr.mxu0 0.0
    %1407 = vmatpush1.msra.mxu0 %v1305
    %1408 = vmatprep.subr.mxu0 0.0
    %1409 = vmatpush2.msra.mxu0 %v1336
    %1410 = vmatprep.subr.mxu0 0.0
    %1411 = vmatpush2.msra.mxu0 %v1335
    %1412 = vmatprep.subr.mxu0 0.0
    %1413 = vmatpush2.msra.mxu0 %v1334
    %1414 = vmatprep.subr.mxu0 0.0
    %1415 = vmatpush2.msra.mxu0 %v1333
    %1416 = vmatprep.subr.mxu0 0.0
    %1417 = vmatpush2.msra.mxu0 %v1332
    %1418 = vmatprep.subr.mxu0 0.0
    %1419 = vmatpush2.msra.mxu0 %v1331
    %1420 = vmatprep.subr.mxu0 0.0
    %1421 = vmatpush2.msra.mxu0 %v1330
    %1422 = vmatprep.subr.mxu0 0.0
    %1423 = vmatpush2.msra.mxu0 %v1329
    %1424 = vmatprep.subr.mxu0 0.0
    %1425 = vmatpush2.msra.mxu0 %v1328
    %1426 = vmatprep.subr.mxu0 0.0
    %1427 = vmatpush2.msra.mxu0 %v1327
    %1428 = vmatprep.subr.mxu0 0.0
    %1429 = vmatpush2.msra.mxu0 %v1326
    %1430 = vmatprep.subr.mxu0 0.0
    %1431 = vmatpush2.msra.mxu0 %v1325
    %1432 = vmatprep.subr.mxu0 0.0
    %1433 = vmatpush2.msra.mxu0 %v1324
    %1434 = vmatprep.subr.mxu0 0.0
    %1435 = vmatpush2.msra.mxu0 %v1323
    %1436 = vmatprep.subr.mxu0 0.0
    %1437 = vmatpush2.msra.mxu0 %v1322
    %1438 = vmatprep.subr.mxu0 0.0
    %1439 = vmatpush2.msra.mxu0 %v1321
    %1440 = vmatprep.mubr.f32.mxu0 %v1302
    %1441 = vmatmul.mubr.f32.gmra.mxu0 %v1301
    %v1442 = vpop.f32.mrf.mxu0
    %v1443 = vadd.f32 %v1374, %v1442
    %v1444 = vpop.f32.mrf.mxu0
    %1445 = vdwg.mxu0
    %1446 = vmatprep.subr.mxu0 0.0
    %1447 = vmatpush1.msra.mxu0 %v1352
    %1448 = vmatprep.subr.mxu0 0.0
    %1449 = vmatpush1.msra.mxu0 %v1351
    %1450 = vmatprep.subr.mxu0 0.0
    %1451 = vmatpush1.msra.mxu0 %v1350
    %1452 = vmatprep.subr.mxu0 0.0
    %1453 = vmatpush1.msra.mxu0 %v1349
    %1454 = vmatprep.subr.mxu0 0.0
    %1455 = vmatpush1.msra.mxu0 %v1348
    %1456 = vmatprep.subr.mxu0 0.0
    %1457 = vmatpush1.msra.mxu0 %v1347
    %1458 = vmatprep.subr.mxu0 0.0
    %1459 = vmatpush1.msra.mxu0 %v1346
    %1460 = vmatprep.subr.mxu0 0.0
    %1461 = vmatpush1.msra.mxu0 %v1345
    %1462 = vmatprep.subr.mxu0 0.0
    %1463 = vmatpush1.msra.mxu0 %v1344
    %1464 = vmatprep.subr.mxu0 0.0
    %1465 = vmatpush1.msra.mxu0 %v1343
    %1466 = vmatprep.subr.mxu0 0.0
    %1467 = vmatpush1.msra.mxu0 %v1342
    %1468 = vmatprep.subr.mxu0 0.0
    %1469 = vmatpush1.msra.mxu0 %v1341
    %1470 = vmatprep.subr.mxu0 0.0
    %1471 = vmatpush1.msra.mxu0 %v1340
    %1472 = vmatprep.subr.mxu0 0.0
    %1473 = vmatpush1.msra.mxu0 %v1339
    %1474 = vmatprep.subr.mxu0 0.0
    %1475 = vmatpush1.msra.mxu0 %v1338
    %1476 = vmatprep.subr.mxu0 0.0
    %1477 = vmatpush1.msra.mxu0 %v1337
    %1478 = vmatprep.subr.mxu0 0.0
    %1479 = vmatpush2.msra.mxu0 %v1368
    %1480 = vmatprep.subr.mxu0 0.0
    %1481 = vmatpush2.msra.mxu0 %v1367
    %1482 = vmatprep.subr.mxu0 0.0
    %1483 = vmatpush2.msra.mxu0 %v1366
    %1484 = vmatprep.subr.mxu0 0.0
    %1485 = vmatpush2.msra.mxu0 %v1365
    %1486 = vmatprep.subr.mxu0 0.0
    %1487 = vmatpush2.msra.mxu0 %v1364
    %1488 = vmatprep.subr.mxu0 0.0
    %1489 = vmatpush2.msra.mxu0 %v1363
    %1490 = vmatprep.subr.mxu0 0.0
    %1491 = vmatpush2.msra.mxu0 %v1362
    %1492 = vmatprep.subr.mxu0 0.0
    %1493 = vmatpush2.msra.mxu0 %v1361
    %1494 = vmatprep.subr.mxu0 0.0
    %1495 = vmatpush2.msra.mxu0 %v1360
    %1496 = vmatprep.subr.mxu0 0.0
    %1497 = vmatpush2.msra.mxu0 %v1359
    %1498 = vmatprep.subr.mxu0 0.0
    %1499 = vmatpush2.msra.mxu0 %v1358
    %1500 = vmatprep.subr.mxu0 0.0
    %1501 = vmatpush2.msra.mxu0 %v1357
    %1502 = vmatprep.subr.mxu0 0.0
    %1503 = vmatpush2.msra.mxu0 %v1356
    %1504 = vmatprep.subr.mxu0 0.0
    %1505 = vmatpush2.msra.mxu0 %v1355
    %1506 = vmatprep.subr.mxu0 0.0
    %1507 = vmatpush2.msra.mxu0 %v1354
    %1508 = vmatprep.subr.mxu0 0.0
    %1509 = vmatpush2.msra.mxu0 %v1353
    %1510 = vmatprep.mubr.f32.mxu0 %v1304
    %1511 = vmatmul.mubr.f32.gmra.mxu0 %v1303
    %v1512 = vpop.f32.mrf.mxu0
    %v1513 = vadd.f32 %v1443, %v1512
    %v1514 = vpop.f32.mrf.mxu0
    %1515 = vdwg.mxu0
    %vm1516 = vcmask 41984
    %1517 = vst.msk [vmem:[#allocation2] sm:$0x3] %vm1516, %v1513
    // Predicated region
    $region42: #{dqn_forward.7} parent=1 // pred_check
      _
    $region43: #{dqn_forward.7} parent=1 // pred_check_branch
      %1519 = sbr.rel (0) target = $region45
    $region44: #{dqn_forward.7} parent=1 // pred_region
      %s1521 = ssub.s32 32, 32
      %1522 = vsyncadd [#allocation3], %s1521
      %s1524 = sshll.u32 [#allocation2], 4
      %s1525 = int_to_ptr.vmem [resolvable:$true] %s1524
      %1527 = dma.vmem_to_hbm [thread:$0]  %s1525, 32, %s10, [#allocation3]
    $region45: #{dqn_forward.7} parent=1 // pred_fallthru
      _
    // Predicated region
    $region46: #{dqn_forward.7} parent=1 // pred_check
      _
    $region47: #{dqn_forward.7} parent=1 // pred_check_branch
      %1529 = sbr.rel (0) target = $region49
    $region48: #{dqn_forward.7} parent=1 // pred_region
      %1530 = dma.done [#allocation3], 32
    $region49: #{dqn_forward.7} parent=1 // pred_fallthru
      _
    %1531 = vsyncpa [#allocation3], 1

</llo_original>
